<compile_context>
chip_gen: v7x
topology: tpu7x:2x2x1
jax: 0.10.0
libtpu: 0.0.40
codegen_flags: <defaults>
</compile_context>

<pallas_src>
import functools

import numpy as np

import jax
import jax.numpy as jnp
from jax.experimental import pallas as pl
from jax.experimental.pallas import tpu as pltpu


# ----------------------------------------------------------------------------
# Fused Pallas kernel: conv1 + ReLU + conv2 + ReLU + (flatten-free) Linear
# ----------------------------------------------------------------------------
def _fused_cnn_kernel(x_ref, wbd1_ref, b1_ref, wbd2_ref, b2_ref, wfc_ref, bfc_ref,
                      o_ref, h1pad_ref, *, n_batch, height):
    f32 = jnp.float32
    ksize = wbd1_ref.shape[0]
    hp = height + 2                        # one zero halo row above & below each image
    n_slab = n_batch * hp                  # rows covered by each tap matmul
    rows_total, c1_cols = h1pad_ref.shape  # c1_cols = W * C1
    c2_cols = b2_ref.shape[1]              # W * C2
    out_dim = bfc_ref.shape[1]

    # ---- conv1: ksize vertically-shifted, batch-fused, lane-aligned matmuls ----
    acc1 = jnp.broadcast_to(b1_ref[...], (n_slab, c1_cols))       # bias-initialized
    for i in range(ksize):
        acc1 = acc1 + jnp.dot(x_ref[i:i + n_slab, :],
                              wbd1_ref[i].astype(f32),
                              preferred_element_type=f32)
    h1 = jnp.maximum(acc1, 0.0)                                   # (n_slab, W*C1)

    # ---- re-pad conv1 output: zero only halo/tail rows, interiors overwritten ----
    h1pad_ref[0:1, :] = jnp.zeros((1, c1_cols), f32)
    for b in range(n_batch):
        lo = b * hp + height + 1                                  # bottom halo of image b
        hi = (b + 1) * hp + 1 if b + 1 < n_batch else rows_total  # ...+ next top halo / tail
        h1pad_ref[lo:hi, :] = jnp.zeros((hi - lo, c1_cols), f32)
        h1pad_ref[b * hp + 1: b * hp + 1 + height, :] = h1[b * hp: b * hp + height, :]

    # ---- conv2: same structure ----
    acc2 = jnp.broadcast_to(b2_ref[...], (n_slab, c2_cols))
    for i in range(ksize):
        acc2 = acc2 + jnp.dot(h1pad_ref[i:i + n_slab, :],
                              wbd2_ref[i].astype(f32),
                              preferred_element_type=f32)
    h2 = jnp.maximum(acc2, 0.0)                                   # (n_slab, W*C2)

    # ---- final Linear, folded into one small matmul per conv-output row --------
    # wfc_ref is (H, W*C2, out): the torch NCHW-flatten FC weight, re-grouped per
    # output row and permuted to our (w, c) column order at prep time.  Splitting K
    # by rows costs the same number of MXU passes as one (n, H*W*C2) matmul but
    # needs no flattened activation (no masked row stores, no scratch, no reshape).
    out = jnp.broadcast_to(bfc_ref[...], (n_batch, out_dim))
    for p in range(height):
        rows = jnp.concatenate(
            [h2[b * hp + p: b * hp + p + 1, :] for b in range(n_batch)], axis=0)
        out = out + jnp.dot(rows, wfc_ref[p].astype(f32), preferred_element_type=f32)
    o_ref[...] = out.astype(o_ref.dtype)


def _full_spec(shape):
    zeros = (0,) * len(shape)
    return pl.BlockSpec(shape, lambda i, _z=zeros: _z)


# ----------------------------------------------------------------------------
# One-time parameter preparation (host side, free per forward call)
# ----------------------------------------------------------------------------
def prepare_fused_params(params, height, width):
    """Fold horizontal conv taps into block-banded per-vertical-tap weights,
    width-tile the biases, and re-group/permute the FC weight from torch NCHW
    flatten order to per-row (h, (w, c)) order.  Weights are stored bf16."""
    (w1, b1, s1, p1), (w2, b2, s2, p2) = params["conv"]
    assert (s1, p1, s2, p2) == (1, 1, 1, 1), "fused kernel assumes stride=1, pad=1"
    ksize = w1.shape[0]
    assert w1.shape[:2] == (ksize, ksize) and w2.shape[:2] == (ksize, ksize)
    c1 = w1.shape[3]
    c2 = w2.shape[3]
    assert w2.shape[2] == c1

    def fold_horizontal(w):
        # (k, k, cin, cout) HWIO -> (k, W*cin, W*cout).  Kernel column j's
        # contribution to output pixel wo comes from input pixel wi = wo + j - 1;
        # out-of-range wi (the horizontal zero padding) contributes no weight, so
        # the activations need no horizontal pad columns at all.
        k, _, cin, cout = w.shape
        wn = np.asarray(w, np.float32)
        mats = np.zeros((k, width * cin, width * cout), np.float32)
        for i in range(k):
            for wo in range(width):
                for j in range(k):
                    wi = wo + j - 1
                    if 0 <= wi < width:
                        mats[i, wi * cin:(wi + 1) * cin,
                             wo * cout:(wo + 1) * cout] = wn[i, j]
        return jnp.asarray(mats, jnp.bfloat16)

    wbd1 = fold_horizontal(w1)                                   # (k, W*Cin, W*C1)
    wbd2 = fold_horizontal(w2)                                   # (k, W*C1,  W*C2)
    b1t = jnp.tile(jnp.asarray(b1, jnp.float32), width).reshape(1, width * c1)
    b2t = jnp.tile(jnp.asarray(b2, jnp.float32), width).reshape(1, width * c2)

    w_fc, b_fc = params["fc"]
    wfc_np = np.asarray(w_fc, np.float32).reshape(c2, height, width, -1)  # NCHW flatten
    wfc_r = wfc_np.transpose(1, 2, 0, 3).reshape(height, width * c2, -1)  # (h, (w,c), out)
    wfc_r = jnp.asarray(wfc_r, jnp.bfloat16)
    bfc = jnp.asarray(b_fc, jnp.float32).reshape(1, -1)
    return wbd1, b1t, wbd2, b2t, wfc_r, bfc


def round_weights_to_bf16(params):
    """Model weights live in bf16 (HBM) and are upcast to f32 in VMEM; use the same
    bf16-rounded values in the pure-JAX reference so the comparison stays exact."""
    conv = [(w.astype(jnp.bfloat16).astype(jnp.float32), b, s, p)
            for (w, b, s, p) in params["conv"]]
    w_fc, b_fc = params["fc"]
    return {"conv": conv,
            "fc": (w_fc.astype(jnp.bfloat16).astype(jnp.float32), b_fc)}


# ----------------------------------------------------------------------------
# CNNModule forward (functional, single Pallas launch)
# ----------------------------------------------------------------------------
@jax.jit
def cnn_module_forward(x_nchw, wbd1, b1t, wbd2, b2t, wfc_r, bfc):
    x = x_nchw
    if x.ndim == 3:                        # unsqueeze(0) as in the torch module
        x = x[None]
    assert x.ndim == 4
    # spec.input_space is an akro.Box (not akro.Image) -> no divide-by-255 branch.
    # TODO(synk): akro.Image /255 and NHWC permute branches not exercised in this
    # synthetic NCHW/Box config.

    n, c_in, height, width = x.shape
    ksize = wbd1.shape[0]
    hp = height + 2                                   # stride=1, pad=1 per layer
    n_slab = n * hp
    rows_total = -(-(n_slab + ksize - 1) // 8) * 8    # shifted taps read ksize-1 extra rows
    c1 = b1t.shape[1] // width
    out_dim = bfc.shape[1]

    # Layout plumbing on the ~1.5 KiB input (wrapper/XLA side): rows = (batch,
    # padded height), cols = width*channels (channel fastest), halo rows pre-zeroed.
    x_rows = jnp.transpose(x, (0, 2, 3, 1)).reshape(n, height, width * c_in)
    x_slab = jnp.pad(x_rows.astype(jnp.float32), ((0, 0), (1, 1), (0, 0)))
    x_slab = x_slab.reshape(n_slab, width * c_in)
    x_slab = jnp.pad(x_slab, ((0, rows_total - n_slab), (0, 0)))

    kernel = functools.partial(_fused_cnn_kernel, n_batch=n, height=height)

    return pl.pallas_call(
        kernel,
        out_shape=jax.ShapeDtypeStruct((n, out_dim), jnp.float32),
        grid=(1,),
        in_specs=[_full_spec(a.shape)
                  for a in (x_slab, wbd1, b1t, wbd2, b2t, wfc_r, bfc)],
        out_specs=_full_spec((n, out_dim)),
        scratch_shapes=[
            pltpu.VMEM((rows_total, width * c1), jnp.float32),   # padded conv1 output
        ],
        compiler_params=pltpu.CompilerParams(
            dimension_semantics=("arbitrary",)),
    )(x_slab, wbd1, b1t, wbd2, b2t, wfc_r, bfc)


# ----------------------------------------------------------------------------
# Pure-JAX reference (for correctness check), uses the original layer parameters
# ----------------------------------------------------------------------------
def cnn_module_reference(x_nchw, params):
    x = x_nchw
    if x.ndim == 3:
        x = x[None]
    for (w, b, stride, pad) in params["conv"]:
        y = jax.lax.conv_general_dilated(
            x, w, (stride, stride), [(pad, pad), (pad, pad)],
            dimension_numbers=("NCHW", "HWIO", "NCHW"))
        y = y + b.reshape(1, -1, 1, 1)
        x = jnp.maximum(y, 0.0)
    flat = x.reshape(x.shape[0], -1)
    w_fc, b_fc = params["fc"]
    return flat @ w_fc + b_fc


# ----------------------------------------------------------------------------
# Deterministic parameter construction (xavier-uniform weights, zero conv biases)
# ----------------------------------------------------------------------------
def build_params(key, in_channels, hidden_channels, kernel_sizes, strides,
                 paddings, height, width, out_dim):
    params = {"conv": []}
    cin = in_channels
    for cout, k, s, p in zip(hidden_channels, kernel_sizes, strides, paddings):
        key, wk = jax.random.split(key)
        fan_in, fan_out = cin * k * k, cout * k * k
        bound = (6.0 / (fan_in + fan_out)) ** 0.5
        w = jax.random.uniform(wk, (k, k, cin, cout), jnp.float32, -bound, bound)
        b = jnp.zeros((cout,), jnp.float32)
        params["conv"].append((w, b, s, p))
        height = (height + 2 * p - k) // s + 1
        width = (width + 2 * p - k) // s + 1
        cin = cout
    flat_dim = cin * height * width
    key, wk, bk = jax.random.split(key, 3)
    bound = (6.0 / (flat_dim + out_dim)) ** 0.5
    w_fc = jax.random.uniform(wk, (flat_dim, out_dim), jnp.float32, -bound, bound)
    b_fc = jax.random.uniform(bk, (out_dim,), jnp.float32, -0.01, 0.01)
    params["fc"] = (w_fc, b_fc)
    return params


if __name__ == "__main__":
    key = jax.random.PRNGKey(0)
    k_x, k_p = jax.random.split(key)

    # spec.input_space = (3, 16, 16) in NCHW; batch = 2.
    batch, in_c, height, width = 2, 3, 16, 16
    hidden_channels = (4, 8)
    kernel_sizes = (3, 3)
    strides = (1, 1)
    paddings = (1, 1)
    out_dim = 10

    x = jax.random.normal(k_x, (batch, in_c, height, width), jnp.float32)
    params = build_params(k_p, in_c, hidden_channels, kernel_sizes, strides,
                          paddings, height, width, out_dim)
    params = round_weights_to_bf16(params)      # weights stored bf16, math stays f32
    fused = prepare_fused_params(params, height, width)

    out = cnn_module_forward(x, *fused)
    out = jax.block_until_ready(out)

    ref = cnn_module_reference(x, params)
    assert out.shape == (batch, out_dim), out.shape
    assert jnp.allclose(out, ref, atol=1e-4, rtol=1e-4), \
        float(jnp.max(jnp.abs(out - ref)))

    print("KERNEL_OK")
</pallas_src>

<mosaic_0001>
module attributes {stable_mosaic.version = 11 : i64} {
  func.func @_fused_cnn_kernel(%arg0: i32, %arg1: memref<40x48xf32, #tpu.memory_space<vmem>>, %arg2: memref<3x48x64xbf16, #tpu.memory_space<vmem>>, %arg3: memref<1x64xf32, #tpu.memory_space<vmem>>, %arg4: memref<3x64x128xbf16, #tpu.memory_space<vmem>>, %arg5: memref<1x128xf32, #tpu.memory_space<vmem>>, %arg6: memref<16x128x10xbf16, #tpu.memory_space<vmem>>, %arg7: memref<1x10xf32, #tpu.memory_space<vmem>>, %arg8: memref<2x10xf32, #tpu.memory_space<vmem>>, %arg9: memref<40x64xf32, #tpu.memory_space<vmem>>) attributes {dimension_semantics = [#tpu.dimension_semantics<arbitrary>], iteration_bounds = array<i64: 1>, scalar_prefetch = 0 : i64, scratch_operands = 1 : i64, tpu.core_type = #tpu.core_type<tc>, window_params = [{pipeline_mode = #tpu.pipeline_mode<synchronous>, transform_indices = @transform_0, window_bounds = array<i64: 40, 48>}, {pipeline_mode = #tpu.pipeline_mode<synchronous>, transform_indices = @transform_1, window_bounds = array<i64: 3, 48, 64>}, {pipeline_mode = #tpu.pipeline_mode<synchronous>, transform_indices = @transform_2, window_bounds = array<i64: 1, 64>}, {pipeline_mode = #tpu.pipeline_mode<synchronous>, transform_indices = @transform_3, window_bounds = array<i64: 3, 64, 128>}, {pipeline_mode = #tpu.pipeline_mode<synchronous>, transform_indices = @transform_4, window_bounds = array<i64: 1, 128>}, {pipeline_mode = #tpu.pipeline_mode<synchronous>, transform_indices = @transform_5, window_bounds = array<i64: 16, 128, 10>}, {pipeline_mode = #tpu.pipeline_mode<synchronous>, transform_indices = @transform_6, window_bounds = array<i64: 1, 10>}, {pipeline_mode = #tpu.pipeline_mode<synchronous>, transform_indices = @transform_7, window_bounds = array<i64: 2, 10>}]} {
    %c0 = arith.constant 0 : index
    %c0_0 = arith.constant 0 : index
    %0 = vector.load %arg3[%c0, %c0_0] : memref<1x64xf32, #tpu.memory_space<vmem>>, vector<1x64xf32>
    %1 = vector.shape_cast %0 : vector<1x64xf32> to vector<1x64xf32>
    %2 = vector.broadcast %1 : vector<1x64xf32> to vector<36x64xf32>
    %c0_1 = arith.constant 0 : index
    %c0_2 = arith.constant 0 : index
    %3 = vector.load %arg1[%c0_1, %c0_2] : memref<40x48xf32, #tpu.memory_space<vmem>>, vector<36x48xf32>
    %c0_3 = arith.constant 0 : index
    %c0_4 = arith.constant 0 : index
    %c0_5 = arith.constant 0 : index
    %4 = vector.load %arg2[%c0_3, %c0_4, %c0_5] : memref<3x48x64xbf16, #tpu.memory_space<vmem>>, vector<1x48x64xbf16>
    %5 = vector.shape_cast %4 : vector<1x48x64xbf16> to vector<48x64xbf16>
    %6 = arith.extf %5 : vector<48x64xbf16> to vector<48x64xf32>
    %cst = arith.constant dense<0.000000e+00> : vector<36x64xf32>
    %7 = tpu.matmul %3, %6, %cst {dimension_numbers = #tpu.dot_dimension_numbers<[1], [0], [0], [1], [0, 0, 1, 1], [], []>} : vector<36x48xf32>, vector<48x64xf32>, vector<36x64xf32> -> vector<36x64xf32>
    %8 = arith.addf %2, %7 : vector<36x64xf32>
    %c1 = arith.constant 1 : index
    %c0_6 = arith.constant 0 : index
    %9 = vector.load %arg1[%c1, %c0_6] : memref<40x48xf32, #tpu.memory_space<vmem>>, vector<36x48xf32>
    %c1_7 = arith.constant 1 : index
    %c0_8 = arith.constant 0 : index
    %c0_9 = arith.constant 0 : index
    %10 = vector.load %arg2[%c1_7, %c0_8, %c0_9] : memref<3x48x64xbf16, #tpu.memory_space<vmem>>, vector<1x48x64xbf16>
    %11 = vector.shape_cast %10 : vector<1x48x64xbf16> to vector<48x64xbf16>
    %12 = arith.extf %11 : vector<48x64xbf16> to vector<48x64xf32>
    %cst_10 = arith.constant dense<0.000000e+00> : vector<36x64xf32>
    %13 = tpu.matmul %9, %12, %cst_10 {dimension_numbers = #tpu.dot_dimension_numbers<[1], [0], [0], [1], [0, 0, 1, 1], [], []>} : vector<36x48xf32>, vector<48x64xf32>, vector<36x64xf32> -> vector<36x64xf32>
    %14 = arith.addf %8, %13 : vector<36x64xf32>
    %c2 = arith.constant 2 : index
    %c0_11 = arith.constant 0 : index
    %15 = vector.load %arg1[%c2, %c0_11] : memref<40x48xf32, #tpu.memory_space<vmem>>, vector<36x48xf32>
    %c2_12 = arith.constant 2 : index
    %c0_13 = arith.constant 0 : index
    %c0_14 = arith.constant 0 : index
    %16 = vector.load %arg2[%c2_12, %c0_13, %c0_14] : memref<3x48x64xbf16, #tpu.memory_space<vmem>>, vector<1x48x64xbf16>
    %17 = vector.shape_cast %16 : vector<1x48x64xbf16> to vector<48x64xbf16>
    %18 = arith.extf %17 : vector<48x64xbf16> to vector<48x64xf32>
    %cst_15 = arith.constant dense<0.000000e+00> : vector<36x64xf32>
    %19 = tpu.matmul %15, %18, %cst_15 {dimension_numbers = #tpu.dot_dimension_numbers<[1], [0], [0], [1], [0, 0, 1, 1], [], []>} : vector<36x48xf32>, vector<48x64xf32>, vector<36x64xf32> -> vector<36x64xf32>
    %20 = arith.addf %14, %19 : vector<36x64xf32>
    %cst_16 = arith.constant 0.000000e+00 : f32
    %21 = vector.broadcast %cst_16 : f32 to vector<36x64xf32>
    %22 = arith.maximumf %20, %21 : vector<36x64xf32>
    %cst_17 = arith.constant 0.000000e+00 : f32
    %23 = vector.broadcast %cst_17 : f32 to vector<1x64xf32>
    %c0_18 = arith.constant 0 : index
    %c0_19 = arith.constant 0 : index
    %24 = vector.load %arg9[%c0_18, %c0_19] : memref<40x64xf32, #tpu.memory_space<vmem>>, vector<1x64xf32>
    tpu.vector_store %arg9[%c0_18, %c0_19], %23 {strides = array<i32>} : memref<40x64xf32, #tpu.memory_space<vmem>>, vector<1x64xf32>,
    %cst_20 = arith.constant 0.000000e+00 : f32
    %25 = vector.broadcast %cst_20 : f32 to vector<2x64xf32>
    %c17 = arith.constant 17 : index
    %c0_21 = arith.constant 0 : index
    %26 = vector.load %arg9[%c17, %c0_21] : memref<40x64xf32, #tpu.memory_space<vmem>>, vector<2x64xf32>
    tpu.vector_store %arg9[%c17, %c0_21], %25 {strides = array<i32>} : memref<40x64xf32, #tpu.memory_space<vmem>>, vector<2x64xf32>,
    %27 = vector.extract_strided_slice %22 {offsets = [0, 0], sizes = [16, 64], strides = [1, 1]} : vector<36x64xf32> to vector<16x64xf32>
    %c1_22 = arith.constant 1 : index
    %c0_23 = arith.constant 0 : index
    %28 = vector.load %arg9[%c1_22, %c0_23] : memref<40x64xf32, #tpu.memory_space<vmem>>, vector<16x64xf32>
    tpu.vector_store %arg9[%c1_22, %c0_23], %27 {strides = array<i32>} : memref<40x64xf32, #tpu.memory_space<vmem>>, vector<16x64xf32>,
    %cst_24 = arith.constant 0.000000e+00 : f32
    %29 = vector.broadcast %cst_24 : f32 to vector<5x64xf32>
    %c35 = arith.constant 35 : index
    %c0_25 = arith.constant 0 : index
    %30 = vector.load %arg9[%c35, %c0_25] : memref<40x64xf32, #tpu.memory_space<vmem>>, vector<5x64xf32>
    tpu.vector_store %arg9[%c35, %c0_25], %29 {strides = array<i32>} : memref<40x64xf32, #tpu.memory_space<vmem>>, vector<5x64xf32>,
    %31 = vector.extract_strided_slice %22 {offsets = [18, 0], sizes = [16, 64], strides = [1, 1]} : vector<36x64xf32> to vector<16x64xf32>
    %c19 = arith.constant 19 : index
    %c0_26 = arith.constant 0 : index
    %32 = vector.load %arg9[%c19, %c0_26] : memref<40x64xf32, #tpu.memory_space<vmem>>, vector<16x64xf32>
    tpu.vector_store %arg9[%c19, %c0_26], %31 {strides = array<i32>} : memref<40x64xf32, #tpu.memory_space<vmem>>, vector<16x64xf32>,
    %c0_27 = arith.constant 0 : index
    %c0_28 = arith.constant 0 : index
    %33 = vector.load %arg5[%c0_27, %c0_28] : memref<1x128xf32, #tpu.memory_space<vmem>>, vector<1x128xf32>
    %34 = vector.shape_cast %33 : vector<1x128xf32> to vector<1x128xf32>
    %35 = vector.broadcast %34 : vector<1x128xf32> to vector<36x128xf32>
    %c0_29 = arith.constant 0 : index
    %c0_30 = arith.constant 0 : index
    %36 = vector.load %arg9[%c0_29, %c0_30] : memref<40x64xf32, #tpu.memory_space<vmem>>, vector<36x64xf32>
    %c0_31 = arith.constant 0 : index
    %c0_32 = arith.constant 0 : index
    %c0_33 = arith.constant 0 : index
    %37 = vector.load %arg4[%c0_31, %c0_32, %c0_33] : memref<3x64x128xbf16, #tpu.memory_space<vmem>>, vector<1x64x128xbf16>
    %38 = vector.shape_cast %37 : vector<1x64x128xbf16> to vector<64x128xbf16>
    %39 = arith.extf %38 : vector<64x128xbf16> to vector<64x128xf32>
    %cst_34 = arith.constant dense<0.000000e+00> : vector<36x128xf32>
    %40 = tpu.matmul %36, %39, %cst_34 {dimension_numbers = #tpu.dot_dimension_numbers<[1], [0], [0], [1], [0, 0, 1, 1], [], []>} : vector<36x64xf32>, vector<64x128xf32>, vector<36x128xf32> -> vector<36x128xf32>
    %41 = arith.addf %35, %40 : vector<36x128xf32>
    %c1_35 = arith.constant 1 : index
    %c0_36 = arith.constant 0 : index
    %42 = vector.load %arg9[%c1_35, %c0_36] : memref<40x64xf32, #tpu.memory_space<vmem>>, vector<36x64xf32>
    %c1_37 = arith.constant 1 : index
    %c0_38 = arith.constant 0 : index
    %c0_39 = arith.constant 0 : index
    %43 = vector.load %arg4[%c1_37, %c0_38, %c0_39] : memref<3x64x128xbf16, #tpu.memory_space<vmem>>, vector<1x64x128xbf16>
    %44 = vector.shape_cast %43 : vector<1x64x128xbf16> to vector<64x128xbf16>
    %45 = arith.extf %44 : vector<64x128xbf16> to vector<64x128xf32>
    %cst_40 = arith.constant dense<0.000000e+00> : vector<36x128xf32>
    %46 = tpu.matmul %42, %45, %cst_40 {dimension_numbers = #tpu.dot_dimension_numbers<[1], [0], [0], [1], [0, 0, 1, 1], [], []>} : vector<36x64xf32>, vector<64x128xf32>, vector<36x128xf32> -> vector<36x128xf32>
    %47 = arith.addf %41, %46 : vector<36x128xf32>
    %c2_41 = arith.constant 2 : index
    %c0_42 = arith.constant 0 : index
    %48 = vector.load %arg9[%c2_41, %c0_42] : memref<40x64xf32, #tpu.memory_space<vmem>>, vector<36x64xf32>
    %c2_43 = arith.constant 2 : index
    %c0_44 = arith.constant 0 : index
    %c0_45 = arith.constant 0 : index
    %49 = vector.load %arg4[%c2_43, %c0_44, %c0_45] : memref<3x64x128xbf16, #tpu.memory_space<vmem>>, vector<1x64x128xbf16>
    %50 = vector.shape_cast %49 : vector<1x64x128xbf16> to vector<64x128xbf16>
    %51 = arith.extf %50 : vector<64x128xbf16> to vector<64x128xf32>
    %cst_46 = arith.constant dense<0.000000e+00> : vector<36x128xf32>
    %52 = tpu.matmul %48, %51, %cst_46 {dimension_numbers = #tpu.dot_dimension_numbers<[1], [0], [0], [1], [0, 0, 1, 1], [], []>} : vector<36x64xf32>, vector<64x128xf32>, vector<36x128xf32> -> vector<36x128xf32>
    %53 = arith.addf %47, %52 : vector<36x128xf32>
    %cst_47 = arith.constant 0.000000e+00 : f32
    %54 = vector.broadcast %cst_47 : f32 to vector<36x128xf32>
    %55 = arith.maximumf %53, %54 : vector<36x128xf32>
    %c0_48 = arith.constant 0 : index
    %c0_49 = arith.constant 0 : index
    %56 = vector.load %arg7[%c0_48, %c0_49] : memref<1x10xf32, #tpu.memory_space<vmem>>, vector<1x10xf32>
    %57 = vector.shape_cast %56 : vector<1x10xf32> to vector<1x10xf32>
    %58 = vector.broadcast %57 : vector<1x10xf32> to vector<2x10xf32>
    %59 = vector.extract_strided_slice %55 {offsets = [0, 0], sizes = [1, 128], strides = [1, 1]} : vector<36x128xf32> to vector<1x128xf32>
    %60 = vector.extract_strided_slice %55 {offsets = [18, 0], sizes = [1, 128], strides = [1, 1]} : vector<36x128xf32> to vector<1x128xf32>
    %61 = tpu.concatenate %59, %60 in 0 : vector<1x128xf32>, vector<1x128xf32> -> vector<2x128xf32>
    %c0_50 = arith.constant 0 : index
    %c0_51 = arith.constant 0 : index
    %c0_52 = arith.constant 0 : index
    %62 = vector.load %arg6[%c0_50, %c0_51, %c0_52] : memref<16x128x10xbf16, #tpu.memory_space<vmem>>, vector<1x128x10xbf16>
    %63 = vector.shape_cast %62 : vector<1x128x10xbf16> to vector<128x10xbf16>
    %64 = arith.extf %63 : vector<128x10xbf16> to vector<128x10xf32>
    %cst_53 = arith.constant dense<0.000000e+00> : vector<2x10xf32>
    %65 = tpu.matmul %61, %64, %cst_53 {dimension_numbers = #tpu.dot_dimension_numbers<[1], [0], [0], [1], [0, 0, 1, 1], [], []>} : vector<2x128xf32>, vector<128x10xf32>, vector<2x10xf32> -> vector<2x10xf32>
    %66 = arith.addf %58, %65 : vector<2x10xf32>
    %67 = vector.extract_strided_slice %55 {offsets = [1, 0], sizes = [1, 128], strides = [1, 1]} : vector<36x128xf32> to vector<1x128xf32>
    %68 = vector.extract_strided_slice %55 {offsets = [19, 0], sizes = [1, 128], strides = [1, 1]} : vector<36x128xf32> to vector<1x128xf32>
    %69 = tpu.concatenate %67, %68 in 0 : vector<1x128xf32>, vector<1x128xf32> -> vector<2x128xf32>
    %c1_54 = arith.constant 1 : index
    %c0_55 = arith.constant 0 : index
    %c0_56 = arith.constant 0 : index
    %70 = vector.load %arg6[%c1_54, %c0_55, %c0_56] : memref<16x128x10xbf16, #tpu.memory_space<vmem>>, vector<1x128x10xbf16>
    %71 = vector.shape_cast %70 : vector<1x128x10xbf16> to vector<128x10xbf16>
    %72 = arith.extf %71 : vector<128x10xbf16> to vector<128x10xf32>
    %cst_57 = arith.constant dense<0.000000e+00> : vector<2x10xf32>
    %73 = tpu.matmul %69, %72, %cst_57 {dimension_numbers = #tpu.dot_dimension_numbers<[1], [0], [0], [1], [0, 0, 1, 1], [], []>} : vector<2x128xf32>, vector<128x10xf32>, vector<2x10xf32> -> vector<2x10xf32>
    %74 = arith.addf %66, %73 : vector<2x10xf32>
    %75 = vector.extract_strided_slice %55 {offsets = [2, 0], sizes = [1, 128], strides = [1, 1]} : vector<36x128xf32> to vector<1x128xf32>
    %76 = vector.extract_strided_slice %55 {offsets = [20, 0], sizes = [1, 128], strides = [1, 1]} : vector<36x128xf32> to vector<1x128xf32>
    %77 = tpu.concatenate %75, %76 in 0 : vector<1x128xf32>, vector<1x128xf32> -> vector<2x128xf32>
    %c2_58 = arith.constant 2 : index
    %c0_59 = arith.constant 0 : index
    %c0_60 = arith.constant 0 : index
    %78 = vector.load %arg6[%c2_58, %c0_59, %c0_60] : memref<16x128x10xbf16, #tpu.memory_space<vmem>>, vector<1x128x10xbf16>
    %79 = vector.shape_cast %78 : vector<1x128x10xbf16> to vector<128x10xbf16>
    %80 = arith.extf %79 : vector<128x10xbf16> to vector<128x10xf32>
    %cst_61 = arith.constant dense<0.000000e+00> : vector<2x10xf32>
    %81 = tpu.matmul %77, %80, %cst_61 {dimension_numbers = #tpu.dot_dimension_numbers<[1], [0], [0], [1], [0, 0, 1, 1], [], []>} : vector<2x128xf32>, vector<128x10xf32>, vector<2x10xf32> -> vector<2x10xf32>
    %82 = arith.addf %74, %81 : vector<2x10xf32>
    %83 = vector.extract_strided_slice %55 {offsets = [3, 0], sizes = [1, 128], strides = [1, 1]} : vector<36x128xf32> to vector<1x128xf32>
    %84 = vector.extract_strided_slice %55 {offsets = [21, 0], sizes = [1, 128], strides = [1, 1]} : vector<36x128xf32> to vector<1x128xf32>
    %85 = tpu.concatenate %83, %84 in 0 : vector<1x128xf32>, vector<1x128xf32> -> vector<2x128xf32>
    %c3 = arith.constant 3 : index
    %c0_62 = arith.constant 0 : index
    %c0_63 = arith.constant 0 : index
    %86 = vector.load %arg6[%c3, %c0_62, %c0_63] : memref<16x128x10xbf16, #tpu.memory_space<vmem>>, vector<1x128x10xbf16>
    %87 = vector.shape_cast %86 : vector<1x128x10xbf16> to vector<128x10xbf16>
    %88 = arith.extf %87 : vector<128x10xbf16> to vector<128x10xf32>
    %cst_64 = arith.constant dense<0.000000e+00> : vector<2x10xf32>
    %89 = tpu.matmul %85, %88, %cst_64 {dimension_numbers = #tpu.dot_dimension_numbers<[1], [0], [0], [1], [0, 0, 1, 1], [], []>} : vector<2x128xf32>, vector<128x10xf32>, vector<2x10xf32> -> vector<2x10xf32>
    %90 = arith.addf %82, %89 : vector<2x10xf32>
    %91 = vector.extract_strided_slice %55 {offsets = [4, 0], sizes = [1, 128], strides = [1, 1]} : vector<36x128xf32> to vector<1x128xf32>
    %92 = vector.extract_strided_slice %55 {offsets = [22, 0], sizes = [1, 128], strides = [1, 1]} : vector<36x128xf32> to vector<1x128xf32>
    %93 = tpu.concatenate %91, %92 in 0 : vector<1x128xf32>, vector<1x128xf32> -> vector<2x128xf32>
    %c4 = arith.constant 4 : index
    %c0_65 = arith.constant 0 : index
    %c0_66 = arith.constant 0 : index
    %94 = vector.load %arg6[%c4, %c0_65, %c0_66] : memref<16x128x10xbf16, #tpu.memory_space<vmem>>, vector<1x128x10xbf16>
    %95 = vector.shape_cast %94 : vector<1x128x10xbf16> to vector<128x10xbf16>
    %96 = arith.extf %95 : vector<128x10xbf16> to vector<128x10xf32>
    %cst_67 = arith.constant dense<0.000000e+00> : vector<2x10xf32>
    %97 = tpu.matmul %93, %96, %cst_67 {dimension_numbers = #tpu.dot_dimension_numbers<[1], [0], [0], [1], [0, 0, 1, 1], [], []>} : vector<2x128xf32>, vector<128x10xf32>, vector<2x10xf32> -> vector<2x10xf32>
    %98 = arith.addf %90, %97 : vector<2x10xf32>
    %99 = vector.extract_strided_slice %55 {offsets = [5, 0], sizes = [1, 128], strides = [1, 1]} : vector<36x128xf32> to vector<1x128xf32>
    %100 = vector.extract_strided_slice %55 {offsets = [23, 0], sizes = [1, 128], strides = [1, 1]} : vector<36x128xf32> to vector<1x128xf32>
    %101 = tpu.concatenate %99, %100 in 0 : vector<1x128xf32>, vector<1x128xf32> -> vector<2x128xf32>
    %c5 = arith.constant 5 : index
    %c0_68 = arith.constant 0 : index
    %c0_69 = arith.constant 0 : index
    %102 = vector.load %arg6[%c5, %c0_68, %c0_69] : memref<16x128x10xbf16, #tpu.memory_space<vmem>>, vector<1x128x10xbf16>
    %103 = vector.shape_cast %102 : vector<1x128x10xbf16> to vector<128x10xbf16>
    %104 = arith.extf %103 : vector<128x10xbf16> to vector<128x10xf32>
    %cst_70 = arith.constant dense<0.000000e+00> : vector<2x10xf32>
    %105 = tpu.matmul %101, %104, %cst_70 {dimension_numbers = #tpu.dot_dimension_numbers<[1], [0], [0], [1], [0, 0, 1, 1], [], []>} : vector<2x128xf32>, vector<128x10xf32>, vector<2x10xf32> -> vector<2x10xf32>
    %106 = arith.addf %98, %105 : vector<2x10xf32>
    %107 = vector.extract_strided_slice %55 {offsets = [6, 0], sizes = [1, 128], strides = [1, 1]} : vector<36x128xf32> to vector<1x128xf32>
    %108 = vector.extract_strided_slice %55 {offsets = [24, 0], sizes = [1, 128], strides = [1, 1]} : vector<36x128xf32> to vector<1x128xf32>
    %109 = tpu.concatenate %107, %108 in 0 : vector<1x128xf32>, vector<1x128xf32> -> vector<2x128xf32>
    %c6 = arith.constant 6 : index
    %c0_71 = arith.constant 0 : index
    %c0_72 = arith.constant 0 : index
    %110 = vector.load %arg6[%c6, %c0_71, %c0_72] : memref<16x128x10xbf16, #tpu.memory_space<vmem>>, vector<1x128x10xbf16>
    %111 = vector.shape_cast %110 : vector<1x128x10xbf16> to vector<128x10xbf16>
    %112 = arith.extf %111 : vector<128x10xbf16> to vector<128x10xf32>
    %cst_73 = arith.constant dense<0.000000e+00> : vector<2x10xf32>
    %113 = tpu.matmul %109, %112, %cst_73 {dimension_numbers = #tpu.dot_dimension_numbers<[1], [0], [0], [1], [0, 0, 1, 1], [], []>} : vector<2x128xf32>, vector<128x10xf32>, vector<2x10xf32> -> vector<2x10xf32>
    %114 = arith.addf %106, %113 : vector<2x10xf32>
    %115 = vector.extract_strided_slice %55 {offsets = [7, 0], sizes = [1, 128], strides = [1, 1]} : vector<36x128xf32> to vector<1x128xf32>
    %116 = vector.extract_strided_slice %55 {offsets = [25, 0], sizes = [1, 128], strides = [1, 1]} : vector<36x128xf32> to vector<1x128xf32>
    %117 = tpu.concatenate %115, %116 in 0 : vector<1x128xf32>, vector<1x128xf32> -> vector<2x128xf32>
    %c7 = arith.constant 7 : index
    %c0_74 = arith.constant 0 : index
    %c0_75 = arith.constant 0 : index
    %118 = vector.load %arg6[%c7, %c0_74, %c0_75] : memref<16x128x10xbf16, #tpu.memory_space<vmem>>, vector<1x128x10xbf16>
    %119 = vector.shape_cast %118 : vector<1x128x10xbf16> to vector<128x10xbf16>
    %120 = arith.extf %119 : vector<128x10xbf16> to vector<128x10xf32>
    %cst_76 = arith.constant dense<0.000000e+00> : vector<2x10xf32>
    %121 = tpu.matmul %117, %120, %cst_76 {dimension_numbers = #tpu.dot_dimension_numbers<[1], [0], [0], [1], [0, 0, 1, 1], [], []>} : vector<2x128xf32>, vector<128x10xf32>, vector<2x10xf32> -> vector<2x10xf32>
    %122 = arith.addf %114, %121 : vector<2x10xf32>
    %123 = vector.extract_strided_slice %55 {offsets = [8, 0], sizes = [1, 128], strides = [1, 1]} : vector<36x128xf32> to vector<1x128xf32>
    %124 = vector.extract_strided_slice %55 {offsets = [26, 0], sizes = [1, 128], strides = [1, 1]} : vector<36x128xf32> to vector<1x128xf32>
    %125 = tpu.concatenate %123, %124 in 0 : vector<1x128xf32>, vector<1x128xf32> -> vector<2x128xf32>
    %c8 = arith.constant 8 : index
    %c0_77 = arith.constant 0 : index
    %c0_78 = arith.constant 0 : index
    %126 = vector.load %arg6[%c8, %c0_77, %c0_78] : memref<16x128x10xbf16, #tpu.memory_space<vmem>>, vector<1x128x10xbf16>
    %127 = vector.shape_cast %126 : vector<1x128x10xbf16> to vector<128x10xbf16>
    %128 = arith.extf %127 : vector<128x10xbf16> to vector<128x10xf32>
    %cst_79 = arith.constant dense<0.000000e+00> : vector<2x10xf32>
    %129 = tpu.matmul %125, %128, %cst_79 {dimension_numbers = #tpu.dot_dimension_numbers<[1], [0], [0], [1], [0, 0, 1, 1], [], []>} : vector<2x128xf32>, vector<128x10xf32>, vector<2x10xf32> -> vector<2x10xf32>
    %130 = arith.addf %122, %129 : vector<2x10xf32>
    %131 = vector.extract_strided_slice %55 {offsets = [9, 0], sizes = [1, 128], strides = [1, 1]} : vector<36x128xf32> to vector<1x128xf32>
    %132 = vector.extract_strided_slice %55 {offsets = [27, 0], sizes = [1, 128], strides = [1, 1]} : vector<36x128xf32> to vector<1x128xf32>
    %133 = tpu.concatenate %131, %132 in 0 : vector<1x128xf32>, vector<1x128xf32> -> vector<2x128xf32>
    %c9 = arith.constant 9 : index
    %c0_80 = arith.constant 0 : index
    %c0_81 = arith.constant 0 : index
    %134 = vector.load %arg6[%c9, %c0_80, %c0_81] : memref<16x128x10xbf16, #tpu.memory_space<vmem>>, vector<1x128x10xbf16>
    %135 = vector.shape_cast %134 : vector<1x128x10xbf16> to vector<128x10xbf16>
    %136 = arith.extf %135 : vector<128x10xbf16> to vector<128x10xf32>
    %cst_82 = arith.constant dense<0.000000e+00> : vector<2x10xf32>
    %137 = tpu.matmul %133, %136, %cst_82 {dimension_numbers = #tpu.dot_dimension_numbers<[1], [0], [0], [1], [0, 0, 1, 1], [], []>} : vector<2x128xf32>, vector<128x10xf32>, vector<2x10xf32> -> vector<2x10xf32>
    %138 = arith.addf %130, %137 : vector<2x10xf32>
    %139 = vector.extract_strided_slice %55 {offsets = [10, 0], sizes = [1, 128], strides = [1, 1]} : vector<36x128xf32> to vector<1x128xf32>
    %140 = vector.extract_strided_slice %55 {offsets = [28, 0], sizes = [1, 128], strides = [1, 1]} : vector<36x128xf32> to vector<1x128xf32>
    %141 = tpu.concatenate %139, %140 in 0 : vector<1x128xf32>, vector<1x128xf32> -> vector<2x128xf32>
    %c10 = arith.constant 10 : index
    %c0_83 = arith.constant 0 : index
    %c0_84 = arith.constant 0 : index
    %142 = vector.load %arg6[%c10, %c0_83, %c0_84] : memref<16x128x10xbf16, #tpu.memory_space<vmem>>, vector<1x128x10xbf16>
    %143 = vector.shape_cast %142 : vector<1x128x10xbf16> to vector<128x10xbf16>
    %144 = arith.extf %143 : vector<128x10xbf16> to vector<128x10xf32>
    %cst_85 = arith.constant dense<0.000000e+00> : vector<2x10xf32>
    %145 = tpu.matmul %141, %144, %cst_85 {dimension_numbers = #tpu.dot_dimension_numbers<[1], [0], [0], [1], [0, 0, 1, 1], [], []>} : vector<2x128xf32>, vector<128x10xf32>, vector<2x10xf32> -> vector<2x10xf32>
    %146 = arith.addf %138, %145 : vector<2x10xf32>
    %147 = vector.extract_strided_slice %55 {offsets = [11, 0], sizes = [1, 128], strides = [1, 1]} : vector<36x128xf32> to vector<1x128xf32>
    %148 = vector.extract_strided_slice %55 {offsets = [29, 0], sizes = [1, 128], strides = [1, 1]} : vector<36x128xf32> to vector<1x128xf32>
    %149 = tpu.concatenate %147, %148 in 0 : vector<1x128xf32>, vector<1x128xf32> -> vector<2x128xf32>
    %c11 = arith.constant 11 : index
    %c0_86 = arith.constant 0 : index
    %c0_87 = arith.constant 0 : index
    %150 = vector.load %arg6[%c11, %c0_86, %c0_87] : memref<16x128x10xbf16, #tpu.memory_space<vmem>>, vector<1x128x10xbf16>
    %151 = vector.shape_cast %150 : vector<1x128x10xbf16> to vector<128x10xbf16>
    %152 = arith.extf %151 : vector<128x10xbf16> to vector<128x10xf32>
    %cst_88 = arith.constant dense<0.000000e+00> : vector<2x10xf32>
    %153 = tpu.matmul %149, %152, %cst_88 {dimension_numbers = #tpu.dot_dimension_numbers<[1], [0], [0], [1], [0, 0, 1, 1], [], []>} : vector<2x128xf32>, vector<128x10xf32>, vector<2x10xf32> -> vector<2x10xf32>
    %154 = arith.addf %146, %153 : vector<2x10xf32>
    %155 = vector.extract_strided_slice %55 {offsets = [12, 0], sizes = [1, 128], strides = [1, 1]} : vector<36x128xf32> to vector<1x128xf32>
    %156 = vector.extract_strided_slice %55 {offsets = [30, 0], sizes = [1, 128], strides = [1, 1]} : vector<36x128xf32> to vector<1x128xf32>
    %157 = tpu.concatenate %155, %156 in 0 : vector<1x128xf32>, vector<1x128xf32> -> vector<2x128xf32>
    %c12 = arith.constant 12 : index
    %c0_89 = arith.constant 0 : index
    %c0_90 = arith.constant 0 : index
    %158 = vector.load %arg6[%c12, %c0_89, %c0_90] : memref<16x128x10xbf16, #tpu.memory_space<vmem>>, vector<1x128x10xbf16>
    %159 = vector.shape_cast %158 : vector<1x128x10xbf16> to vector<128x10xbf16>
    %160 = arith.extf %159 : vector<128x10xbf16> to vector<128x10xf32>
    %cst_91 = arith.constant dense<0.000000e+00> : vector<2x10xf32>
    %161 = tpu.matmul %157, %160, %cst_91 {dimension_numbers = #tpu.dot_dimension_numbers<[1], [0], [0], [1], [0, 0, 1, 1], [], []>} : vector<2x128xf32>, vector<128x10xf32>, vector<2x10xf32> -> vector<2x10xf32>
    %162 = arith.addf %154, %161 : vector<2x10xf32>
    %163 = vector.extract_strided_slice %55 {offsets = [13, 0], sizes = [1, 128], strides = [1, 1]} : vector<36x128xf32> to vector<1x128xf32>
    %164 = vector.extract_strided_slice %55 {offsets = [31, 0], sizes = [1, 128], strides = [1, 1]} : vector<36x128xf32> to vector<1x128xf32>
    %165 = tpu.concatenate %163, %164 in 0 : vector<1x128xf32>, vector<1x128xf32> -> vector<2x128xf32>
    %c13 = arith.constant 13 : index
    %c0_92 = arith.constant 0 : index
    %c0_93 = arith.constant 0 : index
    %166 = vector.load %arg6[%c13, %c0_92, %c0_93] : memref<16x128x10xbf16, #tpu.memory_space<vmem>>, vector<1x128x10xbf16>
    %167 = vector.shape_cast %166 : vector<1x128x10xbf16> to vector<128x10xbf16>
    %168 = arith.extf %167 : vector<128x10xbf16> to vector<128x10xf32>
    %cst_94 = arith.constant dense<0.000000e+00> : vector<2x10xf32>
    %169 = tpu.matmul %165, %168, %cst_94 {dimension_numbers = #tpu.dot_dimension_numbers<[1], [0], [0], [1], [0, 0, 1, 1], [], []>} : vector<2x128xf32>, vector<128x10xf32>, vector<2x10xf32> -> vector<2x10xf32>
    %170 = arith.addf %162, %169 : vector<2x10xf32>
    %171 = vector.extract_strided_slice %55 {offsets = [14, 0], sizes = [1, 128], strides = [1, 1]} : vector<36x128xf32> to vector<1x128xf32>
    %172 = vector.extract_strided_slice %55 {offsets = [32, 0], sizes = [1, 128], strides = [1, 1]} : vector<36x128xf32> to vector<1x128xf32>
    %173 = tpu.concatenate %171, %172 in 0 : vector<1x128xf32>, vector<1x128xf32> -> vector<2x128xf32>
    %c14 = arith.constant 14 : index
    %c0_95 = arith.constant 0 : index
    %c0_96 = arith.constant 0 : index
    %174 = vector.load %arg6[%c14, %c0_95, %c0_96] : memref<16x128x10xbf16, #tpu.memory_space<vmem>>, vector<1x128x10xbf16>
    %175 = vector.shape_cast %174 : vector<1x128x10xbf16> to vector<128x10xbf16>
    %176 = arith.extf %175 : vector<128x10xbf16> to vector<128x10xf32>
    %cst_97 = arith.constant dense<0.000000e+00> : vector<2x10xf32>
    %177 = tpu.matmul %173, %176, %cst_97 {dimension_numbers = #tpu.dot_dimension_numbers<[1], [0], [0], [1], [0, 0, 1, 1], [], []>} : vector<2x128xf32>, vector<128x10xf32>, vector<2x10xf32> -> vector<2x10xf32>
    %178 = arith.addf %170, %177 : vector<2x10xf32>
    %179 = vector.extract_strided_slice %55 {offsets = [15, 0], sizes = [1, 128], strides = [1, 1]} : vector<36x128xf32> to vector<1x128xf32>
    %180 = vector.extract_strided_slice %55 {offsets = [33, 0], sizes = [1, 128], strides = [1, 1]} : vector<36x128xf32> to vector<1x128xf32>
    %181 = tpu.concatenate %179, %180 in 0 : vector<1x128xf32>, vector<1x128xf32> -> vector<2x128xf32>
    %c15 = arith.constant 15 : index
    %c0_98 = arith.constant 0 : index
    %c0_99 = arith.constant 0 : index
    %182 = vector.load %arg6[%c15, %c0_98, %c0_99] : memref<16x128x10xbf16, #tpu.memory_space<vmem>>, vector<1x128x10xbf16>
    %183 = vector.shape_cast %182 : vector<1x128x10xbf16> to vector<128x10xbf16>
    %184 = arith.extf %183 : vector<128x10xbf16> to vector<128x10xf32>
    %cst_100 = arith.constant dense<0.000000e+00> : vector<2x10xf32>
    %185 = tpu.matmul %181, %184, %cst_100 {dimension_numbers = #tpu.dot_dimension_numbers<[1], [0], [0], [1], [0, 0, 1, 1], [], []>} : vector<2x128xf32>, vector<128x10xf32>, vector<2x10xf32> -> vector<2x10xf32>
    %186 = arith.addf %178, %185 : vector<2x10xf32>
    %c0_101 = arith.constant 0 : index
    %c0_102 = arith.constant 0 : index
    %187 = vector.load %arg8[%c0_101, %c0_102] : memref<2x10xf32, #tpu.memory_space<vmem>>, vector<2x10xf32>
    tpu.vector_store %arg8[%c0_101, %c0_102], %186 {strides = array<i32>} : memref<2x10xf32, #tpu.memory_space<vmem>>, vector<2x10xf32>,
    return
  }
  func.func @transform_0(%arg0: i32) -> (i32, i32) {
    %c0_i32 = arith.constant 0 : i32
    %c0_i32_0 = arith.constant 0 : i32
    %c0_i32_1 = arith.constant 0 : i32
    return %c0_i32, %c0_i32_0 : i32, i32
  }
  func.func @transform_1(%arg0: i32) -> (i32, i32, i32) {
    %c0_i32 = arith.constant 0 : i32
    %c0_i32_0 = arith.constant 0 : i32
    %c0_i32_1 = arith.constant 0 : i32
    %c0_i32_2 = arith.constant 0 : i32
    return %c0_i32, %c0_i32_0, %c0_i32_1 : i32, i32, i32
  }
  func.func @transform_2(%arg0: i32) -> (i32, i32) {
    %c0_i32 = arith.constant 0 : i32
    %c0_i32_0 = arith.constant 0 : i32
    %c0_i32_1 = arith.constant 0 : i32
    return %c0_i32, %c0_i32_0 : i32, i32
  }
  func.func @transform_3(%arg0: i32) -> (i32, i32, i32) {
    %c0_i32 = arith.constant 0 : i32
    %c0_i32_0 = arith.constant 0 : i32
    %c0_i32_1 = arith.constant 0 : i32
    %c0_i32_2 = arith.constant 0 : i32
    return %c0_i32, %c0_i32_0, %c0_i32_1 : i32, i32, i32
  }
  func.func @transform_4(%arg0: i32) -> (i32, i32) {
    %c0_i32 = arith.constant 0 : i32
    %c0_i32_0 = arith.constant 0 : i32
    %c0_i32_1 = arith.constant 0 : i32
    return %c0_i32, %c0_i32_0 : i32, i32
  }
  func.func @transform_5(%arg0: i32) -> (i32, i32, i32) {
    %c0_i32 = arith.constant 0 : i32
    %c0_i32_0 = arith.constant 0 : i32
    %c0_i32_1 = arith.constant 0 : i32
    %c0_i32_2 = arith.constant 0 : i32
    return %c0_i32, %c0_i32_0, %c0_i32_1 : i32, i32, i32
  }
  func.func @transform_6(%arg0: i32) -> (i32, i32) {
    %c0_i32 = arith.constant 0 : i32
    %c0_i32_0 = arith.constant 0 : i32
    %c0_i32_1 = arith.constant 0 : i32
    return %c0_i32, %c0_i32_0 : i32, i32
  }
  func.func @transform_7(%arg0: i32) -> (i32, i32) {
    %c0_i32 = arith.constant 0 : i32
    %c0_i32_0 = arith.constant 0 : i32
    %c0_i32_1 = arith.constant 0 : i32
    return %c0_i32, %c0_i32_0 : i32, i32
  }
}

</mosaic_0001>

<llo_original>
// kernel: cnn_module_forward.1
$region0: #{cnn_module_forward.1}
  #allocation0 [shape = 'u32[]', space=smem, size = 0x4, offset = 0x4, fixed_abs, tag = 'smem constant byte address 0x4 - core index']
  #allocation1 [shape = 'u32[144,128]{1,0:T(1,128)}', space=vmem, size = 0x12000, scoped, tag = 'internal scratch']
  #allocation2 [shape = 'f32[40,64]{1,0:T(8,128)}', space=vmem, size = 0x5000, scoped, tag = 'scratch operand']
  %s0 = inlined_call_operand.vmem [shape: f32[40,48], index: 0, kind: input, shape index: {}]
  %s1 = inlined_call_operand.vmem [shape: bf16[3,48,64], index: 1, kind: input, shape index: {}]
  %s2 = inlined_call_operand.vmem [shape: f32[1,64], index: 2, kind: input, shape index: {}]
  %s3 = inlined_call_operand.vmem [shape: bf16[3,64,128], index: 3, kind: input, shape index: {}]
  %s4 = inlined_call_operand.vmem [shape: f32[1,128], index: 4, kind: input, shape index: {}]
  %s5 = inlined_call_operand.vmem [shape: bf16[16,128,10], index: 5, kind: input, shape index: {}]
  %s6 = inlined_call_operand.vmem [shape: f32[1,10], index: 6, kind: input, shape index: {}]
  %s7 = inlined_call_operand.hbm [shape: f32[2,10], index: 7, kind: output, shape index: {}]
  %s8 = sld [smem:[#allocation0]]
  $region38: #{cnn_module_forward.1} parent=0
    _
  %s10 = ssub.s32 1, %s8
  %s11 = scalar_select 0, %s10, %s8
  $region1: #{cnn_module_forward.1} parent=0
    #allocation3 [shape = 'u8[1024]{0}', space=vmem, size = 0x400, scoped, tag = 'output window, operand 0, single buffered']
    #allocation4 [shape = 's32[1]{0}', space=sflag, size = 0x4, scoped, tag = 'scoped memory for cnn_module_forward.1']
    %12 = vsyncpa [#allocation4], 0
    // Predicated region
    $region2: #{cnn_module_forward.1} parent=1 // pred_check
      _
    $region3: #{cnn_module_forward.1} parent=1 // pred_check_branch
      %14 = sbr.rel (0) target = $region5
    $region4: #{cnn_module_forward.1} parent=1 // pred_region
      _
    $region5: #{cnn_module_forward.1} parent=1 // pred_fallthru
      _
    // Predicated region
    $region6: #{cnn_module_forward.1} parent=1 // pred_check
      _
    $region7: #{cnn_module_forward.1} parent=1 // pred_check_branch
      %16 = sbr.rel (0) target = $region9
    $region8: #{cnn_module_forward.1} parent=1 // pred_region
      _
    $region9: #{cnn_module_forward.1} parent=1 // pred_fallthru
      _
    // Predicated region
    $region10: #{cnn_module_forward.1} parent=1 // pred_check
      _
    $region11: #{cnn_module_forward.1} parent=1 // pred_check_branch
      %18 = sbr.rel (0) target = $region13
    $region12: #{cnn_module_forward.1} parent=1 // pred_region
      _
    $region13: #{cnn_module_forward.1} parent=1 // pred_fallthru
      _
    // Predicated region
    $region14: #{cnn_module_forward.1} parent=1 // pred_check
      _
    $region15: #{cnn_module_forward.1} parent=1 // pred_check_branch
      %20 = sbr.rel (0) target = $region17
    $region16: #{cnn_module_forward.1} parent=1 // pred_region
      _
    $region17: #{cnn_module_forward.1} parent=1 // pred_fallthru
      _
    // Predicated region
    $region18: #{cnn_module_forward.1} parent=1 // pred_check
      _
    $region19: #{cnn_module_forward.1} parent=1 // pred_check_branch
      %22 = sbr.rel (0) target = $region21
    $region20: #{cnn_module_forward.1} parent=1 // pred_region
      _
    $region21: #{cnn_module_forward.1} parent=1 // pred_fallthru
      _
    // Predicated region
    $region22: #{cnn_module_forward.1} parent=1 // pred_check
      _
    $region23: #{cnn_module_forward.1} parent=1 // pred_check_branch
      %24 = sbr.rel (0) target = $region25
    $region24: #{cnn_module_forward.1} parent=1 // pred_region
      _
    $region25: #{cnn_module_forward.1} parent=1 // pred_fallthru
      _
    // Predicated region
    $region26: #{cnn_module_forward.1} parent=1 // pred_check
      _
    $region27: #{cnn_module_forward.1} parent=1 // pred_check_branch
      %26 = sbr.rel (0) target = $region29
    $region28: #{cnn_module_forward.1} parent=1 // pred_region
      _
    $region29: #{cnn_module_forward.1} parent=1 // pred_fallthru
      _
    %v27 = vld [vmem:[%s2] sm:$0x1]
    %v29 = vlaneseq
    %v30 = vshrl.u32 %v29, 7
    %v31 = vsub.s32 0, %v30
    %v32 = vrot.slane %v27, %v31
    %v34 = vld [vmem:[%s0] sm:$0xff]
    %v35 = vld [vmem:[%s0 + $0x8] sm:$0xff]
    %v36 = vld [vmem:[%s0 + $0x10] sm:$0xff]
    %v37 = vld [vmem:[%s0 + $0x18] sm:$0xff]
    %v38 = vld [vmem:[%s0 + $0x20] sm:$0xf]
    %v39 = vld [vmem:[%s1] sm:$0xf]
    %v40 = vld [vmem:[%s1 + $0x4] sm:$0xf]
    %v41 = vld [vmem:[%s1 + $0x8] sm:$0xf]
    %v42 = vld [vmem:[%s1 + $0xc] sm:$0xf]
    %v43 = vld [vmem:[%s1 + $0x10] sm:$0xf]
    %v44 = vld [vmem:[%s1 + $0x14] sm:$0xf]
    %v45 = vunpack.c.l.bf16 %v39
    %v46 = vunpack.c.l.bf16 %v40
    %v47 = vunpack.c.l.bf16 %v41
    %v48 = vunpack.c.l.bf16 %v42
    %v49 = vunpack.c.l.bf16 %v43
    %v50 = vunpack.c.l.bf16 %v44
    %vm51 = vcmask 392192
    %v53 = vsel %vm51, %v34, 0
    %v56 = vsel %vm51, %v35, 0
    %v59 = vsel %vm51, %v36, 0
    %v62 = vsel %vm51, %v37, 0
    %v65 = vsel %vm51, %v38, 0
    %67 = vmatprep.subr.mxu0 0.0
    %68 = vmatpush1.msra.mxu0 %v45
    %69 = vmatprep.subr.mxu0 0.0
    %70 = vmatpush1.msra.mxu0 %v46
    %71 = vmatprep.subr.mxu0 0.0
    %72 = vmatpush1.msra.mxu0 %v47
    %73 = vmatprep.subr.mxu0 0.0
    %74 = vmatpush1.msra.mxu0 %v48
    %75 = vmatprep.subr.mxu0 0.0
    %76 = vmatpush1.msra.mxu0 %v49
    %77 = vmatprep.subr.mxu0 0.0
    %78 = vmatpush1.msra.mxu0 %v50
    %79 = vmatprep.subr.mxu0 0.0
    %80 = vmatpush1.msra.mxu0 0.0
    %81 = vmatprep.subr.mxu0 0.0
    %82 = vmatpush1.msra.mxu0 0.0
    %83 = vmatprep.subr.mxu0 0.0
    %84 = vmatpush1.msra.mxu0 0.0
    %85 = vmatprep.subr.mxu0 0.0
    %86 = vmatpush1.msra.mxu0 0.0
    %87 = vmatprep.subr.mxu0 0.0
    %88 = vmatpush1.msra.mxu0 0.0
    %89 = vmatprep.subr.mxu0 0.0
    %90 = vmatpush1.msra.mxu0 0.0
    %91 = vmatprep.subr.mxu0 0.0
    %92 = vmatpush1.msra.mxu0 0.0
    %93 = vmatprep.subr.mxu0 0.0
    %94 = vmatpush1.msra.mxu0 0.0
    %95 = vmatprep.subr.mxu0 0.0
    %96 = vmatpush1.msra.mxu0 0.0
    %97 = vmatprep.subr.mxu0 0.0
    %98 = vmatpush1.msra.mxu0 0.0
    %99 = vmatprep.subr.mxu0 0.0
    %100 = vmatpush1.msra.mxu0 0.0
    %101 = vmatprep.subr.mxu0 0.0
    %102 = vmatpush1.msra.mxu0 0.0
    %103 = vmatprep.subr.mxu0 0.0
    %104 = vmatpush1.msra.mxu0 0.0
    %105 = vmatprep.subr.mxu0 0.0
    %106 = vmatpush1.msra.mxu0 0.0
    %107 = vmatprep.subr.mxu0 0.0
    %108 = vmatpush1.msra.mxu0 0.0
    %109 = vmatprep.subr.mxu0 0.0
    %110 = vmatpush1.msra.mxu0 0.0
    %111 = vmatprep.subr.mxu0 0.0
    %112 = vmatpush1.msra.mxu0 0.0
    %113 = vmatprep.subr.mxu0 0.0
    %114 = vmatpush1.msra.mxu0 0.0
    %115 = vmatprep.subr.mxu0 0.0
    %116 = vmatpush1.msra.mxu0 0.0
    %117 = vmatprep.subr.mxu0 0.0
    %118 = vmatpush1.msra.mxu0 0.0
    %119 = vmatprep.subr.mxu0 0.0
    %120 = vmatpush1.msra.mxu0 0.0
    %121 = vmatprep.subr.mxu0 0.0
    %122 = vmatpush1.msra.mxu0 0.0
    %123 = vmatprep.subr.mxu0 0.0
    %124 = vmatpush1.msra.mxu0 0.0
    %125 = vmatprep.subr.mxu0 0.0
    %126 = vmatpush1.msra.mxu0 0.0
    %127 = vmatprep.subr.mxu0 0.0
    %128 = vmatpush1.msra.mxu0 0.0
    %129 = vmatprep.subr.mxu0 0.0
    %130 = vmatpush1.msra.mxu0 0.0
    %131 = vmatprep.mubr.f32.mxu0 0.0
    %132 = vmatmul.mubr.f32.gmra.mrb[0].mxu0 %v53
    %v133 = vpop.f32.mrb[0].mxu0
    %v134 = vadd.f32 0.0, %v133
    %v135 = vpop.f32.mrb[0].mxu0
    %136 = vmatprep.mubr.f32.mxu0 0.0
    %137 = vmatmul.mubr.f32.gmra.mrb[0].mxu0 %v56
    %v138 = vpop.f32.mrb[0].mxu0
    %v139 = vadd.f32 0.0, %v138
    %v140 = vpop.f32.mrb[0].mxu0
    %141 = vmatprep.mubr.f32.mxu0 0.0
    %142 = vmatmul.mubr.f32.gmra.mrb[0].mxu0 %v59
    %v143 = vpop.f32.mrb[0].mxu0
    %v144 = vadd.f32 0.0, %v143
    %v145 = vpop.f32.mrb[0].mxu0
    %146 = vmatprep.mubr.f32.mxu0 0.0
    %147 = vmatmul.mubr.f32.gmra.mrb[0].mxu0 %v62
    %v148 = vpop.f32.mrb[0].mxu0
    %v149 = vadd.f32 0.0, %v148
    %v150 = vpop.f32.mrb[0].mxu0
    %151 = vmatprep.mubr.f32.mxu0 0.0
    %152 = vmatmul.mubr.f32.gmra.mrb[0].mxu0 %v65
    %v153 = vpop.f32.mrb[0].mxu0
    %v154 = vadd.f32 0.0, %v153
    %v155 = vpop.f32.mrb[0].mxu0
    %156 = vdwg.mxu0
    %v157 = vadd.f32 %v32, %v134
    %v158 = vadd.f32 %v32, %v139
    %v159 = vadd.f32 %v32, %v144
    %v160 = vadd.f32 %v32, %v149
    %v161 = vadd.f32 %v32, %v154
    %v162 = vld [vmem:[%s0 + $0x1] sm:$0xff]
    %v163 = vld [vmem:[%s0 + $0x9] sm:$0xff]
    %v164 = vld [vmem:[%s0 + $0x11] sm:$0xff]
    %v165 = vld [vmem:[%s0 + $0x19] sm:$0xff]
    %v166 = vld [vmem:[%s0 + $0x21] sm:$0xf]
    %s167 = scalar_lea.vmem %s1, 24
    %v168 = vld [vmem:[%s167] sm:$0xf]
    %v169 = vld [vmem:[%s167 + $0x4] sm:$0xf]
    %v170 = vld [vmem:[%s167 + $0x8] sm:$0xf]
    %v171 = vld [vmem:[%s167 + $0xc] sm:$0xf]
    %v172 = vld [vmem:[%s167 + $0x10] sm:$0xf]
    %v173 = vld [vmem:[%s167 + $0x14] sm:$0xf]
    %v174 = vunpack.c.l.bf16 %v168
    %v175 = vunpack.c.l.bf16 %v169
    %v176 = vunpack.c.l.bf16 %v170
    %v177 = vunpack.c.l.bf16 %v171
    %v178 = vunpack.c.l.bf16 %v172
    %v179 = vunpack.c.l.bf16 %v173
    %v181 = vsel %vm51, %v162, 0
    %v184 = vsel %vm51, %v163, 0
    %v187 = vsel %vm51, %v164, 0
    %v190 = vsel %vm51, %v165, 0
    %v193 = vsel %vm51, %v166, 0
    %195 = vmatprep.subr.mxu0 0.0
    %196 = vmatpush1.msra.mxu0 %v174
    %197 = vmatprep.subr.mxu0 0.0
    %198 = vmatpush1.msra.mxu0 %v175
    %199 = vmatprep.subr.mxu0 0.0
    %200 = vmatpush1.msra.mxu0 %v176
    %201 = vmatprep.subr.mxu0 0.0
    %202 = vmatpush1.msra.mxu0 %v177
    %203 = vmatprep.subr.mxu0 0.0
    %204 = vmatpush1.msra.mxu0 %v178
    %205 = vmatprep.subr.mxu0 0.0
    %206 = vmatpush1.msra.mxu0 %v179
    %207 = vmatprep.subr.mxu0 0.0
    %208 = vmatpush1.msra.mxu0 0.0
    %209 = vmatprep.subr.mxu0 0.0
    %210 = vmatpush1.msra.mxu0 0.0
    %211 = vmatprep.subr.mxu0 0.0
    %212 = vmatpush1.msra.mxu0 0.0
    %213 = vmatprep.subr.mxu0 0.0
    %214 = vmatpush1.msra.mxu0 0.0
    %215 = vmatprep.subr.mxu0 0.0
    %216 = vmatpush1.msra.mxu0 0.0
    %217 = vmatprep.subr.mxu0 0.0
    %218 = vmatpush1.msra.mxu0 0.0
    %219 = vmatprep.subr.mxu0 0.0
    %220 = vmatpush1.msra.mxu0 0.0
    %221 = vmatprep.subr.mxu0 0.0
    %222 = vmatpush1.msra.mxu0 0.0
    %223 = vmatprep.subr.mxu0 0.0
    %224 = vmatpush1.msra.mxu0 0.0
    %225 = vmatprep.subr.mxu0 0.0
    %226 = vmatpush1.msra.mxu0 0.0
    %227 = vmatprep.subr.mxu0 0.0
    %228 = vmatpush1.msra.mxu0 0.0
    %229 = vmatprep.subr.mxu0 0.0
    %230 = vmatpush1.msra.mxu0 0.0
    %231 = vmatprep.subr.mxu0 0.0
    %232 = vmatpush1.msra.mxu0 0.0
    %233 = vmatprep.subr.mxu0 0.0
    %234 = vmatpush1.msra.mxu0 0.0
    %235 = vmatprep.subr.mxu0 0.0
    %236 = vmatpush1.msra.mxu0 0.0
    %237 = vmatprep.subr.mxu0 0.0
    %238 = vmatpush1.msra.mxu0 0.0
    %239 = vmatprep.subr.mxu0 0.0
    %240 = vmatpush1.msra.mxu0 0.0
    %241 = vmatprep.subr.mxu0 0.0
    %242 = vmatpush1.msra.mxu0 0.0
    %243 = vmatprep.subr.mxu0 0.0
    %244 = vmatpush1.msra.mxu0 0.0
    %245 = vmatprep.subr.mxu0 0.0
    %246 = vmatpush1.msra.mxu0 0.0
    %247 = vmatprep.subr.mxu0 0.0
    %248 = vmatpush1.msra.mxu0 0.0
    %249 = vmatprep.subr.mxu0 0.0
    %250 = vmatpush1.msra.mxu0 0.0
    %251 = vmatprep.subr.mxu0 0.0
    %252 = vmatpush1.msra.mxu0 0.0
    %253 = vmatprep.subr.mxu0 0.0
    %254 = vmatpush1.msra.mxu0 0.0
    %255 = vmatprep.subr.mxu0 0.0
    %256 = vmatpush1.msra.mxu0 0.0
    %257 = vmatprep.subr.mxu0 0.0
    %258 = vmatpush1.msra.mxu0 0.0
    %259 = vmatprep.mubr.f32.mxu0 0.0
    %260 = vmatmul.mubr.f32.gmra.mrb[0].mxu0 %v181
    %v261 = vpop.f32.mrb[0].mxu0
    %v262 = vadd.f32 0.0, %v261
    %v263 = vpop.f32.mrb[0].mxu0
    %264 = vmatprep.mubr.f32.mxu0 0.0
    %265 = vmatmul.mubr.f32.gmra.mrb[0].mxu0 %v184
    %v266 = vpop.f32.mrb[0].mxu0
    %v267 = vadd.f32 0.0, %v266
    %v268 = vpop.f32.mrb[0].mxu0
    %269 = vmatprep.mubr.f32.mxu0 0.0
    %270 = vmatmul.mubr.f32.gmra.mrb[0].mxu0 %v187
    %v271 = vpop.f32.mrb[0].mxu0
    %v272 = vadd.f32 0.0, %v271
    %v273 = vpop.f32.mrb[0].mxu0
    %274 = vmatprep.mubr.f32.mxu0 0.0
    %275 = vmatmul.mubr.f32.gmra.mrb[0].mxu0 %v190
    %v276 = vpop.f32.mrb[0].mxu0
    %v277 = vadd.f32 0.0, %v276
    %v278 = vpop.f32.mrb[0].mxu0
    %279 = vmatprep.mubr.f32.mxu0 0.0
    %280 = vmatmul.mubr.f32.gmra.mrb[0].mxu0 %v193
    %v281 = vpop.f32.mrb[0].mxu0
    %v282 = vadd.f32 0.0, %v281
    %v283 = vpop.f32.mrb[0].mxu0
    %284 = vdwg.mxu0
    %v285 = vadd.f32 %v157, %v262
    %v286 = vadd.f32 %v158, %v267
    %v287 = vadd.f32 %v159, %v272
    %v288 = vadd.f32 %v160, %v277
    %v289 = vadd.f32 %v161, %v282
    %v290 = vld [vmem:[%s0 + $0x2] sm:$0xff]
    %v291 = vld [vmem:[%s0 + $0xa] sm:$0xff]
    %v292 = vld [vmem:[%s0 + $0x12] sm:$0xff]
    %v293 = vld [vmem:[%s0 + $0x1a] sm:$0xff]
    %v294 = vld [vmem:[%s0 + $0x22] sm:$0xf]
    %s295 = scalar_lea.vmem %s1, 48
    %v296 = vld [vmem:[%s295] sm:$0xf]
    %v297 = vld [vmem:[%s295 + $0x4] sm:$0xf]
    %v298 = vld [vmem:[%s295 + $0x8] sm:$0xf]
    %v299 = vld [vmem:[%s295 + $0xc] sm:$0xf]
    %v300 = vld [vmem:[%s295 + $0x10] sm:$0xf]
    %v301 = vld [vmem:[%s295 + $0x14] sm:$0xf]
    %v302 = vunpack.c.l.bf16 %v296
    %v303 = vunpack.c.l.bf16 %v297
    %v304 = vunpack.c.l.bf16 %v298
    %v305 = vunpack.c.l.bf16 %v299
    %v306 = vunpack.c.l.bf16 %v300
    %v307 = vunpack.c.l.bf16 %v301
    %v309 = vsel %vm51, %v290, 0
    %v312 = vsel %vm51, %v291, 0
    %v315 = vsel %vm51, %v292, 0
    %v318 = vsel %vm51, %v293, 0
    %v321 = vsel %vm51, %v294, 0
    %323 = vmatprep.subr.mxu0 0.0
    %324 = vmatpush1.msra.mxu0 %v302
    %325 = vmatprep.subr.mxu0 0.0
    %326 = vmatpush1.msra.mxu0 %v303
    %327 = vmatprep.subr.mxu0 0.0
    %328 = vmatpush1.msra.mxu0 %v304
    %329 = vmatprep.subr.mxu0 0.0
    %330 = vmatpush1.msra.mxu0 %v305
    %331 = vmatprep.subr.mxu0 0.0
    %332 = vmatpush1.msra.mxu0 %v306
    %333 = vmatprep.subr.mxu0 0.0
    %334 = vmatpush1.msra.mxu0 %v307
    %335 = vmatprep.subr.mxu0 0.0
    %336 = vmatpush1.msra.mxu0 0.0
    %337 = vmatprep.subr.mxu0 0.0
    %338 = vmatpush1.msra.mxu0 0.0
    %339 = vmatprep.subr.mxu0 0.0
    %340 = vmatpush1.msra.mxu0 0.0
    %341 = vmatprep.subr.mxu0 0.0
    %342 = vmatpush1.msra.mxu0 0.0
    %343 = vmatprep.subr.mxu0 0.0
    %344 = vmatpush1.msra.mxu0 0.0
    %345 = vmatprep.subr.mxu0 0.0
    %346 = vmatpush1.msra.mxu0 0.0
    %347 = vmatprep.subr.mxu0 0.0
    %348 = vmatpush1.msra.mxu0 0.0
    %349 = vmatprep.subr.mxu0 0.0
    %350 = vmatpush1.msra.mxu0 0.0
    %351 = vmatprep.subr.mxu0 0.0
    %352 = vmatpush1.msra.mxu0 0.0
    %353 = vmatprep.subr.mxu0 0.0
    %354 = vmatpush1.msra.mxu0 0.0
    %355 = vmatprep.subr.mxu0 0.0
    %356 = vmatpush1.msra.mxu0 0.0
    %357 = vmatprep.subr.mxu0 0.0
    %358 = vmatpush1.msra.mxu0 0.0
    %359 = vmatprep.subr.mxu0 0.0
    %360 = vmatpush1.msra.mxu0 0.0
    %361 = vmatprep.subr.mxu0 0.0
    %362 = vmatpush1.msra.mxu0 0.0
    %363 = vmatprep.subr.mxu0 0.0
    %364 = vmatpush1.msra.mxu0 0.0
    %365 = vmatprep.subr.mxu0 0.0
    %366 = vmatpush1.msra.mxu0 0.0
    %367 = vmatprep.subr.mxu0 0.0
    %368 = vmatpush1.msra.mxu0 0.0
    %369 = vmatprep.subr.mxu0 0.0
    %370 = vmatpush1.msra.mxu0 0.0
    %371 = vmatprep.subr.mxu0 0.0
    %372 = vmatpush1.msra.mxu0 0.0
    %373 = vmatprep.subr.mxu0 0.0
    %374 = vmatpush1.msra.mxu0 0.0
    %375 = vmatprep.subr.mxu0 0.0
    %376 = vmatpush1.msra.mxu0 0.0
    %377 = vmatprep.subr.mxu0 0.0
    %378 = vmatpush1.msra.mxu0 0.0
    %379 = vmatprep.subr.mxu0 0.0
    %380 = vmatpush1.msra.mxu0 0.0
    %381 = vmatprep.subr.mxu0 0.0
    %382 = vmatpush1.msra.mxu0 0.0
    %383 = vmatprep.subr.mxu0 0.0
    %384 = vmatpush1.msra.mxu0 0.0
    %385 = vmatprep.subr.mxu0 0.0
    %386 = vmatpush1.msra.mxu0 0.0
    %387 = vmatprep.mubr.f32.mxu0 0.0
    %388 = vmatmul.mubr.f32.gmra.mrb[0].mxu0 %v309
    %v389 = vpop.f32.mrb[0].mxu0
    %v390 = vadd.f32 0.0, %v389
    %v391 = vpop.f32.mrb[0].mxu0
    %392 = vmatprep.mubr.f32.mxu0 0.0
    %393 = vmatmul.mubr.f32.gmra.mrb[0].mxu0 %v312
    %v394 = vpop.f32.mrb[0].mxu0
    %v395 = vadd.f32 0.0, %v394
    %v396 = vpop.f32.mrb[0].mxu0
    %397 = vmatprep.mubr.f32.mxu0 0.0
    %398 = vmatmul.mubr.f32.gmra.mrb[0].mxu0 %v315
    %v399 = vpop.f32.mrb[0].mxu0
    %v400 = vadd.f32 0.0, %v399
    %v401 = vpop.f32.mrb[0].mxu0
    %402 = vmatprep.mubr.f32.mxu0 0.0
    %403 = vmatmul.mubr.f32.gmra.mrb[0].mxu0 %v318
    %v404 = vpop.f32.mrb[0].mxu0
    %v405 = vadd.f32 0.0, %v404
    %v406 = vpop.f32.mrb[0].mxu0
    %407 = vmatprep.mubr.f32.mxu0 0.0
    %408 = vmatmul.mubr.f32.gmra.mrb[0].mxu0 %v321
    %v409 = vpop.f32.mrb[0].mxu0
    %v410 = vadd.f32 0.0, %v409
    %v411 = vpop.f32.mrb[0].mxu0
    %412 = vdwg.mxu0
    %v413 = vadd.f32 %v285, %v390
    %v414 = vadd.f32 %v286, %v395
    %v415 = vadd.f32 %v287, %v400
    %v416 = vadd.f32 %v288, %v405
    %v417 = vadd.f32 %v289, %v410
    %v418 = vmax.f32 %v413, 0.0
    %v419 = vmax.f32 %v414, 0.0
    %v420 = vmax.f32 %v415, 0.0
    %v421 = vmax.f32 %v416, 0.0
    %v422 = vmax.f32 %v417, 0.0
    %vm423 = vcmask 516096
    %424 = vst.msk [vmem:[#allocation2] sm:$0x1] %vm423, 0.0
    %vm425 = vcmask 517120
    %426 = vst.msk [vmem:[#allocation2 + $0x11] sm:$0x3] %vm425, 0.0
    %vm427 = vcmask 523264
    %428 = vst.msk [vmem:[#allocation2 + $0x1] sm:$0xff] %vm427, %v418
    %429 = vst.msk [vmem:[#allocation2 + $0x9] sm:$0xff] %vm427, %v419
    %vm430 = vcmask 520192
    %431 = vst.msk [vmem:[#allocation2 + $0x23] sm:$0x1f] %vm430, 0.0
    %vm432 = vcmask 523266
    %433 = vst.msk [vmem:[#allocation2 + $0x11] sm:$0xfc] %vm432, %v420
    %434 = vst.msk [vmem:[#allocation2 + $0x19] sm:$0xff] %vm427, %v421
    %435 = vst.msk [vmem:[#allocation2 + $0x21] sm:$0x3] %vm425, %v422
    %v436 = vld [vmem:[%s4] sm:$0x1]
    %v438 = vlaneseq
    %v439 = vshrl.u32 %v438, 7
    %v440 = vsub.s32 0, %v439
    %v441 = vrot.slane %v436, %v440
    %v443 = vld [vmem:[#allocation2] sm:$0xff]
    %v444 = vld [vmem:[#allocation2 + $0x8] sm:$0xff]
    %v445 = vld [vmem:[#allocation2 + $0x10] sm:$0xff]
    %v446 = vld [vmem:[#allocation2 + $0x18] sm:$0xff]
    %v447 = vld [vmem:[#allocation2 + $0x20] sm:$0xf]
    %v448 = vld [vmem:[%s3] sm:$0xf]
    %v449 = vld [vmem:[%s3 + $0x4] sm:$0xf]
    %v450 = vld [vmem:[%s3 + $0x8] sm:$0xf]
    %v451 = vld [vmem:[%s3 + $0xc] sm:$0xf]
    %v452 = vld [vmem:[%s3 + $0x10] sm:$0xf]
    %v453 = vld [vmem:[%s3 + $0x14] sm:$0xf]
    %v454 = vld [vmem:[%s3 + $0x18] sm:$0xf]
    %v455 = vld [vmem:[%s3 + $0x1c] sm:$0xf]
    %v456 = vunpack.c.l.bf16 %v448
    %v457 = vunpack.c.l.bf16 %v449
    %v458 = vunpack.c.l.bf16 %v450
    %v459 = vunpack.c.l.bf16 %v451
    %v460 = vunpack.c.l.bf16 %v452
    %v461 = vunpack.c.l.bf16 %v453
    %v462 = vunpack.c.l.bf16 %v454
    %v463 = vunpack.c.l.bf16 %v455
    %v465 = vsel %vm427, %v443, 0
    %v468 = vsel %vm427, %v444, 0
    %v471 = vsel %vm427, %v445, 0
    %v474 = vsel %vm427, %v446, 0
    %v477 = vsel %vm427, %v447, 0
    %479 = vmatprep.subr.mxu0 0.0
    %480 = vmatpush1.msra.mxu0 %v456
    %481 = vmatprep.subr.mxu0 0.0
    %482 = vmatpush1.msra.mxu0 %v457
    %483 = vmatprep.subr.mxu0 0.0
    %484 = vmatpush1.msra.mxu0 %v458
    %485 = vmatprep.subr.mxu0 0.0
    %486 = vmatpush1.msra.mxu0 %v459
    %487 = vmatprep.subr.mxu0 0.0
    %488 = vmatpush1.msra.mxu0 %v460
    %489 = vmatprep.subr.mxu0 0.0
    %490 = vmatpush1.msra.mxu0 %v461
    %491 = vmatprep.subr.mxu0 0.0
    %492 = vmatpush1.msra.mxu0 %v462
    %493 = vmatprep.subr.mxu0 0.0
    %494 = vmatpush1.msra.mxu0 %v463
    %495 = vmatprep.subr.mxu0 0.0
    %496 = vmatpush1.msra.mxu0 0.0
    %497 = vmatprep.subr.mxu0 0.0
    %498 = vmatpush1.msra.mxu0 0.0
    %499 = vmatprep.subr.mxu0 0.0
    %500 = vmatpush1.msra.mxu0 0.0
    %501 = vmatprep.subr.mxu0 0.0
    %502 = vmatpush1.msra.mxu0 0.0
    %503 = vmatprep.subr.mxu0 0.0
    %504 = vmatpush1.msra.mxu0 0.0
    %505 = vmatprep.subr.mxu0 0.0
    %506 = vmatpush1.msra.mxu0 0.0
    %507 = vmatprep.subr.mxu0 0.0
    %508 = vmatpush1.msra.mxu0 0.0
    %509 = vmatprep.subr.mxu0 0.0
    %510 = vmatpush1.msra.mxu0 0.0
    %511 = vmatprep.subr.mxu0 0.0
    %512 = vmatpush1.msra.mxu0 0.0
    %513 = vmatprep.subr.mxu0 0.0
    %514 = vmatpush1.msra.mxu0 0.0
    %515 = vmatprep.subr.mxu0 0.0
    %516 = vmatpush1.msra.mxu0 0.0
    %517 = vmatprep.subr.mxu0 0.0
    %518 = vmatpush1.msra.mxu0 0.0
    %519 = vmatprep.subr.mxu0 0.0
    %520 = vmatpush1.msra.mxu0 0.0
    %521 = vmatprep.subr.mxu0 0.0
    %522 = vmatpush1.msra.mxu0 0.0
    %523 = vmatprep.subr.mxu0 0.0
    %524 = vmatpush1.msra.mxu0 0.0
    %525 = vmatprep.subr.mxu0 0.0
    %526 = vmatpush1.msra.mxu0 0.0
    %527 = vmatprep.subr.mxu0 0.0
    %528 = vmatpush1.msra.mxu0 0.0
    %529 = vmatprep.subr.mxu0 0.0
    %530 = vmatpush1.msra.mxu0 0.0
    %531 = vmatprep.subr.mxu0 0.0
    %532 = vmatpush1.msra.mxu0 0.0
    %533 = vmatprep.subr.mxu0 0.0
    %534 = vmatpush1.msra.mxu0 0.0
    %535 = vmatprep.subr.mxu0 0.0
    %536 = vmatpush1.msra.mxu0 0.0
    %537 = vmatprep.subr.mxu0 0.0
    %538 = vmatpush1.msra.mxu0 0.0
    %539 = vmatprep.subr.mxu0 0.0
    %540 = vmatpush1.msra.mxu0 0.0
    %541 = vmatprep.subr.mxu0 0.0
    %542 = vmatpush1.msra.mxu0 0.0
    %543 = vmatprep.mubr.f32.mxu0 0.0
    %544 = vmatmul.mubr.f32.gmra.mrb[0].mxu0 %v465
    %v545 = vpop.f32.mrb[0].mxu0
    %v546 = vadd.f32 0.0, %v545
    %v547 = vpop.f32.mrb[0].mxu0
    %548 = vmatprep.mubr.f32.mxu0 0.0
    %549 = vmatmul.mubr.f32.gmra.mrb[0].mxu0 %v468
    %v550 = vpop.f32.mrb[0].mxu0
    %v551 = vadd.f32 0.0, %v550
    %v552 = vpop.f32.mrb[0].mxu0
    %553 = vmatprep.mubr.f32.mxu0 0.0
    %554 = vmatmul.mubr.f32.gmra.mrb[0].mxu0 %v471
    %v555 = vpop.f32.mrb[0].mxu0
    %v556 = vadd.f32 0.0, %v555
    %v557 = vpop.f32.mrb[0].mxu0
    %558 = vmatprep.mubr.f32.mxu0 0.0
    %559 = vmatmul.mubr.f32.gmra.mrb[0].mxu0 %v474
    %v560 = vpop.f32.mrb[0].mxu0
    %v561 = vadd.f32 0.0, %v560
    %v562 = vpop.f32.mrb[0].mxu0
    %563 = vmatprep.mubr.f32.mxu0 0.0
    %564 = vmatmul.mubr.f32.gmra.mrb[0].mxu0 %v477
    %v565 = vpop.f32.mrb[0].mxu0
    %v566 = vadd.f32 0.0, %v565
    %v567 = vpop.f32.mrb[0].mxu0
    %568 = vdwg.mxu0
    %v569 = vadd.f32 %v441, %v546
    %v570 = vadd.f32 %v441, %v551
    %v571 = vadd.f32 %v441, %v556
    %v572 = vadd.f32 %v441, %v561
    %v573 = vadd.f32 %v441, %v566
    %v574 = vld [vmem:[#allocation2 + $0x1] sm:$0xff]
    %v575 = vld [vmem:[#allocation2 + $0x9] sm:$0xff]
    %v576 = vld [vmem:[#allocation2 + $0x11] sm:$0xff]
    %v577 = vld [vmem:[#allocation2 + $0x19] sm:$0xff]
    %v578 = vld [vmem:[#allocation2 + $0x21] sm:$0xf]
    %s579 = scalar_lea.vmem %s3, 32
    %v580 = vld [vmem:[%s579] sm:$0xf]
    %v581 = vld [vmem:[%s579 + $0x4] sm:$0xf]
    %v582 = vld [vmem:[%s579 + $0x8] sm:$0xf]
    %v583 = vld [vmem:[%s579 + $0xc] sm:$0xf]
    %v584 = vld [vmem:[%s579 + $0x10] sm:$0xf]
    %v585 = vld [vmem:[%s579 + $0x14] sm:$0xf]
    %v586 = vld [vmem:[%s579 + $0x18] sm:$0xf]
    %v587 = vld [vmem:[%s579 + $0x1c] sm:$0xf]
    %v588 = vunpack.c.l.bf16 %v580
    %v589 = vunpack.c.l.bf16 %v581
    %v590 = vunpack.c.l.bf16 %v582
    %v591 = vunpack.c.l.bf16 %v583
    %v592 = vunpack.c.l.bf16 %v584
    %v593 = vunpack.c.l.bf16 %v585
    %v594 = vunpack.c.l.bf16 %v586
    %v595 = vunpack.c.l.bf16 %v587
    %v597 = vsel %vm427, %v574, 0
    %v600 = vsel %vm427, %v575, 0
    %v603 = vsel %vm427, %v576, 0
    %v606 = vsel %vm427, %v577, 0
    %v609 = vsel %vm427, %v578, 0
    %611 = vmatprep.subr.mxu0 0.0
    %612 = vmatpush1.msra.mxu0 %v588
    %613 = vmatprep.subr.mxu0 0.0
    %614 = vmatpush1.msra.mxu0 %v589
    %615 = vmatprep.subr.mxu0 0.0
    %616 = vmatpush1.msra.mxu0 %v590
    %617 = vmatprep.subr.mxu0 0.0
    %618 = vmatpush1.msra.mxu0 %v591
    %619 = vmatprep.subr.mxu0 0.0
    %620 = vmatpush1.msra.mxu0 %v592
    %621 = vmatprep.subr.mxu0 0.0
    %622 = vmatpush1.msra.mxu0 %v593
    %623 = vmatprep.subr.mxu0 0.0
    %624 = vmatpush1.msra.mxu0 %v594
    %625 = vmatprep.subr.mxu0 0.0
    %626 = vmatpush1.msra.mxu0 %v595
    %627 = vmatprep.subr.mxu0 0.0
    %628 = vmatpush1.msra.mxu0 0.0
    %629 = vmatprep.subr.mxu0 0.0
    %630 = vmatpush1.msra.mxu0 0.0
    %631 = vmatprep.subr.mxu0 0.0
    %632 = vmatpush1.msra.mxu0 0.0
    %633 = vmatprep.subr.mxu0 0.0
    %634 = vmatpush1.msra.mxu0 0.0
    %635 = vmatprep.subr.mxu0 0.0
    %636 = vmatpush1.msra.mxu0 0.0
    %637 = vmatprep.subr.mxu0 0.0
    %638 = vmatpush1.msra.mxu0 0.0
    %639 = vmatprep.subr.mxu0 0.0
    %640 = vmatpush1.msra.mxu0 0.0
    %641 = vmatprep.subr.mxu0 0.0
    %642 = vmatpush1.msra.mxu0 0.0
    %643 = vmatprep.subr.mxu0 0.0
    %644 = vmatpush1.msra.mxu0 0.0
    %645 = vmatprep.subr.mxu0 0.0
    %646 = vmatpush1.msra.mxu0 0.0
    %647 = vmatprep.subr.mxu0 0.0
    %648 = vmatpush1.msra.mxu0 0.0
    %649 = vmatprep.subr.mxu0 0.0
    %650 = vmatpush1.msra.mxu0 0.0
    %651 = vmatprep.subr.mxu0 0.0
    %652 = vmatpush1.msra.mxu0 0.0
    %653 = vmatprep.subr.mxu0 0.0
    %654 = vmatpush1.msra.mxu0 0.0
    %655 = vmatprep.subr.mxu0 0.0
    %656 = vmatpush1.msra.mxu0 0.0
    %657 = vmatprep.subr.mxu0 0.0
    %658 = vmatpush1.msra.mxu0 0.0
    %659 = vmatprep.subr.mxu0 0.0
    %660 = vmatpush1.msra.mxu0 0.0
    %661 = vmatprep.subr.mxu0 0.0
    %662 = vmatpush1.msra.mxu0 0.0
    %663 = vmatprep.subr.mxu0 0.0
    %664 = vmatpush1.msra.mxu0 0.0
    %665 = vmatprep.subr.mxu0 0.0
    %666 = vmatpush1.msra.mxu0 0.0
    %667 = vmatprep.subr.mxu0 0.0
    %668 = vmatpush1.msra.mxu0 0.0
    %669 = vmatprep.subr.mxu0 0.0
    %670 = vmatpush1.msra.mxu0 0.0
    %671 = vmatprep.subr.mxu0 0.0
    %672 = vmatpush1.msra.mxu0 0.0
    %673 = vmatprep.subr.mxu0 0.0
    %674 = vmatpush1.msra.mxu0 0.0
    %675 = vmatprep.mubr.f32.mxu0 0.0
    %676 = vmatmul.mubr.f32.gmra.mrb[0].mxu0 %v597
    %v677 = vpop.f32.mrb[0].mxu0
    %v678 = vadd.f32 0.0, %v677
    %v679 = vpop.f32.mrb[0].mxu0
    %680 = vmatprep.mubr.f32.mxu0 0.0
    %681 = vmatmul.mubr.f32.gmra.mrb[0].mxu0 %v600
    %v682 = vpop.f32.mrb[0].mxu0
    %v683 = vadd.f32 0.0, %v682
    %v684 = vpop.f32.mrb[0].mxu0
    %685 = vmatprep.mubr.f32.mxu0 0.0
    %686 = vmatmul.mubr.f32.gmra.mrb[0].mxu0 %v603
    %v687 = vpop.f32.mrb[0].mxu0
    %v688 = vadd.f32 0.0, %v687
    %v689 = vpop.f32.mrb[0].mxu0
    %690 = vmatprep.mubr.f32.mxu0 0.0
    %691 = vmatmul.mubr.f32.gmra.mrb[0].mxu0 %v606
    %v692 = vpop.f32.mrb[0].mxu0
    %v693 = vadd.f32 0.0, %v692
    %v694 = vpop.f32.mrb[0].mxu0
    %695 = vmatprep.mubr.f32.mxu0 0.0
    %696 = vmatmul.mubr.f32.gmra.mrb[0].mxu0 %v609
    %v697 = vpop.f32.mrb[0].mxu0
    %v698 = vadd.f32 0.0, %v697
    %v699 = vpop.f32.mrb[0].mxu0
    %700 = vdwg.mxu0
    %v701 = vadd.f32 %v569, %v678
    %v702 = vadd.f32 %v570, %v683
    %v703 = vadd.f32 %v571, %v688
    %v704 = vadd.f32 %v572, %v693
    %v705 = vadd.f32 %v573, %v698
    %v706 = vld [vmem:[#allocation2 + $0x2] sm:$0xff]
    %v707 = vld [vmem:[#allocation2 + $0xa] sm:$0xff]
    %v708 = vld [vmem:[#allocation2 + $0x12] sm:$0xff]
    %v709 = vld [vmem:[#allocation2 + $0x1a] sm:$0xff]
    %v710 = vld [vmem:[#allocation2 + $0x22] sm:$0xf]
    %s711 = scalar_lea.vmem %s3, 64
    %v712 = vld [vmem:[%s711] sm:$0xf]
    %v713 = vld [vmem:[%s711 + $0x4] sm:$0xf]
    %v714 = vld [vmem:[%s711 + $0x8] sm:$0xf]
    %v715 = vld [vmem:[%s711 + $0xc] sm:$0xf]
    %v716 = vld [vmem:[%s711 + $0x10] sm:$0xf]
    %v717 = vld [vmem:[%s711 + $0x14] sm:$0xf]
    %v718 = vld [vmem:[%s711 + $0x18] sm:$0xf]
    %v719 = vld [vmem:[%s711 + $0x1c] sm:$0xf]
    %v720 = vunpack.c.l.bf16 %v712
    %v721 = vunpack.c.l.bf16 %v713
    %v722 = vunpack.c.l.bf16 %v714
    %v723 = vunpack.c.l.bf16 %v715
    %v724 = vunpack.c.l.bf16 %v716
    %v725 = vunpack.c.l.bf16 %v717
    %v726 = vunpack.c.l.bf16 %v718
    %v727 = vunpack.c.l.bf16 %v719
    %v729 = vsel %vm427, %v706, 0
    %v732 = vsel %vm427, %v707, 0
    %v735 = vsel %vm427, %v708, 0
    %v738 = vsel %vm427, %v709, 0
    %v741 = vsel %vm427, %v710, 0
    %743 = vmatprep.subr.mxu0 0.0
    %744 = vmatpush1.msra.mxu0 %v720
    %745 = vmatprep.subr.mxu0 0.0
    %746 = vmatpush1.msra.mxu0 %v721
    %747 = vmatprep.subr.mxu0 0.0
    %748 = vmatpush1.msra.mxu0 %v722
    %749 = vmatprep.subr.mxu0 0.0
    %750 = vmatpush1.msra.mxu0 %v723
    %751 = vmatprep.subr.mxu0 0.0
    %752 = vmatpush1.msra.mxu0 %v724
    %753 = vmatprep.subr.mxu0 0.0
    %754 = vmatpush1.msra.mxu0 %v725
    %755 = vmatprep.subr.mxu0 0.0
    %756 = vmatpush1.msra.mxu0 %v726
    %757 = vmatprep.subr.mxu0 0.0
    %758 = vmatpush1.msra.mxu0 %v727
    %759 = vmatprep.subr.mxu0 0.0
    %760 = vmatpush1.msra.mxu0 0.0
    %761 = vmatprep.subr.mxu0 0.0
    %762 = vmatpush1.msra.mxu0 0.0
    %763 = vmatprep.subr.mxu0 0.0
    %764 = vmatpush1.msra.mxu0 0.0
    %765 = vmatprep.subr.mxu0 0.0
    %766 = vmatpush1.msra.mxu0 0.0
    %767 = vmatprep.subr.mxu0 0.0
    %768 = vmatpush1.msra.mxu0 0.0
    %769 = vmatprep.subr.mxu0 0.0
    %770 = vmatpush1.msra.mxu0 0.0
    %771 = vmatprep.subr.mxu0 0.0
    %772 = vmatpush1.msra.mxu0 0.0
    %773 = vmatprep.subr.mxu0 0.0
    %774 = vmatpush1.msra.mxu0 0.0
    %775 = vmatprep.subr.mxu0 0.0
    %776 = vmatpush1.msra.mxu0 0.0
    %777 = vmatprep.subr.mxu0 0.0
    %778 = vmatpush1.msra.mxu0 0.0
    %779 = vmatprep.subr.mxu0 0.0
    %780 = vmatpush1.msra.mxu0 0.0
    %781 = vmatprep.subr.mxu0 0.0
    %782 = vmatpush1.msra.mxu0 0.0
    %783 = vmatprep.subr.mxu0 0.0
    %784 = vmatpush1.msra.mxu0 0.0
    %785 = vmatprep.subr.mxu0 0.0
    %786 = vmatpush1.msra.mxu0 0.0
    %787 = vmatprep.subr.mxu0 0.0
    %788 = vmatpush1.msra.mxu0 0.0
    %789 = vmatprep.subr.mxu0 0.0
    %790 = vmatpush1.msra.mxu0 0.0
    %791 = vmatprep.subr.mxu0 0.0
    %792 = vmatpush1.msra.mxu0 0.0
    %793 = vmatprep.subr.mxu0 0.0
    %794 = vmatpush1.msra.mxu0 0.0
    %795 = vmatprep.subr.mxu0 0.0
    %796 = vmatpush1.msra.mxu0 0.0
    %797 = vmatprep.subr.mxu0 0.0
    %798 = vmatpush1.msra.mxu0 0.0
    %799 = vmatprep.subr.mxu0 0.0
    %800 = vmatpush1.msra.mxu0 0.0
    %801 = vmatprep.subr.mxu0 0.0
    %802 = vmatpush1.msra.mxu0 0.0
    %803 = vmatprep.subr.mxu0 0.0
    %804 = vmatpush1.msra.mxu0 0.0
    %805 = vmatprep.subr.mxu0 0.0
    %806 = vmatpush1.msra.mxu0 0.0
    %807 = vmatprep.mubr.f32.mxu0 0.0
    %808 = vmatmul.mubr.f32.gmra.mrb[0].mxu0 %v729
    %v809 = vpop.f32.mrb[0].mxu0
    %v810 = vadd.f32 0.0, %v809
    %v811 = vpop.f32.mrb[0].mxu0
    %812 = vmatprep.mubr.f32.mxu0 0.0
    %813 = vmatmul.mubr.f32.gmra.mrb[0].mxu0 %v732
    %v814 = vpop.f32.mrb[0].mxu0
    %v815 = vadd.f32 0.0, %v814
    %v816 = vpop.f32.mrb[0].mxu0
    %817 = vmatprep.mubr.f32.mxu0 0.0
    %818 = vmatmul.mubr.f32.gmra.mrb[0].mxu0 %v735
    %v819 = vpop.f32.mrb[0].mxu0
    %v820 = vadd.f32 0.0, %v819
    %v821 = vpop.f32.mrb[0].mxu0
    %822 = vmatprep.mubr.f32.mxu0 0.0
    %823 = vmatmul.mubr.f32.gmra.mrb[0].mxu0 %v738
    %v824 = vpop.f32.mrb[0].mxu0
    %v825 = vadd.f32 0.0, %v824
    %v826 = vpop.f32.mrb[0].mxu0
    %827 = vmatprep.mubr.f32.mxu0 0.0
    %828 = vmatmul.mubr.f32.gmra.mrb[0].mxu0 %v741
    %v829 = vpop.f32.mrb[0].mxu0
    %v830 = vadd.f32 0.0, %v829
    %v831 = vpop.f32.mrb[0].mxu0
    %832 = vdwg.mxu0
    %v833 = vadd.f32 %v701, %v810
    %v834 = vadd.f32 %v702, %v815
    %v835 = vadd.f32 %v703, %v820
    %v836 = vadd.f32 %v704, %v825
    %v837 = vadd.f32 %v705, %v830
    %v838 = vmax.f32 %v833, 0.0
    %v839 = vmax.f32 %v834, 0.0
    %v840 = vmax.f32 %v835, 0.0
    %v841 = vmax.f32 %v836, 0.0
    %v842 = vmax.f32 %v837, 0.0
    %v843 = vld [vmem:[%s6] sm:$0x1]
    %v845 = vlaneseq
    %v846 = vshrl.u32 %v845, 7
    %v847 = vsub.s32 0, %v846
    %v848 = vrot.slane %v843, %v847
    %v851 = vrot.slane %v840, 1
    %vm853 = vcmask 1040384
    %v854 = vsel %vm853, %v838, %v851
    %v855 = vld [vmem:[%s5] sm:$0xf]
    %v856 = vld [vmem:[%s5 + $0x4] sm:$0xf]
    %v857 = vld [vmem:[%s5 + $0x8] sm:$0xf]
    %v858 = vld [vmem:[%s5 + $0xc] sm:$0xf]
    %v859 = vld [vmem:[%s5 + $0x10] sm:$0xf]
    %v860 = vld [vmem:[%s5 + $0x14] sm:$0xf]
    %v861 = vld [vmem:[%s5 + $0x18] sm:$0xf]
    %v862 = vld [vmem:[%s5 + $0x1c] sm:$0xf]
    %v863 = vld [vmem:[%s5 + $0x20] sm:$0xf]
    %v864 = vld [vmem:[%s5 + $0x24] sm:$0xf]
    %v865 = vld [vmem:[%s5 + $0x28] sm:$0xf]
    %v866 = vld [vmem:[%s5 + $0x2c] sm:$0xf]
    %v867 = vld [vmem:[%s5 + $0x30] sm:$0xf]
    %v868 = vld [vmem:[%s5 + $0x34] sm:$0xf]
    %v869 = vld [vmem:[%s5 + $0x38] sm:$0xf]
    %v870 = vld [vmem:[%s5 + $0x3c] sm:$0xf]
    %v871 = vunpack.c.l.bf16 %v855
    %v872 = vunpack.c.l.bf16 %v856
    %v873 = vunpack.c.l.bf16 %v857
    %v874 = vunpack.c.l.bf16 %v858
    %v875 = vunpack.c.l.bf16 %v859
    %v876 = vunpack.c.l.bf16 %v860
    %v877 = vunpack.c.l.bf16 %v861
    %v878 = vunpack.c.l.bf16 %v862
    %v879 = vunpack.c.l.bf16 %v863
    %v880 = vunpack.c.l.bf16 %v864
    %v881 = vunpack.c.l.bf16 %v865
    %v882 = vunpack.c.l.bf16 %v866
    %v883 = vunpack.c.l.bf16 %v867
    %v884 = vunpack.c.l.bf16 %v868
    %v885 = vunpack.c.l.bf16 %v869
    %v886 = vunpack.c.l.bf16 %v870
    %887 = vmatprep.subr.mxu0 0.0
    %888 = vmatpush1.msra.mxu0 %v871
    %889 = vmatprep.subr.mxu0 0.0
    %890 = vmatpush1.msra.mxu0 %v872
    %891 = vmatprep.subr.mxu0 0.0
    %892 = vmatpush1.msra.mxu0 %v873
    %893 = vmatprep.subr.mxu0 0.0
    %894 = vmatpush1.msra.mxu0 %v874
    %895 = vmatprep.subr.mxu0 0.0
    %896 = vmatpush1.msra.mxu0 %v875
    %897 = vmatprep.subr.mxu0 0.0
    %898 = vmatpush1.msra.mxu0 %v876
    %899 = vmatprep.subr.mxu0 0.0
    %900 = vmatpush1.msra.mxu0 %v877
    %901 = vmatprep.subr.mxu0 0.0
    %902 = vmatpush1.msra.mxu0 %v878
    %903 = vmatprep.subr.mxu0 0.0
    %904 = vmatpush1.msra.mxu0 %v879
    %905 = vmatprep.subr.mxu0 0.0
    %906 = vmatpush1.msra.mxu0 %v880
    %907 = vmatprep.subr.mxu0 0.0
    %908 = vmatpush1.msra.mxu0 %v881
    %909 = vmatprep.subr.mxu0 0.0
    %910 = vmatpush1.msra.mxu0 %v882
    %911 = vmatprep.subr.mxu0 0.0
    %912 = vmatpush1.msra.mxu0 %v883
    %913 = vmatprep.subr.mxu0 0.0
    %914 = vmatpush1.msra.mxu0 %v884
    %915 = vmatprep.subr.mxu0 0.0
    %916 = vmatpush1.msra.mxu0 %v885
    %917 = vmatprep.subr.mxu0 0.0
    %918 = vmatpush1.msra.mxu0 %v886
    %919 = vmatprep.subr.mxu0 0.0
    %920 = vmatpush1.msra.mxu0 0.0
    %921 = vmatprep.subr.mxu0 0.0
    %922 = vmatpush1.msra.mxu0 0.0
    %923 = vmatprep.subr.mxu0 0.0
    %924 = vmatpush1.msra.mxu0 0.0
    %925 = vmatprep.subr.mxu0 0.0
    %926 = vmatpush1.msra.mxu0 0.0
    %927 = vmatprep.subr.mxu0 0.0
    %928 = vmatpush1.msra.mxu0 0.0
    %929 = vmatprep.subr.mxu0 0.0
    %930 = vmatpush1.msra.mxu0 0.0
    %931 = vmatprep.subr.mxu0 0.0
    %932 = vmatpush1.msra.mxu0 0.0
    %933 = vmatprep.subr.mxu0 0.0
    %934 = vmatpush1.msra.mxu0 0.0
    %935 = vmatprep.subr.mxu0 0.0
    %936 = vmatpush1.msra.mxu0 0.0
    %937 = vmatprep.subr.mxu0 0.0
    %938 = vmatpush1.msra.mxu0 0.0
    %939 = vmatprep.subr.mxu0 0.0
    %940 = vmatpush1.msra.mxu0 0.0
    %941 = vmatprep.subr.mxu0 0.0
    %942 = vmatpush1.msra.mxu0 0.0
    %943 = vmatprep.subr.mxu0 0.0
    %944 = vmatpush1.msra.mxu0 0.0
    %945 = vmatprep.subr.mxu0 0.0
    %946 = vmatpush1.msra.mxu0 0.0
    %947 = vmatprep.subr.mxu0 0.0
    %948 = vmatpush1.msra.mxu0 0.0
    %949 = vmatprep.subr.mxu0 0.0
    %950 = vmatpush1.msra.mxu0 0.0
    %951 = vmatprep.mubr.f32.mxu0 0.0
    %952 = vmatmul.mubr.f32.gmra.mrb[0].mxu0 %v854
    %v953 = vpop.f32.mrb[0].mxu0
    %v954 = vadd.f32 0.0, %v953
    %v955 = vpop.f32.mrb[0].mxu0
    %956 = vdwg.mxu0
    %v957 = vadd.f32 %v848, %v954
    %v959 = vrot.slane %v838, 1
    %v961 = vrot.slane %v840, 2
    %v963 = vsel %vm853, %v959, %v961
    %s964 = scalar_lea.vmem %s5, 64
    %v965 = vld [vmem:[%s964] sm:$0xf]
    %v966 = vld [vmem:[%s964 + $0x4] sm:$0xf]
    %v967 = vld [vmem:[%s964 + $0x8] sm:$0xf]
    %v968 = vld [vmem:[%s964 + $0xc] sm:$0xf]
    %v969 = vld [vmem:[%s964 + $0x10] sm:$0xf]
    %v970 = vld [vmem:[%s964 + $0x14] sm:$0xf]
    %v971 = vld [vmem:[%s964 + $0x18] sm:$0xf]
    %v972 = vld [vmem:[%s964 + $0x1c] sm:$0xf]
    %v973 = vld [vmem:[%s964 + $0x20] sm:$0xf]
    %v974 = vld [vmem:[%s964 + $0x24] sm:$0xf]
    %v975 = vld [vmem:[%s964 + $0x28] sm:$0xf]
    %v976 = vld [vmem:[%s964 + $0x2c] sm:$0xf]
    %v977 = vld [vmem:[%s964 + $0x30] sm:$0xf]
    %v978 = vld [vmem:[%s964 + $0x34] sm:$0xf]
    %v979 = vld [vmem:[%s964 + $0x38] sm:$0xf]
    %v980 = vld [vmem:[%s964 + $0x3c] sm:$0xf]
    %v981 = vunpack.c.l.bf16 %v965
    %v982 = vunpack.c.l.bf16 %v966
    %v983 = vunpack.c.l.bf16 %v967
    %v984 = vunpack.c.l.bf16 %v968
    %v985 = vunpack.c.l.bf16 %v969
    %v986 = vunpack.c.l.bf16 %v970
    %v987 = vunpack.c.l.bf16 %v971
    %v988 = vunpack.c.l.bf16 %v972
    %v989 = vunpack.c.l.bf16 %v973
    %v990 = vunpack.c.l.bf16 %v974
    %v991 = vunpack.c.l.bf16 %v975
    %v992 = vunpack.c.l.bf16 %v976
    %v993 = vunpack.c.l.bf16 %v977
    %v994 = vunpack.c.l.bf16 %v978
    %v995 = vunpack.c.l.bf16 %v979
    %v996 = vunpack.c.l.bf16 %v980
    %997 = vmatprep.subr.mxu0 0.0
    %998 = vmatpush1.msra.mxu0 %v981
    %999 = vmatprep.subr.mxu0 0.0
    %1000 = vmatpush1.msra.mxu0 %v982
    %1001 = vmatprep.subr.mxu0 0.0
    %1002 = vmatpush1.msra.mxu0 %v983
    %1003 = vmatprep.subr.mxu0 0.0
    %1004 = vmatpush1.msra.mxu0 %v984
    %1005 = vmatprep.subr.mxu0 0.0
    %1006 = vmatpush1.msra.mxu0 %v985
    %1007 = vmatprep.subr.mxu0 0.0
    %1008 = vmatpush1.msra.mxu0 %v986
    %1009 = vmatprep.subr.mxu0 0.0
    %1010 = vmatpush1.msra.mxu0 %v987
    %1011 = vmatprep.subr.mxu0 0.0
    %1012 = vmatpush1.msra.mxu0 %v988
    %1013 = vmatprep.subr.mxu0 0.0
    %1014 = vmatpush1.msra.mxu0 %v989
    %1015 = vmatprep.subr.mxu0 0.0
    %1016 = vmatpush1.msra.mxu0 %v990
    %1017 = vmatprep.subr.mxu0 0.0
    %1018 = vmatpush1.msra.mxu0 %v991
    %1019 = vmatprep.subr.mxu0 0.0
    %1020 = vmatpush1.msra.mxu0 %v992
    %1021 = vmatprep.subr.mxu0 0.0
    %1022 = vmatpush1.msra.mxu0 %v993
    %1023 = vmatprep.subr.mxu0 0.0
    %1024 = vmatpush1.msra.mxu0 %v994
    %1025 = vmatprep.subr.mxu0 0.0
    %1026 = vmatpush1.msra.mxu0 %v995
    %1027 = vmatprep.subr.mxu0 0.0
    %1028 = vmatpush1.msra.mxu0 %v996
    %1029 = vmatprep.subr.mxu0 0.0
    %1030 = vmatpush1.msra.mxu0 0.0
    %1031 = vmatprep.subr.mxu0 0.0
    %1032 = vmatpush1.msra.mxu0 0.0
    %1033 = vmatprep.subr.mxu0 0.0
    %1034 = vmatpush1.msra.mxu0 0.0
    %1035 = vmatprep.subr.mxu0 0.0
    %1036 = vmatpush1.msra.mxu0 0.0
    %1037 = vmatprep.subr.mxu0 0.0
    %1038 = vmatpush1.msra.mxu0 0.0
    %1039 = vmatprep.subr.mxu0 0.0
    %1040 = vmatpush1.msra.mxu0 0.0
    %1041 = vmatprep.subr.mxu0 0.0
    %1042 = vmatpush1.msra.mxu0 0.0
    %1043 = vmatprep.subr.mxu0 0.0
    %1044 = vmatpush1.msra.mxu0 0.0
    %1045 = vmatprep.subr.mxu0 0.0
    %1046 = vmatpush1.msra.mxu0 0.0
    %1047 = vmatprep.subr.mxu0 0.0
    %1048 = vmatpush1.msra.mxu0 0.0
    %1049 = vmatprep.subr.mxu0 0.0
    %1050 = vmatpush1.msra.mxu0 0.0
    %1051 = vmatprep.subr.mxu0 0.0
    %1052 = vmatpush1.msra.mxu0 0.0
    %1053 = vmatprep.subr.mxu0 0.0
    %1054 = vmatpush1.msra.mxu0 0.0
    %1055 = vmatprep.subr.mxu0 0.0
    %1056 = vmatpush1.msra.mxu0 0.0
    %1057 = vmatprep.subr.mxu0 0.0
    %1058 = vmatpush1.msra.mxu0 0.0
    %1059 = vmatprep.subr.mxu0 0.0
    %1060 = vmatpush1.msra.mxu0 0.0
    %1061 = vmatprep.mubr.f32.mxu0 0.0
    %1062 = vmatmul.mubr.f32.gmra.mrb[0].mxu0 %v963
    %v1063 = vpop.f32.mrb[0].mxu0
    %v1064 = vadd.f32 0.0, %v1063
    %v1065 = vpop.f32.mrb[0].mxu0
    %1066 = vdwg.mxu0
    %v1067 = vadd.f32 %v957, %v1064
    %v1068 = vrot.slane %v838, 2
    %v1070 = vrot.slane %v840, 3
    %v1072 = vsel %vm853, %v1068, %v1070
    %s1073 = scalar_lea.vmem %s5, 128
    %v1074 = vld [vmem:[%s1073] sm:$0xf]
    %v1075 = vld [vmem:[%s1073 + $0x4] sm:$0xf]
    %v1076 = vld [vmem:[%s1073 + $0x8] sm:$0xf]
    %v1077 = vld [vmem:[%s1073 + $0xc] sm:$0xf]
    %v1078 = vld [vmem:[%s1073 + $0x10] sm:$0xf]
    %v1079 = vld [vmem:[%s1073 + $0x14] sm:$0xf]
    %v1080 = vld [vmem:[%s1073 + $0x18] sm:$0xf]
    %v1081 = vld [vmem:[%s1073 + $0x1c] sm:$0xf]
    %v1082 = vld [vmem:[%s1073 + $0x20] sm:$0xf]
    %v1083 = vld [vmem:[%s1073 + $0x24] sm:$0xf]
    %v1084 = vld [vmem:[%s1073 + $0x28] sm:$0xf]
    %v1085 = vld [vmem:[%s1073 + $0x2c] sm:$0xf]
    %v1086 = vld [vmem:[%s1073 + $0x30] sm:$0xf]
    %v1087 = vld [vmem:[%s1073 + $0x34] sm:$0xf]
    %v1088 = vld [vmem:[%s1073 + $0x38] sm:$0xf]
    %v1089 = vld [vmem:[%s1073 + $0x3c] sm:$0xf]
    %v1090 = vunpack.c.l.bf16 %v1074
    %v1091 = vunpack.c.l.bf16 %v1075
    %v1092 = vunpack.c.l.bf16 %v1076
    %v1093 = vunpack.c.l.bf16 %v1077
    %v1094 = vunpack.c.l.bf16 %v1078
    %v1095 = vunpack.c.l.bf16 %v1079
    %v1096 = vunpack.c.l.bf16 %v1080
    %v1097 = vunpack.c.l.bf16 %v1081
    %v1098 = vunpack.c.l.bf16 %v1082
    %v1099 = vunpack.c.l.bf16 %v1083
    %v1100 = vunpack.c.l.bf16 %v1084
    %v1101 = vunpack.c.l.bf16 %v1085
    %v1102 = vunpack.c.l.bf16 %v1086
    %v1103 = vunpack.c.l.bf16 %v1087
    %v1104 = vunpack.c.l.bf16 %v1088
    %v1105 = vunpack.c.l.bf16 %v1089
    %1106 = vmatprep.subr.mxu0 0.0
    %1107 = vmatpush1.msra.mxu0 %v1090
    %1108 = vmatprep.subr.mxu0 0.0
    %1109 = vmatpush1.msra.mxu0 %v1091
    %1110 = vmatprep.subr.mxu0 0.0
    %1111 = vmatpush1.msra.mxu0 %v1092
    %1112 = vmatprep.subr.mxu0 0.0
    %1113 = vmatpush1.msra.mxu0 %v1093
    %1114 = vmatprep.subr.mxu0 0.0
    %1115 = vmatpush1.msra.mxu0 %v1094
    %1116 = vmatprep.subr.mxu0 0.0
    %1117 = vmatpush1.msra.mxu0 %v1095
    %1118 = vmatprep.subr.mxu0 0.0
    %1119 = vmatpush1.msra.mxu0 %v1096
    %1120 = vmatprep.subr.mxu0 0.0
    %1121 = vmatpush1.msra.mxu0 %v1097
    %1122 = vmatprep.subr.mxu0 0.0
    %1123 = vmatpush1.msra.mxu0 %v1098
    %1124 = vmatprep.subr.mxu0 0.0
    %1125 = vmatpush1.msra.mxu0 %v1099
    %1126 = vmatprep.subr.mxu0 0.0
    %1127 = vmatpush1.msra.mxu0 %v1100
    %1128 = vmatprep.subr.mxu0 0.0
    %1129 = vmatpush1.msra.mxu0 %v1101
    %1130 = vmatprep.subr.mxu0 0.0
    %1131 = vmatpush1.msra.mxu0 %v1102
    %1132 = vmatprep.subr.mxu0 0.0
    %1133 = vmatpush1.msra.mxu0 %v1103
    %1134 = vmatprep.subr.mxu0 0.0
    %1135 = vmatpush1.msra.mxu0 %v1104
    %1136 = vmatprep.subr.mxu0 0.0
    %1137 = vmatpush1.msra.mxu0 %v1105
    %1138 = vmatprep.subr.mxu0 0.0
    %1139 = vmatpush1.msra.mxu0 0.0
    %1140 = vmatprep.subr.mxu0 0.0
    %1141 = vmatpush1.msra.mxu0 0.0
    %1142 = vmatprep.subr.mxu0 0.0
    %1143 = vmatpush1.msra.mxu0 0.0
    %1144 = vmatprep.subr.mxu0 0.0
    %1145 = vmatpush1.msra.mxu0 0.0
    %1146 = vmatprep.subr.mxu0 0.0
    %1147 = vmatpush1.msra.mxu0 0.0
    %1148 = vmatprep.subr.mxu0 0.0
    %1149 = vmatpush1.msra.mxu0 0.0
    %1150 = vmatprep.subr.mxu0 0.0
    %1151 = vmatpush1.msra.mxu0 0.0
    %1152 = vmatprep.subr.mxu0 0.0
    %1153 = vmatpush1.msra.mxu0 0.0
    %1154 = vmatprep.subr.mxu0 0.0
    %1155 = vmatpush1.msra.mxu0 0.0
    %1156 = vmatprep.subr.mxu0 0.0
    %1157 = vmatpush1.msra.mxu0 0.0
    %1158 = vmatprep.subr.mxu0 0.0
    %1159 = vmatpush1.msra.mxu0 0.0
    %1160 = vmatprep.subr.mxu0 0.0
    %1161 = vmatpush1.msra.mxu0 0.0
    %1162 = vmatprep.subr.mxu0 0.0
    %1163 = vmatpush1.msra.mxu0 0.0
    %1164 = vmatprep.subr.mxu0 0.0
    %1165 = vmatpush1.msra.mxu0 0.0
    %1166 = vmatprep.subr.mxu0 0.0
    %1167 = vmatpush1.msra.mxu0 0.0
    %1168 = vmatprep.subr.mxu0 0.0
    %1169 = vmatpush1.msra.mxu0 0.0
    %1170 = vmatprep.mubr.f32.mxu0 0.0
    %1171 = vmatmul.mubr.f32.gmra.mrb[0].mxu0 %v1072
    %v1172 = vpop.f32.mrb[0].mxu0
    %v1173 = vadd.f32 0.0, %v1172
    %v1174 = vpop.f32.mrb[0].mxu0
    %1175 = vdwg.mxu0
    %v1176 = vadd.f32 %v1067, %v1173
    %v1177 = vrot.slane %v838, 3
    %v1179 = vrot.slane %v840, 4
    %v1181 = vsel %vm853, %v1177, %v1179
    %s1182 = scalar_lea.vmem %s5, 192
    %v1183 = vld [vmem:[%s1182] sm:$0xf]
    %v1184 = vld [vmem:[%s1182 + $0x4] sm:$0xf]
    %v1185 = vld [vmem:[%s1182 + $0x8] sm:$0xf]
    %v1186 = vld [vmem:[%s1182 + $0xc] sm:$0xf]
    %v1187 = vld [vmem:[%s1182 + $0x10] sm:$0xf]
    %v1188 = vld [vmem:[%s1182 + $0x14] sm:$0xf]
    %v1189 = vld [vmem:[%s1182 + $0x18] sm:$0xf]
    %v1190 = vld [vmem:[%s1182 + $0x1c] sm:$0xf]
    %v1191 = vld [vmem:[%s1182 + $0x20] sm:$0xf]
    %v1192 = vld [vmem:[%s1182 + $0x24] sm:$0xf]
    %v1193 = vld [vmem:[%s1182 + $0x28] sm:$0xf]
    %v1194 = vld [vmem:[%s1182 + $0x2c] sm:$0xf]
    %v1195 = vld [vmem:[%s1182 + $0x30] sm:$0xf]
    %v1196 = vld [vmem:[%s1182 + $0x34] sm:$0xf]
    %v1197 = vld [vmem:[%s1182 + $0x38] sm:$0xf]
    %v1198 = vld [vmem:[%s1182 + $0x3c] sm:$0xf]
    %v1199 = vunpack.c.l.bf16 %v1183
    %v1200 = vunpack.c.l.bf16 %v1184
    %v1201 = vunpack.c.l.bf16 %v1185
    %v1202 = vunpack.c.l.bf16 %v1186
    %v1203 = vunpack.c.l.bf16 %v1187
    %v1204 = vunpack.c.l.bf16 %v1188
    %v1205 = vunpack.c.l.bf16 %v1189
    %v1206 = vunpack.c.l.bf16 %v1190
    %v1207 = vunpack.c.l.bf16 %v1191
    %v1208 = vunpack.c.l.bf16 %v1192
    %v1209 = vunpack.c.l.bf16 %v1193
    %v1210 = vunpack.c.l.bf16 %v1194
    %v1211 = vunpack.c.l.bf16 %v1195
    %v1212 = vunpack.c.l.bf16 %v1196
    %v1213 = vunpack.c.l.bf16 %v1197
    %v1214 = vunpack.c.l.bf16 %v1198
    %1215 = vmatprep.subr.mxu0 0.0
    %1216 = vmatpush1.msra.mxu0 %v1199
    %1217 = vmatprep.subr.mxu0 0.0
    %1218 = vmatpush1.msra.mxu0 %v1200
    %1219 = vmatprep.subr.mxu0 0.0
    %1220 = vmatpush1.msra.mxu0 %v1201
    %1221 = vmatprep.subr.mxu0 0.0
    %1222 = vmatpush1.msra.mxu0 %v1202
    %1223 = vmatprep.subr.mxu0 0.0
    %1224 = vmatpush1.msra.mxu0 %v1203
    %1225 = vmatprep.subr.mxu0 0.0
    %1226 = vmatpush1.msra.mxu0 %v1204
    %1227 = vmatprep.subr.mxu0 0.0
    %1228 = vmatpush1.msra.mxu0 %v1205
    %1229 = vmatprep.subr.mxu0 0.0
    %1230 = vmatpush1.msra.mxu0 %v1206
    %1231 = vmatprep.subr.mxu0 0.0
    %1232 = vmatpush1.msra.mxu0 %v1207
    %1233 = vmatprep.subr.mxu0 0.0
    %1234 = vmatpush1.msra.mxu0 %v1208
    %1235 = vmatprep.subr.mxu0 0.0
    %1236 = vmatpush1.msra.mxu0 %v1209
    %1237 = vmatprep.subr.mxu0 0.0
    %1238 = vmatpush1.msra.mxu0 %v1210
    %1239 = vmatprep.subr.mxu0 0.0
    %1240 = vmatpush1.msra.mxu0 %v1211
    %1241 = vmatprep.subr.mxu0 0.0
    %1242 = vmatpush1.msra.mxu0 %v1212
    %1243 = vmatprep.subr.mxu0 0.0
    %1244 = vmatpush1.msra.mxu0 %v1213
    %1245 = vmatprep.subr.mxu0 0.0
    %1246 = vmatpush1.msra.mxu0 %v1214
    %1247 = vmatprep.subr.mxu0 0.0
    %1248 = vmatpush1.msra.mxu0 0.0
    %1249 = vmatprep.subr.mxu0 0.0
    %1250 = vmatpush1.msra.mxu0 0.0
    %1251 = vmatprep.subr.mxu0 0.0
    %1252 = vmatpush1.msra.mxu0 0.0
    %1253 = vmatprep.subr.mxu0 0.0
    %1254 = vmatpush1.msra.mxu0 0.0
    %1255 = vmatprep.subr.mxu0 0.0
    %1256 = vmatpush1.msra.mxu0 0.0
    %1257 = vmatprep.subr.mxu0 0.0
    %1258 = vmatpush1.msra.mxu0 0.0
    %1259 = vmatprep.subr.mxu0 0.0
    %1260 = vmatpush1.msra.mxu0 0.0
    %1261 = vmatprep.subr.mxu0 0.0
    %1262 = vmatpush1.msra.mxu0 0.0
    %1263 = vmatprep.subr.mxu0 0.0
    %1264 = vmatpush1.msra.mxu0 0.0
    %1265 = vmatprep.subr.mxu0 0.0
    %1266 = vmatpush1.msra.mxu0 0.0
    %1267 = vmatprep.subr.mxu0 0.0
    %1268 = vmatpush1.msra.mxu0 0.0
    %1269 = vmatprep.subr.mxu0 0.0
    %1270 = vmatpush1.msra.mxu0 0.0
    %1271 = vmatprep.subr.mxu0 0.0
    %1272 = vmatpush1.msra.mxu0 0.0
    %1273 = vmatprep.subr.mxu0 0.0
    %1274 = vmatpush1.msra.mxu0 0.0
    %1275 = vmatprep.subr.mxu0 0.0
    %1276 = vmatpush1.msra.mxu0 0.0
    %1277 = vmatprep.subr.mxu0 0.0
    %1278 = vmatpush1.msra.mxu0 0.0
    %1279 = vmatprep.mubr.f32.mxu0 0.0
    %1280 = vmatmul.mubr.f32.gmra.mrb[0].mxu0 %v1181
    %v1281 = vpop.f32.mrb[0].mxu0
    %v1282 = vadd.f32 0.0, %v1281
    %v1283 = vpop.f32.mrb[0].mxu0
    %1284 = vdwg.mxu0
    %v1285 = vadd.f32 %v1176, %v1282
    %v1286 = vrot.slane %v838, 4
    %v1288 = vrot.slane %v840, 5
    %v1290 = vsel %vm853, %v1286, %v1288
    %s1291 = scalar_lea.vmem %s5, 256
    %v1292 = vld [vmem:[%s1291] sm:$0xf]
    %v1293 = vld [vmem:[%s1291 + $0x4] sm:$0xf]
    %v1294 = vld [vmem:[%s1291 + $0x8] sm:$0xf]
    %v1295 = vld [vmem:[%s1291 + $0xc] sm:$0xf]
    %v1296 = vld [vmem:[%s1291 + $0x10] sm:$0xf]
    %v1297 = vld [vmem:[%s1291 + $0x14] sm:$0xf]
    %v1298 = vld [vmem:[%s1291 + $0x18] sm:$0xf]
    %v1299 = vld [vmem:[%s1291 + $0x1c] sm:$0xf]
    %v1300 = vld [vmem:[%s1291 + $0x20] sm:$0xf]
    %v1301 = vld [vmem:[%s1291 + $0x24] sm:$0xf]
    %v1302 = vld [vmem:[%s1291 + $0x28] sm:$0xf]
    %v1303 = vld [vmem:[%s1291 + $0x2c] sm:$0xf]
    %v1304 = vld [vmem:[%s1291 + $0x30] sm:$0xf]
    %v1305 = vld [vmem:[%s1291 + $0x34] sm:$0xf]
    %v1306 = vld [vmem:[%s1291 + $0x38] sm:$0xf]
    %v1307 = vld [vmem:[%s1291 + $0x3c] sm:$0xf]
    %v1308 = vunpack.c.l.bf16 %v1292
    %v1309 = vunpack.c.l.bf16 %v1293
    %v1310 = vunpack.c.l.bf16 %v1294
    %v1311 = vunpack.c.l.bf16 %v1295
    %v1312 = vunpack.c.l.bf16 %v1296
    %v1313 = vunpack.c.l.bf16 %v1297
    %v1314 = vunpack.c.l.bf16 %v1298
    %v1315 = vunpack.c.l.bf16 %v1299
    %v1316 = vunpack.c.l.bf16 %v1300
    %v1317 = vunpack.c.l.bf16 %v1301
    %v1318 = vunpack.c.l.bf16 %v1302
    %v1319 = vunpack.c.l.bf16 %v1303
    %v1320 = vunpack.c.l.bf16 %v1304
    %v1321 = vunpack.c.l.bf16 %v1305
    %v1322 = vunpack.c.l.bf16 %v1306
    %v1323 = vunpack.c.l.bf16 %v1307
    %1324 = vmatprep.subr.mxu0 0.0
    %1325 = vmatpush1.msra.mxu0 %v1308
    %1326 = vmatprep.subr.mxu0 0.0
    %1327 = vmatpush1.msra.mxu0 %v1309
    %1328 = vmatprep.subr.mxu0 0.0
    %1329 = vmatpush1.msra.mxu0 %v1310
    %1330 = vmatprep.subr.mxu0 0.0
    %1331 = vmatpush1.msra.mxu0 %v1311
    %1332 = vmatprep.subr.mxu0 0.0
    %1333 = vmatpush1.msra.mxu0 %v1312
    %1334 = vmatprep.subr.mxu0 0.0
    %1335 = vmatpush1.msra.mxu0 %v1313
    %1336 = vmatprep.subr.mxu0 0.0
    %1337 = vmatpush1.msra.mxu0 %v1314
    %1338 = vmatprep.subr.mxu0 0.0
    %1339 = vmatpush1.msra.mxu0 %v1315
    %1340 = vmatprep.subr.mxu0 0.0
    %1341 = vmatpush1.msra.mxu0 %v1316
    %1342 = vmatprep.subr.mxu0 0.0
    %1343 = vmatpush1.msra.mxu0 %v1317
    %1344 = vmatprep.subr.mxu0 0.0
    %1345 = vmatpush1.msra.mxu0 %v1318
    %1346 = vmatprep.subr.mxu0 0.0
    %1347 = vmatpush1.msra.mxu0 %v1319
    %1348 = vmatprep.subr.mxu0 0.0
    %1349 = vmatpush1.msra.mxu0 %v1320
    %1350 = vmatprep.subr.mxu0 0.0
    %1351 = vmatpush1.msra.mxu0 %v1321
    %1352 = vmatprep.subr.mxu0 0.0
    %1353 = vmatpush1.msra.mxu0 %v1322
    %1354 = vmatprep.subr.mxu0 0.0
    %1355 = vmatpush1.msra.mxu0 %v1323
    %1356 = vmatprep.subr.mxu0 0.0
    %1357 = vmatpush1.msra.mxu0 0.0
    %1358 = vmatprep.subr.mxu0 0.0
    %1359 = vmatpush1.msra.mxu0 0.0
    %1360 = vmatprep.subr.mxu0 0.0
    %1361 = vmatpush1.msra.mxu0 0.0
    %1362 = vmatprep.subr.mxu0 0.0
    %1363 = vmatpush1.msra.mxu0 0.0
    %1364 = vmatprep.subr.mxu0 0.0
    %1365 = vmatpush1.msra.mxu0 0.0
    %1366 = vmatprep.subr.mxu0 0.0
    %1367 = vmatpush1.msra.mxu0 0.0
    %1368 = vmatprep.subr.mxu0 0.0
    %1369 = vmatpush1.msra.mxu0 0.0
    %1370 = vmatprep.subr.mxu0 0.0
    %1371 = vmatpush1.msra.mxu0 0.0
    %1372 = vmatprep.subr.mxu0 0.0
    %1373 = vmatpush1.msra.mxu0 0.0
    %1374 = vmatprep.subr.mxu0 0.0
    %1375 = vmatpush1.msra.mxu0 0.0
    %1376 = vmatprep.subr.mxu0 0.0
    %1377 = vmatpush1.msra.mxu0 0.0
    %1378 = vmatprep.subr.mxu0 0.0
    %1379 = vmatpush1.msra.mxu0 0.0
    %1380 = vmatprep.subr.mxu0 0.0
    %1381 = vmatpush1.msra.mxu0 0.0
    %1382 = vmatprep.subr.mxu0 0.0
    %1383 = vmatpush1.msra.mxu0 0.0
    %1384 = vmatprep.subr.mxu0 0.0
    %1385 = vmatpush1.msra.mxu0 0.0
    %1386 = vmatprep.subr.mxu0 0.0
    %1387 = vmatpush1.msra.mxu0 0.0
    %1388 = vmatprep.mubr.f32.mxu0 0.0
    %1389 = vmatmul.mubr.f32.gmra.mrb[0].mxu0 %v1290
    %v1390 = vpop.f32.mrb[0].mxu0
    %v1391 = vadd.f32 0.0, %v1390
    %v1392 = vpop.f32.mrb[0].mxu0
    %1393 = vdwg.mxu0
    %v1394 = vadd.f32 %v1285, %v1391
    %v1395 = vrot.slane %v838, 5
    %v1397 = vrot.slane %v840, 6
    %v1399 = vsel %vm853, %v1395, %v1397
    %s1400 = scalar_lea.vmem %s5, 320
    %v1401 = vld [vmem:[%s1400] sm:$0xf]
    %v1402 = vld [vmem:[%s1400 + $0x4] sm:$0xf]
    %v1403 = vld [vmem:[%s1400 + $0x8] sm:$0xf]
    %v1404 = vld [vmem:[%s1400 + $0xc] sm:$0xf]
    %v1405 = vld [vmem:[%s1400 + $0x10] sm:$0xf]
    %v1406 = vld [vmem:[%s1400 + $0x14] sm:$0xf]
    %v1407 = vld [vmem:[%s1400 + $0x18] sm:$0xf]
    %v1408 = vld [vmem:[%s1400 + $0x1c] sm:$0xf]
    %v1409 = vld [vmem:[%s1400 + $0x20] sm:$0xf]
    %v1410 = vld [vmem:[%s1400 + $0x24] sm:$0xf]
    %v1411 = vld [vmem:[%s1400 + $0x28] sm:$0xf]
    %v1412 = vld [vmem:[%s1400 + $0x2c] sm:$0xf]
    %v1413 = vld [vmem:[%s1400 + $0x30] sm:$0xf]
    %v1414 = vld [vmem:[%s1400 + $0x34] sm:$0xf]
    %v1415 = vld [vmem:[%s1400 + $0x38] sm:$0xf]
    %v1416 = vld [vmem:[%s1400 + $0x3c] sm:$0xf]
    %v1417 = vunpack.c.l.bf16 %v1401
    %v1418 = vunpack.c.l.bf16 %v1402
    %v1419 = vunpack.c.l.bf16 %v1403
    %v1420 = vunpack.c.l.bf16 %v1404
    %v1421 = vunpack.c.l.bf16 %v1405
    %v1422 = vunpack.c.l.bf16 %v1406
    %v1423 = vunpack.c.l.bf16 %v1407
    %v1424 = vunpack.c.l.bf16 %v1408
    %v1425 = vunpack.c.l.bf16 %v1409
    %v1426 = vunpack.c.l.bf16 %v1410
    %v1427 = vunpack.c.l.bf16 %v1411
    %v1428 = vunpack.c.l.bf16 %v1412
    %v1429 = vunpack.c.l.bf16 %v1413
    %v1430 = vunpack.c.l.bf16 %v1414
    %v1431 = vunpack.c.l.bf16 %v1415
    %v1432 = vunpack.c.l.bf16 %v1416
    %1433 = vmatprep.subr.mxu0 0.0
    %1434 = vmatpush1.msra.mxu0 %v1417
    %1435 = vmatprep.subr.mxu0 0.0
    %1436 = vmatpush1.msra.mxu0 %v1418
    %1437 = vmatprep.subr.mxu0 0.0
    %1438 = vmatpush1.msra.mxu0 %v1419
    %1439 = vmatprep.subr.mxu0 0.0
    %1440 = vmatpush1.msra.mxu0 %v1420
    %1441 = vmatprep.subr.mxu0 0.0
    %1442 = vmatpush1.msra.mxu0 %v1421
    %1443 = vmatprep.subr.mxu0 0.0
    %1444 = vmatpush1.msra.mxu0 %v1422
    %1445 = vmatprep.subr.mxu0 0.0
    %1446 = vmatpush1.msra.mxu0 %v1423
    %1447 = vmatprep.subr.mxu0 0.0
    %1448 = vmatpush1.msra.mxu0 %v1424
    %1449 = vmatprep.subr.mxu0 0.0
    %1450 = vmatpush1.msra.mxu0 %v1425
    %1451 = vmatprep.subr.mxu0 0.0
    %1452 = vmatpush1.msra.mxu0 %v1426
    %1453 = vmatprep.subr.mxu0 0.0
    %1454 = vmatpush1.msra.mxu0 %v1427
    %1455 = vmatprep.subr.mxu0 0.0
    %1456 = vmatpush1.msra.mxu0 %v1428
    %1457 = vmatprep.subr.mxu0 0.0
    %1458 = vmatpush1.msra.mxu0 %v1429
    %1459 = vmatprep.subr.mxu0 0.0
    %1460 = vmatpush1.msra.mxu0 %v1430
    %1461 = vmatprep.subr.mxu0 0.0
    %1462 = vmatpush1.msra.mxu0 %v1431
    %1463 = vmatprep.subr.mxu0 0.0
    %1464 = vmatpush1.msra.mxu0 %v1432
    %1465 = vmatprep.subr.mxu0 0.0
    %1466 = vmatpush1.msra.mxu0 0.0
    %1467 = vmatprep.subr.mxu0 0.0
    %1468 = vmatpush1.msra.mxu0 0.0
    %1469 = vmatprep.subr.mxu0 0.0
    %1470 = vmatpush1.msra.mxu0 0.0
    %1471 = vmatprep.subr.mxu0 0.0
    %1472 = vmatpush1.msra.mxu0 0.0
    %1473 = vmatprep.subr.mxu0 0.0
    %1474 = vmatpush1.msra.mxu0 0.0
    %1475 = vmatprep.subr.mxu0 0.0
    %1476 = vmatpush1.msra.mxu0 0.0
    %1477 = vmatprep.subr.mxu0 0.0
    %1478 = vmatpush1.msra.mxu0 0.0
    %1479 = vmatprep.subr.mxu0 0.0
    %1480 = vmatpush1.msra.mxu0 0.0
    %1481 = vmatprep.subr.mxu0 0.0
    %1482 = vmatpush1.msra.mxu0 0.0
    %1483 = vmatprep.subr.mxu0 0.0
    %1484 = vmatpush1.msra.mxu0 0.0
    %1485 = vmatprep.subr.mxu0 0.0
    %1486 = vmatpush1.msra.mxu0 0.0
    %1487 = vmatprep.subr.mxu0 0.0
    %1488 = vmatpush1.msra.mxu0 0.0
    %1489 = vmatprep.subr.mxu0 0.0
    %1490 = vmatpush1.msra.mxu0 0.0
    %1491 = vmatprep.subr.mxu0 0.0
    %1492 = vmatpush1.msra.mxu0 0.0
    %1493 = vmatprep.subr.mxu0 0.0
    %1494 = vmatpush1.msra.mxu0 0.0
    %1495 = vmatprep.subr.mxu0 0.0
    %1496 = vmatpush1.msra.mxu0 0.0
    %1497 = vmatprep.mubr.f32.mxu0 0.0
    %1498 = vmatmul.mubr.f32.gmra.mrb[0].mxu0 %v1399
    %v1499 = vpop.f32.mrb[0].mxu0
    %v1500 = vadd.f32 0.0, %v1499
    %v1501 = vpop.f32.mrb[0].mxu0
    %1502 = vdwg.mxu0
    %v1503 = vadd.f32 %v1394, %v1500
    %v1504 = vrot.slane %v838, 6
    %v1507 = vrot.slane %v841, 7
    %v1509 = vsel %vm853, %v1504, %v1507
    %s1510 = scalar_lea.vmem %s5, 384
    %v1511 = vld [vmem:[%s1510] sm:$0xf]
    %v1512 = vld [vmem:[%s1510 + $0x4] sm:$0xf]
    %v1513 = vld [vmem:[%s1510 + $0x8] sm:$0xf]
    %v1514 = vld [vmem:[%s1510 + $0xc] sm:$0xf]
    %v1515 = vld [vmem:[%s1510 + $0x10] sm:$0xf]
    %v1516 = vld [vmem:[%s1510 + $0x14] sm:$0xf]
    %v1517 = vld [vmem:[%s1510 + $0x18] sm:$0xf]
    %v1518 = vld [vmem:[%s1510 + $0x1c] sm:$0xf]
    %v1519 = vld [vmem:[%s1510 + $0x20] sm:$0xf]
    %v1520 = vld [vmem:[%s1510 + $0x24] sm:$0xf]
    %v1521 = vld [vmem:[%s1510 + $0x28] sm:$0xf]
    %v1522 = vld [vmem:[%s1510 + $0x2c] sm:$0xf]
    %v1523 = vld [vmem:[%s1510 + $0x30] sm:$0xf]
    %v1524 = vld [vmem:[%s1510 + $0x34] sm:$0xf]
    %v1525 = vld [vmem:[%s1510 + $0x38] sm:$0xf]
    %v1526 = vld [vmem:[%s1510 + $0x3c] sm:$0xf]
    %v1527 = vunpack.c.l.bf16 %v1511
    %v1528 = vunpack.c.l.bf16 %v1512
    %v1529 = vunpack.c.l.bf16 %v1513
    %v1530 = vunpack.c.l.bf16 %v1514
    %v1531 = vunpack.c.l.bf16 %v1515
    %v1532 = vunpack.c.l.bf16 %v1516
    %v1533 = vunpack.c.l.bf16 %v1517
    %v1534 = vunpack.c.l.bf16 %v1518
    %v1535 = vunpack.c.l.bf16 %v1519
    %v1536 = vunpack.c.l.bf16 %v1520
    %v1537 = vunpack.c.l.bf16 %v1521
    %v1538 = vunpack.c.l.bf16 %v1522
    %v1539 = vunpack.c.l.bf16 %v1523
    %v1540 = vunpack.c.l.bf16 %v1524
    %v1541 = vunpack.c.l.bf16 %v1525
    %v1542 = vunpack.c.l.bf16 %v1526
    %1543 = vmatprep.subr.mxu0 0.0
    %1544 = vmatpush1.msra.mxu0 %v1527
    %1545 = vmatprep.subr.mxu0 0.0
    %1546 = vmatpush1.msra.mxu0 %v1528
    %1547 = vmatprep.subr.mxu0 0.0
    %1548 = vmatpush1.msra.mxu0 %v1529
    %1549 = vmatprep.subr.mxu0 0.0
    %1550 = vmatpush1.msra.mxu0 %v1530
    %1551 = vmatprep.subr.mxu0 0.0
    %1552 = vmatpush1.msra.mxu0 %v1531
    %1553 = vmatprep.subr.mxu0 0.0
    %1554 = vmatpush1.msra.mxu0 %v1532
    %1555 = vmatprep.subr.mxu0 0.0
    %1556 = vmatpush1.msra.mxu0 %v1533
    %1557 = vmatprep.subr.mxu0 0.0
    %1558 = vmatpush1.msra.mxu0 %v1534
    %1559 = vmatprep.subr.mxu0 0.0
    %1560 = vmatpush1.msra.mxu0 %v1535
    %1561 = vmatprep.subr.mxu0 0.0
    %1562 = vmatpush1.msra.mxu0 %v1536
    %1563 = vmatprep.subr.mxu0 0.0
    %1564 = vmatpush1.msra.mxu0 %v1537
    %1565 = vmatprep.subr.mxu0 0.0
    %1566 = vmatpush1.msra.mxu0 %v1538
    %1567 = vmatprep.subr.mxu0 0.0
    %1568 = vmatpush1.msra.mxu0 %v1539
    %1569 = vmatprep.subr.mxu0 0.0
    %1570 = vmatpush1.msra.mxu0 %v1540
    %1571 = vmatprep.subr.mxu0 0.0
    %1572 = vmatpush1.msra.mxu0 %v1541
    %1573 = vmatprep.subr.mxu0 0.0
    %1574 = vmatpush1.msra.mxu0 %v1542
    %1575 = vmatprep.subr.mxu0 0.0
    %1576 = vmatpush1.msra.mxu0 0.0
    %1577 = vmatprep.subr.mxu0 0.0
    %1578 = vmatpush1.msra.mxu0 0.0
    %1579 = vmatprep.subr.mxu0 0.0
    %1580 = vmatpush1.msra.mxu0 0.0
    %1581 = vmatprep.subr.mxu0 0.0
    %1582 = vmatpush1.msra.mxu0 0.0
    %1583 = vmatprep.subr.mxu0 0.0
    %1584 = vmatpush1.msra.mxu0 0.0
    %1585 = vmatprep.subr.mxu0 0.0
    %1586 = vmatpush1.msra.mxu0 0.0
    %1587 = vmatprep.subr.mxu0 0.0
    %1588 = vmatpush1.msra.mxu0 0.0
    %1589 = vmatprep.subr.mxu0 0.0
    %1590 = vmatpush1.msra.mxu0 0.0
    %1591 = vmatprep.subr.mxu0 0.0
    %1592 = vmatpush1.msra.mxu0 0.0
    %1593 = vmatprep.subr.mxu0 0.0
    %1594 = vmatpush1.msra.mxu0 0.0
    %1595 = vmatprep.subr.mxu0 0.0
    %1596 = vmatpush1.msra.mxu0 0.0
    %1597 = vmatprep.subr.mxu0 0.0
    %1598 = vmatpush1.msra.mxu0 0.0
    %1599 = vmatprep.subr.mxu0 0.0
    %1600 = vmatpush1.msra.mxu0 0.0
    %1601 = vmatprep.subr.mxu0 0.0
    %1602 = vmatpush1.msra.mxu0 0.0
    %1603 = vmatprep.subr.mxu0 0.0
    %1604 = vmatpush1.msra.mxu0 0.0
    %1605 = vmatprep.subr.mxu0 0.0
    %1606 = vmatpush1.msra.mxu0 0.0
    %1607 = vmatprep.mubr.f32.mxu0 0.0
    %1608 = vmatmul.mubr.f32.gmra.mrb[0].mxu0 %v1509
    %v1609 = vpop.f32.mrb[0].mxu0
    %v1610 = vadd.f32 0.0, %v1609
    %v1611 = vpop.f32.mrb[0].mxu0
    %1612 = vdwg.mxu0
    %v1613 = vadd.f32 %v1503, %v1610
    %v1614 = vrot.slane %v838, 7
    %v1616 = vsel %vm853, %v1614, %v841
    %s1617 = scalar_lea.vmem %s5, 448
    %v1618 = vld [vmem:[%s1617] sm:$0xf]
    %v1619 = vld [vmem:[%s1617 + $0x4] sm:$0xf]
    %v1620 = vld [vmem:[%s1617 + $0x8] sm:$0xf]
    %v1621 = vld [vmem:[%s1617 + $0xc] sm:$0xf]
    %v1622 = vld [vmem:[%s1617 + $0x10] sm:$0xf]
    %v1623 = vld [vmem:[%s1617 + $0x14] sm:$0xf]
    %v1624 = vld [vmem:[%s1617 + $0x18] sm:$0xf]
    %v1625 = vld [vmem:[%s1617 + $0x1c] sm:$0xf]
    %v1626 = vld [vmem:[%s1617 + $0x20] sm:$0xf]
    %v1627 = vld [vmem:[%s1617 + $0x24] sm:$0xf]
    %v1628 = vld [vmem:[%s1617 + $0x28] sm:$0xf]
    %v1629 = vld [vmem:[%s1617 + $0x2c] sm:$0xf]
    %v1630 = vld [vmem:[%s1617 + $0x30] sm:$0xf]
    %v1631 = vld [vmem:[%s1617 + $0x34] sm:$0xf]
    %v1632 = vld [vmem:[%s1617 + $0x38] sm:$0xf]
    %v1633 = vld [vmem:[%s1617 + $0x3c] sm:$0xf]
    %v1634 = vunpack.c.l.bf16 %v1618
    %v1635 = vunpack.c.l.bf16 %v1619
    %v1636 = vunpack.c.l.bf16 %v1620
    %v1637 = vunpack.c.l.bf16 %v1621
    %v1638 = vunpack.c.l.bf16 %v1622
    %v1639 = vunpack.c.l.bf16 %v1623
    %v1640 = vunpack.c.l.bf16 %v1624
    %v1641 = vunpack.c.l.bf16 %v1625
    %v1642 = vunpack.c.l.bf16 %v1626
    %v1643 = vunpack.c.l.bf16 %v1627
    %v1644 = vunpack.c.l.bf16 %v1628
    %v1645 = vunpack.c.l.bf16 %v1629
    %v1646 = vunpack.c.l.bf16 %v1630
    %v1647 = vunpack.c.l.bf16 %v1631
    %v1648 = vunpack.c.l.bf16 %v1632
    %v1649 = vunpack.c.l.bf16 %v1633
    %1650 = vmatprep.subr.mxu0 0.0
    %1651 = vmatpush1.msra.mxu0 %v1634
    %1652 = vmatprep.subr.mxu0 0.0
    %1653 = vmatpush1.msra.mxu0 %v1635
    %1654 = vmatprep.subr.mxu0 0.0
    %1655 = vmatpush1.msra.mxu0 %v1636
    %1656 = vmatprep.subr.mxu0 0.0
    %1657 = vmatpush1.msra.mxu0 %v1637
    %1658 = vmatprep.subr.mxu0 0.0
    %1659 = vmatpush1.msra.mxu0 %v1638
    %1660 = vmatprep.subr.mxu0 0.0
    %1661 = vmatpush1.msra.mxu0 %v1639
    %1662 = vmatprep.subr.mxu0 0.0
    %1663 = vmatpush1.msra.mxu0 %v1640
    %1664 = vmatprep.subr.mxu0 0.0
    %1665 = vmatpush1.msra.mxu0 %v1641
    %1666 = vmatprep.subr.mxu0 0.0
    %1667 = vmatpush1.msra.mxu0 %v1642
    %1668 = vmatprep.subr.mxu0 0.0
    %1669 = vmatpush1.msra.mxu0 %v1643
    %1670 = vmatprep.subr.mxu0 0.0
    %1671 = vmatpush1.msra.mxu0 %v1644
    %1672 = vmatprep.subr.mxu0 0.0
    %1673 = vmatpush1.msra.mxu0 %v1645
    %1674 = vmatprep.subr.mxu0 0.0
    %1675 = vmatpush1.msra.mxu0 %v1646
    %1676 = vmatprep.subr.mxu0 0.0
    %1677 = vmatpush1.msra.mxu0 %v1647
    %1678 = vmatprep.subr.mxu0 0.0
    %1679 = vmatpush1.msra.mxu0 %v1648
    %1680 = vmatprep.subr.mxu0 0.0
    %1681 = vmatpush1.msra.mxu0 %v1649
    %1682 = vmatprep.subr.mxu0 0.0
    %1683 = vmatpush1.msra.mxu0 0.0
    %1684 = vmatprep.subr.mxu0 0.0
    %1685 = vmatpush1.msra.mxu0 0.0
    %1686 = vmatprep.subr.mxu0 0.0
    %1687 = vmatpush1.msra.mxu0 0.0
    %1688 = vmatprep.subr.mxu0 0.0
    %1689 = vmatpush1.msra.mxu0 0.0
    %1690 = vmatprep.subr.mxu0 0.0
    %1691 = vmatpush1.msra.mxu0 0.0
    %1692 = vmatprep.subr.mxu0 0.0
    %1693 = vmatpush1.msra.mxu0 0.0
    %1694 = vmatprep.subr.mxu0 0.0
    %1695 = vmatpush1.msra.mxu0 0.0
    %1696 = vmatprep.subr.mxu0 0.0
    %1697 = vmatpush1.msra.mxu0 0.0
    %1698 = vmatprep.subr.mxu0 0.0
    %1699 = vmatpush1.msra.mxu0 0.0
    %1700 = vmatprep.subr.mxu0 0.0
    %1701 = vmatpush1.msra.mxu0 0.0
    %1702 = vmatprep.subr.mxu0 0.0
    %1703 = vmatpush1.msra.mxu0 0.0
    %1704 = vmatprep.subr.mxu0 0.0
    %1705 = vmatpush1.msra.mxu0 0.0
    %1706 = vmatprep.subr.mxu0 0.0
    %1707 = vmatpush1.msra.mxu0 0.0
    %1708 = vmatprep.subr.mxu0 0.0
    %1709 = vmatpush1.msra.mxu0 0.0
    %1710 = vmatprep.subr.mxu0 0.0
    %1711 = vmatpush1.msra.mxu0 0.0
    %1712 = vmatprep.subr.mxu0 0.0
    %1713 = vmatpush1.msra.mxu0 0.0
    %1714 = vmatprep.mubr.f32.mxu0 0.0
    %1715 = vmatmul.mubr.f32.gmra.mrb[0].mxu0 %v1616
    %v1716 = vpop.f32.mrb[0].mxu0
    %v1717 = vadd.f32 0.0, %v1716
    %v1718 = vpop.f32.mrb[0].mxu0
    %1719 = vdwg.mxu0
    %v1720 = vadd.f32 %v1613, %v1717
    %v1721 = vrot.slane %v841, 1
    %v1723 = vsel %vm853, %v839, %v1721
    %s1724 = scalar_lea.vmem %s5, 512
    %v1725 = vld [vmem:[%s1724] sm:$0xf]
    %v1726 = vld [vmem:[%s1724 + $0x4] sm:$0xf]
    %v1727 = vld [vmem:[%s1724 + $0x8] sm:$0xf]
    %v1728 = vld [vmem:[%s1724 + $0xc] sm:$0xf]
    %v1729 = vld [vmem:[%s1724 + $0x10] sm:$0xf]
    %v1730 = vld [vmem:[%s1724 + $0x14] sm:$0xf]
    %v1731 = vld [vmem:[%s1724 + $0x18] sm:$0xf]
    %v1732 = vld [vmem:[%s1724 + $0x1c] sm:$0xf]
    %v1733 = vld [vmem:[%s1724 + $0x20] sm:$0xf]
    %v1734 = vld [vmem:[%s1724 + $0x24] sm:$0xf]
    %v1735 = vld [vmem:[%s1724 + $0x28] sm:$0xf]
    %v1736 = vld [vmem:[%s1724 + $0x2c] sm:$0xf]
    %v1737 = vld [vmem:[%s1724 + $0x30] sm:$0xf]
    %v1738 = vld [vmem:[%s1724 + $0x34] sm:$0xf]
    %v1739 = vld [vmem:[%s1724 + $0x38] sm:$0xf]
    %v1740 = vld [vmem:[%s1724 + $0x3c] sm:$0xf]
    %v1741 = vunpack.c.l.bf16 %v1725
    %v1742 = vunpack.c.l.bf16 %v1726
    %v1743 = vunpack.c.l.bf16 %v1727
    %v1744 = vunpack.c.l.bf16 %v1728
    %v1745 = vunpack.c.l.bf16 %v1729
    %v1746 = vunpack.c.l.bf16 %v1730
    %v1747 = vunpack.c.l.bf16 %v1731
    %v1748 = vunpack.c.l.bf16 %v1732
    %v1749 = vunpack.c.l.bf16 %v1733
    %v1750 = vunpack.c.l.bf16 %v1734
    %v1751 = vunpack.c.l.bf16 %v1735
    %v1752 = vunpack.c.l.bf16 %v1736
    %v1753 = vunpack.c.l.bf16 %v1737
    %v1754 = vunpack.c.l.bf16 %v1738
    %v1755 = vunpack.c.l.bf16 %v1739
    %v1756 = vunpack.c.l.bf16 %v1740
    %1757 = vmatprep.subr.mxu0 0.0
    %1758 = vmatpush1.msra.mxu0 %v1741
    %1759 = vmatprep.subr.mxu0 0.0
    %1760 = vmatpush1.msra.mxu0 %v1742
    %1761 = vmatprep.subr.mxu0 0.0
    %1762 = vmatpush1.msra.mxu0 %v1743
    %1763 = vmatprep.subr.mxu0 0.0
    %1764 = vmatpush1.msra.mxu0 %v1744
    %1765 = vmatprep.subr.mxu0 0.0
    %1766 = vmatpush1.msra.mxu0 %v1745
    %1767 = vmatprep.subr.mxu0 0.0
    %1768 = vmatpush1.msra.mxu0 %v1746
    %1769 = vmatprep.subr.mxu0 0.0
    %1770 = vmatpush1.msra.mxu0 %v1747
    %1771 = vmatprep.subr.mxu0 0.0
    %1772 = vmatpush1.msra.mxu0 %v1748
    %1773 = vmatprep.subr.mxu0 0.0
    %1774 = vmatpush1.msra.mxu0 %v1749
    %1775 = vmatprep.subr.mxu0 0.0
    %1776 = vmatpush1.msra.mxu0 %v1750
    %1777 = vmatprep.subr.mxu0 0.0
    %1778 = vmatpush1.msra.mxu0 %v1751
    %1779 = vmatprep.subr.mxu0 0.0
    %1780 = vmatpush1.msra.mxu0 %v1752
    %1781 = vmatprep.subr.mxu0 0.0
    %1782 = vmatpush1.msra.mxu0 %v1753
    %1783 = vmatprep.subr.mxu0 0.0
    %1784 = vmatpush1.msra.mxu0 %v1754
    %1785 = vmatprep.subr.mxu0 0.0
    %1786 = vmatpush1.msra.mxu0 %v1755
    %1787 = vmatprep.subr.mxu0 0.0
    %1788 = vmatpush1.msra.mxu0 %v1756
    %1789 = vmatprep.subr.mxu0 0.0
    %1790 = vmatpush1.msra.mxu0 0.0
    %1791 = vmatprep.subr.mxu0 0.0
    %1792 = vmatpush1.msra.mxu0 0.0
    %1793 = vmatprep.subr.mxu0 0.0
    %1794 = vmatpush1.msra.mxu0 0.0
    %1795 = vmatprep.subr.mxu0 0.0
    %1796 = vmatpush1.msra.mxu0 0.0
    %1797 = vmatprep.subr.mxu0 0.0
    %1798 = vmatpush1.msra.mxu0 0.0
    %1799 = vmatprep.subr.mxu0 0.0
    %1800 = vmatpush1.msra.mxu0 0.0
    %1801 = vmatprep.subr.mxu0 0.0
    %1802 = vmatpush1.msra.mxu0 0.0
    %1803 = vmatprep.subr.mxu0 0.0
    %1804 = vmatpush1.msra.mxu0 0.0
    %1805 = vmatprep.subr.mxu0 0.0
    %1806 = vmatpush1.msra.mxu0 0.0
    %1807 = vmatprep.subr.mxu0 0.0
    %1808 = vmatpush1.msra.mxu0 0.0
    %1809 = vmatprep.subr.mxu0 0.0
    %1810 = vmatpush1.msra.mxu0 0.0
    %1811 = vmatprep.subr.mxu0 0.0
    %1812 = vmatpush1.msra.mxu0 0.0
    %1813 = vmatprep.subr.mxu0 0.0
    %1814 = vmatpush1.msra.mxu0 0.0
    %1815 = vmatprep.subr.mxu0 0.0
    %1816 = vmatpush1.msra.mxu0 0.0
    %1817 = vmatprep.subr.mxu0 0.0
    %1818 = vmatpush1.msra.mxu0 0.0
    %1819 = vmatprep.subr.mxu0 0.0
    %1820 = vmatpush1.msra.mxu0 0.0
    %1821 = vmatprep.mubr.f32.mxu0 0.0
    %1822 = vmatmul.mubr.f32.gmra.mrb[0].mxu0 %v1723
    %v1823 = vpop.f32.mrb[0].mxu0
    %v1824 = vadd.f32 0.0, %v1823
    %v1825 = vpop.f32.mrb[0].mxu0
    %1826 = vdwg.mxu0
    %v1827 = vadd.f32 %v1720, %v1824
    %v1829 = vrot.slane %v839, 1
    %v1831 = vrot.slane %v841, 2
    %v1833 = vsel %vm853, %v1829, %v1831
    %s1834 = scalar_lea.vmem %s5, 576
    %v1835 = vld [vmem:[%s1834] sm:$0xf]
    %v1836 = vld [vmem:[%s1834 + $0x4] sm:$0xf]
    %v1837 = vld [vmem:[%s1834 + $0x8] sm:$0xf]
    %v1838 = vld [vmem:[%s1834 + $0xc] sm:$0xf]
    %v1839 = vld [vmem:[%s1834 + $0x10] sm:$0xf]
    %v1840 = vld [vmem:[%s1834 + $0x14] sm:$0xf]
    %v1841 = vld [vmem:[%s1834 + $0x18] sm:$0xf]
    %v1842 = vld [vmem:[%s1834 + $0x1c] sm:$0xf]
    %v1843 = vld [vmem:[%s1834 + $0x20] sm:$0xf]
    %v1844 = vld [vmem:[%s1834 + $0x24] sm:$0xf]
    %v1845 = vld [vmem:[%s1834 + $0x28] sm:$0xf]
    %v1846 = vld [vmem:[%s1834 + $0x2c] sm:$0xf]
    %v1847 = vld [vmem:[%s1834 + $0x30] sm:$0xf]
    %v1848 = vld [vmem:[%s1834 + $0x34] sm:$0xf]
    %v1849 = vld [vmem:[%s1834 + $0x38] sm:$0xf]
    %v1850 = vld [vmem:[%s1834 + $0x3c] sm:$0xf]
    %v1851 = vunpack.c.l.bf16 %v1835
    %v1852 = vunpack.c.l.bf16 %v1836
    %v1853 = vunpack.c.l.bf16 %v1837
    %v1854 = vunpack.c.l.bf16 %v1838
    %v1855 = vunpack.c.l.bf16 %v1839
    %v1856 = vunpack.c.l.bf16 %v1840
    %v1857 = vunpack.c.l.bf16 %v1841
    %v1858 = vunpack.c.l.bf16 %v1842
    %v1859 = vunpack.c.l.bf16 %v1843
    %v1860 = vunpack.c.l.bf16 %v1844
    %v1861 = vunpack.c.l.bf16 %v1845
    %v1862 = vunpack.c.l.bf16 %v1846
    %v1863 = vunpack.c.l.bf16 %v1847
    %v1864 = vunpack.c.l.bf16 %v1848
    %v1865 = vunpack.c.l.bf16 %v1849
    %v1866 = vunpack.c.l.bf16 %v1850
    %1867 = vmatprep.subr.mxu0 0.0
    %1868 = vmatpush1.msra.mxu0 %v1851
    %1869 = vmatprep.subr.mxu0 0.0
    %1870 = vmatpush1.msra.mxu0 %v1852
    %1871 = vmatprep.subr.mxu0 0.0
    %1872 = vmatpush1.msra.mxu0 %v1853
    %1873 = vmatprep.subr.mxu0 0.0
    %1874 = vmatpush1.msra.mxu0 %v1854
    %1875 = vmatprep.subr.mxu0 0.0
    %1876 = vmatpush1.msra.mxu0 %v1855
    %1877 = vmatprep.subr.mxu0 0.0
    %1878 = vmatpush1.msra.mxu0 %v1856
    %1879 = vmatprep.subr.mxu0 0.0
    %1880 = vmatpush1.msra.mxu0 %v1857
    %1881 = vmatprep.subr.mxu0 0.0
    %1882 = vmatpush1.msra.mxu0 %v1858
    %1883 = vmatprep.subr.mxu0 0.0
    %1884 = vmatpush1.msra.mxu0 %v1859
    %1885 = vmatprep.subr.mxu0 0.0
    %1886 = vmatpush1.msra.mxu0 %v1860
    %1887 = vmatprep.subr.mxu0 0.0
    %1888 = vmatpush1.msra.mxu0 %v1861
    %1889 = vmatprep.subr.mxu0 0.0
    %1890 = vmatpush1.msra.mxu0 %v1862
    %1891 = vmatprep.subr.mxu0 0.0
    %1892 = vmatpush1.msra.mxu0 %v1863
    %1893 = vmatprep.subr.mxu0 0.0
    %1894 = vmatpush1.msra.mxu0 %v1864
    %1895 = vmatprep.subr.mxu0 0.0
    %1896 = vmatpush1.msra.mxu0 %v1865
    %1897 = vmatprep.subr.mxu0 0.0
    %1898 = vmatpush1.msra.mxu0 %v1866
    %1899 = vmatprep.subr.mxu0 0.0
    %1900 = vmatpush1.msra.mxu0 0.0
    %1901 = vmatprep.subr.mxu0 0.0
    %1902 = vmatpush1.msra.mxu0 0.0
    %1903 = vmatprep.subr.mxu0 0.0
    %1904 = vmatpush1.msra.mxu0 0.0
    %1905 = vmatprep.subr.mxu0 0.0
    %1906 = vmatpush1.msra.mxu0 0.0
    %1907 = vmatprep.subr.mxu0 0.0
    %1908 = vmatpush1.msra.mxu0 0.0
    %1909 = vmatprep.subr.mxu0 0.0
    %1910 = vmatpush1.msra.mxu0 0.0
    %1911 = vmatprep.subr.mxu0 0.0
    %1912 = vmatpush1.msra.mxu0 0.0
    %1913 = vmatprep.subr.mxu0 0.0
    %1914 = vmatpush1.msra.mxu0 0.0
    %1915 = vmatprep.subr.mxu0 0.0
    %1916 = vmatpush1.msra.mxu0 0.0
    %1917 = vmatprep.subr.mxu0 0.0
    %1918 = vmatpush1.msra.mxu0 0.0
    %1919 = vmatprep.subr.mxu0 0.0
    %1920 = vmatpush1.msra.mxu0 0.0
    %1921 = vmatprep.subr.mxu0 0.0
    %1922 = vmatpush1.msra.mxu0 0.0
    %1923 = vmatprep.subr.mxu0 0.0
    %1924 = vmatpush1.msra.mxu0 0.0
    %1925 = vmatprep.subr.mxu0 0.0
    %1926 = vmatpush1.msra.mxu0 0.0
    %1927 = vmatprep.subr.mxu0 0.0
    %1928 = vmatpush1.msra.mxu0 0.0
    %1929 = vmatprep.subr.mxu0 0.0
    %1930 = vmatpush1.msra.mxu0 0.0
    %1931 = vmatprep.mubr.f32.mxu0 0.0
    %1932 = vmatmul.mubr.f32.gmra.mrb[0].mxu0 %v1833
    %v1933 = vpop.f32.mrb[0].mxu0
    %v1934 = vadd.f32 0.0, %v1933
    %v1935 = vpop.f32.mrb[0].mxu0
    %1936 = vdwg.mxu0
    %v1937 = vadd.f32 %v1827, %v1934
    %v1938 = vrot.slane %v839, 2
    %v1940 = vrot.slane %v841, 3
    %v1942 = vsel %vm853, %v1938, %v1940
    %s1943 = scalar_lea.vmem %s5, 640
    %v1944 = vld [vmem:[%s1943] sm:$0xf]
    %v1945 = vld [vmem:[%s1943 + $0x4] sm:$0xf]
    %v1946 = vld [vmem:[%s1943 + $0x8] sm:$0xf]
    %v1947 = vld [vmem:[%s1943 + $0xc] sm:$0xf]
    %v1948 = vld [vmem:[%s1943 + $0x10] sm:$0xf]
    %v1949 = vld [vmem:[%s1943 + $0x14] sm:$0xf]
    %v1950 = vld [vmem:[%s1943 + $0x18] sm:$0xf]
    %v1951 = vld [vmem:[%s1943 + $0x1c] sm:$0xf]
    %v1952 = vld [vmem:[%s1943 + $0x20] sm:$0xf]
    %v1953 = vld [vmem:[%s1943 + $0x24] sm:$0xf]
    %v1954 = vld [vmem:[%s1943 + $0x28] sm:$0xf]
    %v1955 = vld [vmem:[%s1943 + $0x2c] sm:$0xf]
    %v1956 = vld [vmem:[%s1943 + $0x30] sm:$0xf]
    %v1957 = vld [vmem:[%s1943 + $0x34] sm:$0xf]
    %v1958 = vld [vmem:[%s1943 + $0x38] sm:$0xf]
    %v1959 = vld [vmem:[%s1943 + $0x3c] sm:$0xf]
    %v1960 = vunpack.c.l.bf16 %v1944
    %v1961 = vunpack.c.l.bf16 %v1945
    %v1962 = vunpack.c.l.bf16 %v1946
    %v1963 = vunpack.c.l.bf16 %v1947
    %v1964 = vunpack.c.l.bf16 %v1948
    %v1965 = vunpack.c.l.bf16 %v1949
    %v1966 = vunpack.c.l.bf16 %v1950
    %v1967 = vunpack.c.l.bf16 %v1951
    %v1968 = vunpack.c.l.bf16 %v1952
    %v1969 = vunpack.c.l.bf16 %v1953
    %v1970 = vunpack.c.l.bf16 %v1954
    %v1971 = vunpack.c.l.bf16 %v1955
    %v1972 = vunpack.c.l.bf16 %v1956
    %v1973 = vunpack.c.l.bf16 %v1957
    %v1974 = vunpack.c.l.bf16 %v1958
    %v1975 = vunpack.c.l.bf16 %v1959
    %1976 = vmatprep.subr.mxu0 0.0
    %1977 = vmatpush1.msra.mxu0 %v1960
    %1978 = vmatprep.subr.mxu0 0.0
    %1979 = vmatpush1.msra.mxu0 %v1961
    %1980 = vmatprep.subr.mxu0 0.0
    %1981 = vmatpush1.msra.mxu0 %v1962
    %1982 = vmatprep.subr.mxu0 0.0
    %1983 = vmatpush1.msra.mxu0 %v1963
    %1984 = vmatprep.subr.mxu0 0.0
    %1985 = vmatpush1.msra.mxu0 %v1964
    %1986 = vmatprep.subr.mxu0 0.0
    %1987 = vmatpush1.msra.mxu0 %v1965
    %1988 = vmatprep.subr.mxu0 0.0
    %1989 = vmatpush1.msra.mxu0 %v1966
    %1990 = vmatprep.subr.mxu0 0.0
    %1991 = vmatpush1.msra.mxu0 %v1967
    %1992 = vmatprep.subr.mxu0 0.0
    %1993 = vmatpush1.msra.mxu0 %v1968
    %1994 = vmatprep.subr.mxu0 0.0
    %1995 = vmatpush1.msra.mxu0 %v1969
    %1996 = vmatprep.subr.mxu0 0.0
    %1997 = vmatpush1.msra.mxu0 %v1970
    %1998 = vmatprep.subr.mxu0 0.0
    %1999 = vmatpush1.msra.mxu0 %v1971
    %2000 = vmatprep.subr.mxu0 0.0
    %2001 = vmatpush1.msra.mxu0 %v1972
    %2002 = vmatprep.subr.mxu0 0.0
    %2003 = vmatpush1.msra.mxu0 %v1973
    %2004 = vmatprep.subr.mxu0 0.0
    %2005 = vmatpush1.msra.mxu0 %v1974
    %2006 = vmatprep.subr.mxu0 0.0
    %2007 = vmatpush1.msra.mxu0 %v1975
    %2008 = vmatprep.subr.mxu0 0.0
    %2009 = vmatpush1.msra.mxu0 0.0
    %2010 = vmatprep.subr.mxu0 0.0
    %2011 = vmatpush1.msra.mxu0 0.0
    %2012 = vmatprep.subr.mxu0 0.0
    %2013 = vmatpush1.msra.mxu0 0.0
    %2014 = vmatprep.subr.mxu0 0.0
    %2015 = vmatpush1.msra.mxu0 0.0
    %2016 = vmatprep.subr.mxu0 0.0
    %2017 = vmatpush1.msra.mxu0 0.0
    %2018 = vmatprep.subr.mxu0 0.0
    %2019 = vmatpush1.msra.mxu0 0.0
    %2020 = vmatprep.subr.mxu0 0.0
    %2021 = vmatpush1.msra.mxu0 0.0
    %2022 = vmatprep.subr.mxu0 0.0
    %2023 = vmatpush1.msra.mxu0 0.0
    %2024 = vmatprep.subr.mxu0 0.0
    %2025 = vmatpush1.msra.mxu0 0.0
    %2026 = vmatprep.subr.mxu0 0.0
    %2027 = vmatpush1.msra.mxu0 0.0
    %2028 = vmatprep.subr.mxu0 0.0
    %2029 = vmatpush1.msra.mxu0 0.0
    %2030 = vmatprep.subr.mxu0 0.0
    %2031 = vmatpush1.msra.mxu0 0.0
    %2032 = vmatprep.subr.mxu0 0.0
    %2033 = vmatpush1.msra.mxu0 0.0
    %2034 = vmatprep.subr.mxu0 0.0
    %2035 = vmatpush1.msra.mxu0 0.0
    %2036 = vmatprep.subr.mxu0 0.0
    %2037 = vmatpush1.msra.mxu0 0.0
    %2038 = vmatprep.subr.mxu0 0.0
    %2039 = vmatpush1.msra.mxu0 0.0
    %2040 = vmatprep.mubr.f32.mxu0 0.0
    %2041 = vmatmul.mubr.f32.gmra.mrb[0].mxu0 %v1942
    %v2042 = vpop.f32.mrb[0].mxu0
    %v2043 = vadd.f32 0.0, %v2042
    %v2044 = vpop.f32.mrb[0].mxu0
    %2045 = vdwg.mxu0
    %v2046 = vadd.f32 %v1937, %v2043
    %v2047 = vrot.slane %v839, 3
    %v2049 = vrot.slane %v841, 4
    %v2051 = vsel %vm853, %v2047, %v2049
    %s2052 = scalar_lea.vmem %s5, 704
    %v2053 = vld [vmem:[%s2052] sm:$0xf]
    %v2054 = vld [vmem:[%s2052 + $0x4] sm:$0xf]
    %v2055 = vld [vmem:[%s2052 + $0x8] sm:$0xf]
    %v2056 = vld [vmem:[%s2052 + $0xc] sm:$0xf]
    %v2057 = vld [vmem:[%s2052 + $0x10] sm:$0xf]
    %v2058 = vld [vmem:[%s2052 + $0x14] sm:$0xf]
    %v2059 = vld [vmem:[%s2052 + $0x18] sm:$0xf]
    %v2060 = vld [vmem:[%s2052 + $0x1c] sm:$0xf]
    %v2061 = vld [vmem:[%s2052 + $0x20] sm:$0xf]
    %v2062 = vld [vmem:[%s2052 + $0x24] sm:$0xf]
    %v2063 = vld [vmem:[%s2052 + $0x28] sm:$0xf]
    %v2064 = vld [vmem:[%s2052 + $0x2c] sm:$0xf]
    %v2065 = vld [vmem:[%s2052 + $0x30] sm:$0xf]
    %v2066 = vld [vmem:[%s2052 + $0x34] sm:$0xf]
    %v2067 = vld [vmem:[%s2052 + $0x38] sm:$0xf]
    %v2068 = vld [vmem:[%s2052 + $0x3c] sm:$0xf]
    %v2069 = vunpack.c.l.bf16 %v2053
    %v2070 = vunpack.c.l.bf16 %v2054
    %v2071 = vunpack.c.l.bf16 %v2055
    %v2072 = vunpack.c.l.bf16 %v2056
    %v2073 = vunpack.c.l.bf16 %v2057
    %v2074 = vunpack.c.l.bf16 %v2058
    %v2075 = vunpack.c.l.bf16 %v2059
    %v2076 = vunpack.c.l.bf16 %v2060
    %v2077 = vunpack.c.l.bf16 %v2061
    %v2078 = vunpack.c.l.bf16 %v2062
    %v2079 = vunpack.c.l.bf16 %v2063
    %v2080 = vunpack.c.l.bf16 %v2064
    %v2081 = vunpack.c.l.bf16 %v2065
    %v2082 = vunpack.c.l.bf16 %v2066
    %v2083 = vunpack.c.l.bf16 %v2067
    %v2084 = vunpack.c.l.bf16 %v2068
    %2085 = vmatprep.subr.mxu0 0.0
    %2086 = vmatpush1.msra.mxu0 %v2069
    %2087 = vmatprep.subr.mxu0 0.0
    %2088 = vmatpush1.msra.mxu0 %v2070
    %2089 = vmatprep.subr.mxu0 0.0
    %2090 = vmatpush1.msra.mxu0 %v2071
    %2091 = vmatprep.subr.mxu0 0.0
    %2092 = vmatpush1.msra.mxu0 %v2072
    %2093 = vmatprep.subr.mxu0 0.0
    %2094 = vmatpush1.msra.mxu0 %v2073
    %2095 = vmatprep.subr.mxu0 0.0
    %2096 = vmatpush1.msra.mxu0 %v2074
    %2097 = vmatprep.subr.mxu0 0.0
    %2098 = vmatpush1.msra.mxu0 %v2075
    %2099 = vmatprep.subr.mxu0 0.0
    %2100 = vmatpush1.msra.mxu0 %v2076
    %2101 = vmatprep.subr.mxu0 0.0
    %2102 = vmatpush1.msra.mxu0 %v2077
    %2103 = vmatprep.subr.mxu0 0.0
    %2104 = vmatpush1.msra.mxu0 %v2078
    %2105 = vmatprep.subr.mxu0 0.0
    %2106 = vmatpush1.msra.mxu0 %v2079
    %2107 = vmatprep.subr.mxu0 0.0
    %2108 = vmatpush1.msra.mxu0 %v2080
    %2109 = vmatprep.subr.mxu0 0.0
    %2110 = vmatpush1.msra.mxu0 %v2081
    %2111 = vmatprep.subr.mxu0 0.0
    %2112 = vmatpush1.msra.mxu0 %v2082
    %2113 = vmatprep.subr.mxu0 0.0
    %2114 = vmatpush1.msra.mxu0 %v2083
    %2115 = vmatprep.subr.mxu0 0.0
    %2116 = vmatpush1.msra.mxu0 %v2084
    %2117 = vmatprep.subr.mxu0 0.0
    %2118 = vmatpush1.msra.mxu0 0.0
    %2119 = vmatprep.subr.mxu0 0.0
    %2120 = vmatpush1.msra.mxu0 0.0
    %2121 = vmatprep.subr.mxu0 0.0
    %2122 = vmatpush1.msra.mxu0 0.0
    %2123 = vmatprep.subr.mxu0 0.0
    %2124 = vmatpush1.msra.mxu0 0.0
    %2125 = vmatprep.subr.mxu0 0.0
    %2126 = vmatpush1.msra.mxu0 0.0
    %2127 = vmatprep.subr.mxu0 0.0
    %2128 = vmatpush1.msra.mxu0 0.0
    %2129 = vmatprep.subr.mxu0 0.0
    %2130 = vmatpush1.msra.mxu0 0.0
    %2131 = vmatprep.subr.mxu0 0.0
    %2132 = vmatpush1.msra.mxu0 0.0
    %2133 = vmatprep.subr.mxu0 0.0
    %2134 = vmatpush1.msra.mxu0 0.0
    %2135 = vmatprep.subr.mxu0 0.0
    %2136 = vmatpush1.msra.mxu0 0.0
    %2137 = vmatprep.subr.mxu0 0.0
    %2138 = vmatpush1.msra.mxu0 0.0
    %2139 = vmatprep.subr.mxu0 0.0
    %2140 = vmatpush1.msra.mxu0 0.0
    %2141 = vmatprep.subr.mxu0 0.0
    %2142 = vmatpush1.msra.mxu0 0.0
    %2143 = vmatprep.subr.mxu0 0.0
    %2144 = vmatpush1.msra.mxu0 0.0
    %2145 = vmatprep.subr.mxu0 0.0
    %2146 = vmatpush1.msra.mxu0 0.0
    %2147 = vmatprep.subr.mxu0 0.0
    %2148 = vmatpush1.msra.mxu0 0.0
    %2149 = vmatprep.mubr.f32.mxu0 0.0
    %2150 = vmatmul.mubr.f32.gmra.mrb[0].mxu0 %v2051
    %v2151 = vpop.f32.mrb[0].mxu0
    %v2152 = vadd.f32 0.0, %v2151
    %v2153 = vpop.f32.mrb[0].mxu0
    %2154 = vdwg.mxu0
    %v2155 = vadd.f32 %v2046, %v2152
    %v2156 = vrot.slane %v839, 4
    %v2158 = vrot.slane %v841, 5
    %v2160 = vsel %vm853, %v2156, %v2158
    %s2161 = scalar_lea.vmem %s5, 768
    %v2162 = vld [vmem:[%s2161] sm:$0xf]
    %v2163 = vld [vmem:[%s2161 + $0x4] sm:$0xf]
    %v2164 = vld [vmem:[%s2161 + $0x8] sm:$0xf]
    %v2165 = vld [vmem:[%s2161 + $0xc] sm:$0xf]
    %v2166 = vld [vmem:[%s2161 + $0x10] sm:$0xf]
    %v2167 = vld [vmem:[%s2161 + $0x14] sm:$0xf]
    %v2168 = vld [vmem:[%s2161 + $0x18] sm:$0xf]
    %v2169 = vld [vmem:[%s2161 + $0x1c] sm:$0xf]
    %v2170 = vld [vmem:[%s2161 + $0x20] sm:$0xf]
    %v2171 = vld [vmem:[%s2161 + $0x24] sm:$0xf]
    %v2172 = vld [vmem:[%s2161 + $0x28] sm:$0xf]
    %v2173 = vld [vmem:[%s2161 + $0x2c] sm:$0xf]
    %v2174 = vld [vmem:[%s2161 + $0x30] sm:$0xf]
    %v2175 = vld [vmem:[%s2161 + $0x34] sm:$0xf]
    %v2176 = vld [vmem:[%s2161 + $0x38] sm:$0xf]
    %v2177 = vld [vmem:[%s2161 + $0x3c] sm:$0xf]
    %v2178 = vunpack.c.l.bf16 %v2162
    %v2179 = vunpack.c.l.bf16 %v2163
    %v2180 = vunpack.c.l.bf16 %v2164
    %v2181 = vunpack.c.l.bf16 %v2165
    %v2182 = vunpack.c.l.bf16 %v2166
    %v2183 = vunpack.c.l.bf16 %v2167
    %v2184 = vunpack.c.l.bf16 %v2168
    %v2185 = vunpack.c.l.bf16 %v2169
    %v2186 = vunpack.c.l.bf16 %v2170
    %v2187 = vunpack.c.l.bf16 %v2171
    %v2188 = vunpack.c.l.bf16 %v2172
    %v2189 = vunpack.c.l.bf16 %v2173
    %v2190 = vunpack.c.l.bf16 %v2174
    %v2191 = vunpack.c.l.bf16 %v2175
    %v2192 = vunpack.c.l.bf16 %v2176
    %v2193 = vunpack.c.l.bf16 %v2177
    %2194 = vmatprep.subr.mxu0 0.0
    %2195 = vmatpush1.msra.mxu0 %v2178
    %2196 = vmatprep.subr.mxu0 0.0
    %2197 = vmatpush1.msra.mxu0 %v2179
    %2198 = vmatprep.subr.mxu0 0.0
    %2199 = vmatpush1.msra.mxu0 %v2180
    %2200 = vmatprep.subr.mxu0 0.0
    %2201 = vmatpush1.msra.mxu0 %v2181
    %2202 = vmatprep.subr.mxu0 0.0
    %2203 = vmatpush1.msra.mxu0 %v2182
    %2204 = vmatprep.subr.mxu0 0.0
    %2205 = vmatpush1.msra.mxu0 %v2183
    %2206 = vmatprep.subr.mxu0 0.0
    %2207 = vmatpush1.msra.mxu0 %v2184
    %2208 = vmatprep.subr.mxu0 0.0
    %2209 = vmatpush1.msra.mxu0 %v2185
    %2210 = vmatprep.subr.mxu0 0.0
    %2211 = vmatpush1.msra.mxu0 %v2186
    %2212 = vmatprep.subr.mxu0 0.0
    %2213 = vmatpush1.msra.mxu0 %v2187
    %2214 = vmatprep.subr.mxu0 0.0
    %2215 = vmatpush1.msra.mxu0 %v2188
    %2216 = vmatprep.subr.mxu0 0.0
    %2217 = vmatpush1.msra.mxu0 %v2189
    %2218 = vmatprep.subr.mxu0 0.0
    %2219 = vmatpush1.msra.mxu0 %v2190
    %2220 = vmatprep.subr.mxu0 0.0
    %2221 = vmatpush1.msra.mxu0 %v2191
    %2222 = vmatprep.subr.mxu0 0.0
    %2223 = vmatpush1.msra.mxu0 %v2192
    %2224 = vmatprep.subr.mxu0 0.0
    %2225 = vmatpush1.msra.mxu0 %v2193
    %2226 = vmatprep.subr.mxu0 0.0
    %2227 = vmatpush1.msra.mxu0 0.0
    %2228 = vmatprep.subr.mxu0 0.0
    %2229 = vmatpush1.msra.mxu0 0.0
    %2230 = vmatprep.subr.mxu0 0.0
    %2231 = vmatpush1.msra.mxu0 0.0
    %2232 = vmatprep.subr.mxu0 0.0
    %2233 = vmatpush1.msra.mxu0 0.0
    %2234 = vmatprep.subr.mxu0 0.0
    %2235 = vmatpush1.msra.mxu0 0.0
    %2236 = vmatprep.subr.mxu0 0.0
    %2237 = vmatpush1.msra.mxu0 0.0
    %2238 = vmatprep.subr.mxu0 0.0
    %2239 = vmatpush1.msra.mxu0 0.0
    %2240 = vmatprep.subr.mxu0 0.0
    %2241 = vmatpush1.msra.mxu0 0.0
    %2242 = vmatprep.subr.mxu0 0.0
    %2243 = vmatpush1.msra.mxu0 0.0
    %2244 = vmatprep.subr.mxu0 0.0
    %2245 = vmatpush1.msra.mxu0 0.0
    %2246 = vmatprep.subr.mxu0 0.0
    %2247 = vmatpush1.msra.mxu0 0.0
    %2248 = vmatprep.subr.mxu0 0.0
    %2249 = vmatpush1.msra.mxu0 0.0
    %2250 = vmatprep.subr.mxu0 0.0
    %2251 = vmatpush1.msra.mxu0 0.0
    %2252 = vmatprep.subr.mxu0 0.0
    %2253 = vmatpush1.msra.mxu0 0.0
    %2254 = vmatprep.subr.mxu0 0.0
    %2255 = vmatpush1.msra.mxu0 0.0
    %2256 = vmatprep.subr.mxu0 0.0
    %2257 = vmatpush1.msra.mxu0 0.0
    %2258 = vmatprep.mubr.f32.mxu0 0.0
    %2259 = vmatmul.mubr.f32.gmra.mrb[0].mxu0 %v2160
    %v2260 = vpop.f32.mrb[0].mxu0
    %v2261 = vadd.f32 0.0, %v2260
    %v2262 = vpop.f32.mrb[0].mxu0
    %2263 = vdwg.mxu0
    %v2264 = vadd.f32 %v2155, %v2261
    %v2265 = vrot.slane %v839, 5
    %v2267 = vrot.slane %v841, 6
    %v2269 = vsel %vm853, %v2265, %v2267
    %s2270 = scalar_lea.vmem %s5, 832
    %v2271 = vld [vmem:[%s2270] sm:$0xf]
    %v2272 = vld [vmem:[%s2270 + $0x4] sm:$0xf]
    %v2273 = vld [vmem:[%s2270 + $0x8] sm:$0xf]
    %v2274 = vld [vmem:[%s2270 + $0xc] sm:$0xf]
    %v2275 = vld [vmem:[%s2270 + $0x10] sm:$0xf]
    %v2276 = vld [vmem:[%s2270 + $0x14] sm:$0xf]
    %v2277 = vld [vmem:[%s2270 + $0x18] sm:$0xf]
    %v2278 = vld [vmem:[%s2270 + $0x1c] sm:$0xf]
    %v2279 = vld [vmem:[%s2270 + $0x20] sm:$0xf]
    %v2280 = vld [vmem:[%s2270 + $0x24] sm:$0xf]
    %v2281 = vld [vmem:[%s2270 + $0x28] sm:$0xf]
    %v2282 = vld [vmem:[%s2270 + $0x2c] sm:$0xf]
    %v2283 = vld [vmem:[%s2270 + $0x30] sm:$0xf]
    %v2284 = vld [vmem:[%s2270 + $0x34] sm:$0xf]
    %v2285 = vld [vmem:[%s2270 + $0x38] sm:$0xf]
    %v2286 = vld [vmem:[%s2270 + $0x3c] sm:$0xf]
    %v2287 = vunpack.c.l.bf16 %v2271
    %v2288 = vunpack.c.l.bf16 %v2272
    %v2289 = vunpack.c.l.bf16 %v2273
    %v2290 = vunpack.c.l.bf16 %v2274
    %v2291 = vunpack.c.l.bf16 %v2275
    %v2292 = vunpack.c.l.bf16 %v2276
    %v2293 = vunpack.c.l.bf16 %v2277
    %v2294 = vunpack.c.l.bf16 %v2278
    %v2295 = vunpack.c.l.bf16 %v2279
    %v2296 = vunpack.c.l.bf16 %v2280
    %v2297 = vunpack.c.l.bf16 %v2281
    %v2298 = vunpack.c.l.bf16 %v2282
    %v2299 = vunpack.c.l.bf16 %v2283
    %v2300 = vunpack.c.l.bf16 %v2284
    %v2301 = vunpack.c.l.bf16 %v2285
    %v2302 = vunpack.c.l.bf16 %v2286
    %2303 = vmatprep.subr.mxu0 0.0
    %2304 = vmatpush1.msra.mxu0 %v2287
    %2305 = vmatprep.subr.mxu0 0.0
    %2306 = vmatpush1.msra.mxu0 %v2288
    %2307 = vmatprep.subr.mxu0 0.0
    %2308 = vmatpush1.msra.mxu0 %v2289
    %2309 = vmatprep.subr.mxu0 0.0
    %2310 = vmatpush1.msra.mxu0 %v2290
    %2311 = vmatprep.subr.mxu0 0.0
    %2312 = vmatpush1.msra.mxu0 %v2291
    %2313 = vmatprep.subr.mxu0 0.0
    %2314 = vmatpush1.msra.mxu0 %v2292
    %2315 = vmatprep.subr.mxu0 0.0
    %2316 = vmatpush1.msra.mxu0 %v2293
    %2317 = vmatprep.subr.mxu0 0.0
    %2318 = vmatpush1.msra.mxu0 %v2294
    %2319 = vmatprep.subr.mxu0 0.0
    %2320 = vmatpush1.msra.mxu0 %v2295
    %2321 = vmatprep.subr.mxu0 0.0
    %2322 = vmatpush1.msra.mxu0 %v2296
    %2323 = vmatprep.subr.mxu0 0.0
    %2324 = vmatpush1.msra.mxu0 %v2297
    %2325 = vmatprep.subr.mxu0 0.0
    %2326 = vmatpush1.msra.mxu0 %v2298
    %2327 = vmatprep.subr.mxu0 0.0
    %2328 = vmatpush1.msra.mxu0 %v2299
    %2329 = vmatprep.subr.mxu0 0.0
    %2330 = vmatpush1.msra.mxu0 %v2300
    %2331 = vmatprep.subr.mxu0 0.0
    %2332 = vmatpush1.msra.mxu0 %v2301
    %2333 = vmatprep.subr.mxu0 0.0
    %2334 = vmatpush1.msra.mxu0 %v2302
    %2335 = vmatprep.subr.mxu0 0.0
    %2336 = vmatpush1.msra.mxu0 0.0
    %2337 = vmatprep.subr.mxu0 0.0
    %2338 = vmatpush1.msra.mxu0 0.0
    %2339 = vmatprep.subr.mxu0 0.0
    %2340 = vmatpush1.msra.mxu0 0.0
    %2341 = vmatprep.subr.mxu0 0.0
    %2342 = vmatpush1.msra.mxu0 0.0
    %2343 = vmatprep.subr.mxu0 0.0
    %2344 = vmatpush1.msra.mxu0 0.0
    %2345 = vmatprep.subr.mxu0 0.0
    %2346 = vmatpush1.msra.mxu0 0.0
    %2347 = vmatprep.subr.mxu0 0.0
    %2348 = vmatpush1.msra.mxu0 0.0
    %2349 = vmatprep.subr.mxu0 0.0
    %2350 = vmatpush1.msra.mxu0 0.0
    %2351 = vmatprep.subr.mxu0 0.0
    %2352 = vmatpush1.msra.mxu0 0.0
    %2353 = vmatprep.subr.mxu0 0.0
    %2354 = vmatpush1.msra.mxu0 0.0
    %2355 = vmatprep.subr.mxu0 0.0
    %2356 = vmatpush1.msra.mxu0 0.0
    %2357 = vmatprep.subr.mxu0 0.0
    %2358 = vmatpush1.msra.mxu0 0.0
    %2359 = vmatprep.subr.mxu0 0.0
    %2360 = vmatpush1.msra.mxu0 0.0
    %2361 = vmatprep.subr.mxu0 0.0
    %2362 = vmatpush1.msra.mxu0 0.0
    %2363 = vmatprep.subr.mxu0 0.0
    %2364 = vmatpush1.msra.mxu0 0.0
    %2365 = vmatprep.subr.mxu0 0.0
    %2366 = vmatpush1.msra.mxu0 0.0
    %2367 = vmatprep.mubr.f32.mxu0 0.0
    %2368 = vmatmul.mubr.f32.gmra.mrb[0].mxu0 %v2269
    %v2369 = vpop.f32.mrb[0].mxu0
    %v2370 = vadd.f32 0.0, %v2369
    %v2371 = vpop.f32.mrb[0].mxu0
    %2372 = vdwg.mxu0
    %v2373 = vadd.f32 %v2264, %v2370
    %v2374 = vrot.slane %v839, 6
    %v2377 = vrot.slane %v842, 7
    %v2379 = vsel %vm853, %v2374, %v2377
    %s2380 = scalar_lea.vmem %s5, 896
    %v2381 = vld [vmem:[%s2380] sm:$0xf]
    %v2382 = vld [vmem:[%s2380 + $0x4] sm:$0xf]
    %v2383 = vld [vmem:[%s2380 + $0x8] sm:$0xf]
    %v2384 = vld [vmem:[%s2380 + $0xc] sm:$0xf]
    %v2385 = vld [vmem:[%s2380 + $0x10] sm:$0xf]
    %v2386 = vld [vmem:[%s2380 + $0x14] sm:$0xf]
    %v2387 = vld [vmem:[%s2380 + $0x18] sm:$0xf]
    %v2388 = vld [vmem:[%s2380 + $0x1c] sm:$0xf]
    %v2389 = vld [vmem:[%s2380 + $0x20] sm:$0xf]
    %v2390 = vld [vmem:[%s2380 + $0x24] sm:$0xf]
    %v2391 = vld [vmem:[%s2380 + $0x28] sm:$0xf]
    %v2392 = vld [vmem:[%s2380 + $0x2c] sm:$0xf]
    %v2393 = vld [vmem:[%s2380 + $0x30] sm:$0xf]
    %v2394 = vld [vmem:[%s2380 + $0x34] sm:$0xf]
    %v2395 = vld [vmem:[%s2380 + $0x38] sm:$0xf]
    %v2396 = vld [vmem:[%s2380 + $0x3c] sm:$0xf]
    %v2397 = vunpack.c.l.bf16 %v2381
    %v2398 = vunpack.c.l.bf16 %v2382
    %v2399 = vunpack.c.l.bf16 %v2383
    %v2400 = vunpack.c.l.bf16 %v2384
    %v2401 = vunpack.c.l.bf16 %v2385
    %v2402 = vunpack.c.l.bf16 %v2386
    %v2403 = vunpack.c.l.bf16 %v2387
    %v2404 = vunpack.c.l.bf16 %v2388
    %v2405 = vunpack.c.l.bf16 %v2389
    %v2406 = vunpack.c.l.bf16 %v2390
    %v2407 = vunpack.c.l.bf16 %v2391
    %v2408 = vunpack.c.l.bf16 %v2392
    %v2409 = vunpack.c.l.bf16 %v2393
    %v2410 = vunpack.c.l.bf16 %v2394
    %v2411 = vunpack.c.l.bf16 %v2395
    %v2412 = vunpack.c.l.bf16 %v2396
    %2413 = vmatprep.subr.mxu0 0.0
    %2414 = vmatpush1.msra.mxu0 %v2397
    %2415 = vmatprep.subr.mxu0 0.0
    %2416 = vmatpush1.msra.mxu0 %v2398
    %2417 = vmatprep.subr.mxu0 0.0
    %2418 = vmatpush1.msra.mxu0 %v2399
    %2419 = vmatprep.subr.mxu0 0.0
    %2420 = vmatpush1.msra.mxu0 %v2400
    %2421 = vmatprep.subr.mxu0 0.0
    %2422 = vmatpush1.msra.mxu0 %v2401
    %2423 = vmatprep.subr.mxu0 0.0
    %2424 = vmatpush1.msra.mxu0 %v2402
    %2425 = vmatprep.subr.mxu0 0.0
    %2426 = vmatpush1.msra.mxu0 %v2403
    %2427 = vmatprep.subr.mxu0 0.0
    %2428 = vmatpush1.msra.mxu0 %v2404
    %2429 = vmatprep.subr.mxu0 0.0
    %2430 = vmatpush1.msra.mxu0 %v2405
    %2431 = vmatprep.subr.mxu0 0.0
    %2432 = vmatpush1.msra.mxu0 %v2406
    %2433 = vmatprep.subr.mxu0 0.0
    %2434 = vmatpush1.msra.mxu0 %v2407
    %2435 = vmatprep.subr.mxu0 0.0
    %2436 = vmatpush1.msra.mxu0 %v2408
    %2437 = vmatprep.subr.mxu0 0.0
    %2438 = vmatpush1.msra.mxu0 %v2409
    %2439 = vmatprep.subr.mxu0 0.0
    %2440 = vmatpush1.msra.mxu0 %v2410
    %2441 = vmatprep.subr.mxu0 0.0
    %2442 = vmatpush1.msra.mxu0 %v2411
    %2443 = vmatprep.subr.mxu0 0.0
    %2444 = vmatpush1.msra.mxu0 %v2412
    %2445 = vmatprep.subr.mxu0 0.0
    %2446 = vmatpush1.msra.mxu0 0.0
    %2447 = vmatprep.subr.mxu0 0.0
    %2448 = vmatpush1.msra.mxu0 0.0
    %2449 = vmatprep.subr.mxu0 0.0
    %2450 = vmatpush1.msra.mxu0 0.0
    %2451 = vmatprep.subr.mxu0 0.0
    %2452 = vmatpush1.msra.mxu0 0.0
    %2453 = vmatprep.subr.mxu0 0.0
    %2454 = vmatpush1.msra.mxu0 0.0
    %2455 = vmatprep.subr.mxu0 0.0
    %2456 = vmatpush1.msra.mxu0 0.0
    %2457 = vmatprep.subr.mxu0 0.0
    %2458 = vmatpush1.msra.mxu0 0.0
    %2459 = vmatprep.subr.mxu0 0.0
    %2460 = vmatpush1.msra.mxu0 0.0
    %2461 = vmatprep.subr.mxu0 0.0
    %2462 = vmatpush1.msra.mxu0 0.0
    %2463 = vmatprep.subr.mxu0 0.0
    %2464 = vmatpush1.msra.mxu0 0.0
    %2465 = vmatprep.subr.mxu0 0.0
    %2466 = vmatpush1.msra.mxu0 0.0
    %2467 = vmatprep.subr.mxu0 0.0
    %2468 = vmatpush1.msra.mxu0 0.0
    %2469 = vmatprep.subr.mxu0 0.0
    %2470 = vmatpush1.msra.mxu0 0.0
    %2471 = vmatprep.subr.mxu0 0.0
    %2472 = vmatpush1.msra.mxu0 0.0
    %2473 = vmatprep.subr.mxu0 0.0
    %2474 = vmatpush1.msra.mxu0 0.0
    %2475 = vmatprep.subr.mxu0 0.0
    %2476 = vmatpush1.msra.mxu0 0.0
    %2477 = vmatprep.mubr.f32.mxu0 0.0
    %2478 = vmatmul.mubr.f32.gmra.mrb[0].mxu0 %v2379
    %v2479 = vpop.f32.mrb[0].mxu0
    %v2480 = vadd.f32 0.0, %v2479
    %v2481 = vpop.f32.mrb[0].mxu0
    %2482 = vdwg.mxu0
    %v2483 = vadd.f32 %v2373, %v2480
    %v2484 = vrot.slane %v839, 7
    %v2486 = vsel %vm853, %v2484, %v842
    %s2487 = scalar_lea.vmem %s5, 960
    %v2488 = vld [vmem:[%s2487] sm:$0xf]
    %v2489 = vld [vmem:[%s2487 + $0x4] sm:$0xf]
    %v2490 = vld [vmem:[%s2487 + $0x8] sm:$0xf]
    %v2491 = vld [vmem:[%s2487 + $0xc] sm:$0xf]
    %v2492 = vld [vmem:[%s2487 + $0x10] sm:$0xf]
    %v2493 = vld [vmem:[%s2487 + $0x14] sm:$0xf]
    %v2494 = vld [vmem:[%s2487 + $0x18] sm:$0xf]
    %v2495 = vld [vmem:[%s2487 + $0x1c] sm:$0xf]
    %v2496 = vld [vmem:[%s2487 + $0x20] sm:$0xf]
    %v2497 = vld [vmem:[%s2487 + $0x24] sm:$0xf]
    %v2498 = vld [vmem:[%s2487 + $0x28] sm:$0xf]
    %v2499 = vld [vmem:[%s2487 + $0x2c] sm:$0xf]
    %v2500 = vld [vmem:[%s2487 + $0x30] sm:$0xf]
    %v2501 = vld [vmem:[%s2487 + $0x34] sm:$0xf]
    %v2502 = vld [vmem:[%s2487 + $0x38] sm:$0xf]
    %v2503 = vld [vmem:[%s2487 + $0x3c] sm:$0xf]
    %v2504 = vunpack.c.l.bf16 %v2488
    %v2505 = vunpack.c.l.bf16 %v2489
    %v2506 = vunpack.c.l.bf16 %v2490
    %v2507 = vunpack.c.l.bf16 %v2491
    %v2508 = vunpack.c.l.bf16 %v2492
    %v2509 = vunpack.c.l.bf16 %v2493
    %v2510 = vunpack.c.l.bf16 %v2494
    %v2511 = vunpack.c.l.bf16 %v2495
    %v2512 = vunpack.c.l.bf16 %v2496
    %v2513 = vunpack.c.l.bf16 %v2497
    %v2514 = vunpack.c.l.bf16 %v2498
    %v2515 = vunpack.c.l.bf16 %v2499
    %v2516 = vunpack.c.l.bf16 %v2500
    %v2517 = vunpack.c.l.bf16 %v2501
    %v2518 = vunpack.c.l.bf16 %v2502
    %v2519 = vunpack.c.l.bf16 %v2503
    %2520 = vmatprep.subr.mxu0 0.0
    %2521 = vmatpush1.msra.mxu0 %v2504
    %2522 = vmatprep.subr.mxu0 0.0
    %2523 = vmatpush1.msra.mxu0 %v2505
    %2524 = vmatprep.subr.mxu0 0.0
    %2525 = vmatpush1.msra.mxu0 %v2506
    %2526 = vmatprep.subr.mxu0 0.0
    %2527 = vmatpush1.msra.mxu0 %v2507
    %2528 = vmatprep.subr.mxu0 0.0
    %2529 = vmatpush1.msra.mxu0 %v2508
    %2530 = vmatprep.subr.mxu0 0.0
    %2531 = vmatpush1.msra.mxu0 %v2509
    %2532 = vmatprep.subr.mxu0 0.0
    %2533 = vmatpush1.msra.mxu0 %v2510
    %2534 = vmatprep.subr.mxu0 0.0
    %2535 = vmatpush1.msra.mxu0 %v2511
    %2536 = vmatprep.subr.mxu0 0.0
    %2537 = vmatpush1.msra.mxu0 %v2512
    %2538 = vmatprep.subr.mxu0 0.0
    %2539 = vmatpush1.msra.mxu0 %v2513
    %2540 = vmatprep.subr.mxu0 0.0
    %2541 = vmatpush1.msra.mxu0 %v2514
    %2542 = vmatprep.subr.mxu0 0.0
    %2543 = vmatpush1.msra.mxu0 %v2515
    %2544 = vmatprep.subr.mxu0 0.0
    %2545 = vmatpush1.msra.mxu0 %v2516
    %2546 = vmatprep.subr.mxu0 0.0
    %2547 = vmatpush1.msra.mxu0 %v2517
    %2548 = vmatprep.subr.mxu0 0.0
    %2549 = vmatpush1.msra.mxu0 %v2518
    %2550 = vmatprep.subr.mxu0 0.0
    %2551 = vmatpush1.msra.mxu0 %v2519
    %2552 = vmatprep.subr.mxu0 0.0
    %2553 = vmatpush1.msra.mxu0 0.0
    %2554 = vmatprep.subr.mxu0 0.0
    %2555 = vmatpush1.msra.mxu0 0.0
    %2556 = vmatprep.subr.mxu0 0.0
    %2557 = vmatpush1.msra.mxu0 0.0
    %2558 = vmatprep.subr.mxu0 0.0
    %2559 = vmatpush1.msra.mxu0 0.0
    %2560 = vmatprep.subr.mxu0 0.0
    %2561 = vmatpush1.msra.mxu0 0.0
    %2562 = vmatprep.subr.mxu0 0.0
    %2563 = vmatpush1.msra.mxu0 0.0
    %2564 = vmatprep.subr.mxu0 0.0
    %2565 = vmatpush1.msra.mxu0 0.0
    %2566 = vmatprep.subr.mxu0 0.0
    %2567 = vmatpush1.msra.mxu0 0.0
    %2568 = vmatprep.subr.mxu0 0.0
    %2569 = vmatpush1.msra.mxu0 0.0
    %2570 = vmatprep.subr.mxu0 0.0
    %2571 = vmatpush1.msra.mxu0 0.0
    %2572 = vmatprep.subr.mxu0 0.0
    %2573 = vmatpush1.msra.mxu0 0.0
    %2574 = vmatprep.subr.mxu0 0.0
    %2575 = vmatpush1.msra.mxu0 0.0
    %2576 = vmatprep.subr.mxu0 0.0
    %2577 = vmatpush1.msra.mxu0 0.0
    %2578 = vmatprep.subr.mxu0 0.0
    %2579 = vmatpush1.msra.mxu0 0.0
    %2580 = vmatprep.subr.mxu0 0.0
    %2581 = vmatpush1.msra.mxu0 0.0
    %2582 = vmatprep.subr.mxu0 0.0
    %2583 = vmatpush1.msra.mxu0 0.0
    %2584 = vmatprep.mubr.f32.mxu0 0.0
    %2585 = vmatmul.mubr.f32.gmra.mrb[0].mxu0 %v2486
    %v2586 = vpop.f32.mrb[0].mxu0
    %v2587 = vadd.f32 0.0, %v2586
    %v2588 = vpop.f32.mrb[0].mxu0
    %2589 = vdwg.mxu0
    %v2590 = vadd.f32 %v2483, %v2587
    %vm2591 = vcmask 74752
    %2592 = vst.msk [vmem:[#allocation3] sm:$0x3] %vm2591, %v2590
    // Predicated region
    $region30: #{cnn_module_forward.1} parent=1 // pred_check
      _
    $region31: #{cnn_module_forward.1} parent=1 // pred_check_branch
      %2594 = sbr.rel (0) target = $region33
    $region32: #{cnn_module_forward.1} parent=1 // pred_region
      %s2596 = ssub.s32 32, 32
      %2597 = vsyncadd [#allocation4], %s2596
      %s2599 = sshll.u32 [#allocation3], 4
      %s2600 = int_to_ptr.vmem [resolvable:$true] %s2599
      %2602 = dma.vmem_to_hbm [thread:$0]  %s2600, 32, %s7, [#allocation4]
    $region33: #{cnn_module_forward.1} parent=1 // pred_fallthru
      _
    // Predicated region
    $region34: #{cnn_module_forward.1} parent=1 // pred_check
      _
    $region35: #{cnn_module_forward.1} parent=1 // pred_check_branch
      %2604 = sbr.rel (0) target = $region37
    $region36: #{cnn_module_forward.1} parent=1 // pred_region
      %2605 = dma.done [#allocation4], 32
    $region37: #{cnn_module_forward.1} parent=1 // pred_fallthru
      _
    %2606 = vsyncpa [#allocation4], 1

</llo_original>
